<compile_context>
chip_gen: v7x
topology: tpu7x:2x2x1
jax: 0.10.0
libtpu: 0.0.40
codegen_flags: <defaults>
</compile_context>

<pallas_src>
import functools

import jax
import jax.numpy as jnp
from jax.experimental import pallas as pl
from jax.experimental.pallas import tpu as pltpu

# ---------------- model config (small, consistent with the module) ----------
VOCAB_SIZE   = 50
TYPE_VOCAB   = 2
MAX_POS      = 16
HIDDEN       = 32
NUM_HEADS    = 2
HEAD_DIM     = HIDDEN // NUM_HEADS
INTERMEDIATE = 64
NUM_LAYERS   = 2
NUM_CLASSES  = 4
BATCH        = 2
SEQ          = 8
LN_EPS       = 1e-12

VEC_W        = 128        # lane width of the bias/LN slab and padded classifier
_ROWS_PER_LAYER = 8       # b_qkv, bo, ln1_g, ln1_b, b1, b2, ln2_g, ln2_b


# ---------------- in-kernel helpers (values, not refs) -----------------------

def _layernorm(x, g, b):
    """LayerNorm over the last dim; biased variance, eps inside rsqrt."""
    mean = jnp.mean(x, axis=-1, keepdims=True)
    cent = x - mean
    var = jnp.mean(cent * cent, axis=-1, keepdims=True)
    return cent * jax.lax.rsqrt(var + LN_EPS) * g + b


def _gelu_erf(x):
    """Exact (erf) GELU, as in BERT."""
    return 0.5 * x * (1.0 + jax.lax.erf(x * (1.0 / (2.0 ** 0.5))))


# ---------------- fully fused forward kernel (single invocation, no grid) ----

def _bert_fused_kernel(emb_ref, mask_ref, vec_ref, wqkv_ref, wo_ref,
                       w1_ref, w2_ref, fcw_ref, o_ref,
                       *, num_heads, batch, seq):
    num_layers, hidden, _ = wqkv_ref.shape
    head_dim = hidden // num_heads

    def vrow(r, width):
        # One packed parameter vector as a (1, width) row (static slice).
        return vec_ref[r:r + 1, :width]

    # --- embedding LayerNorm (embedding dropout is identity in eval) --------
    x = _layernorm(emb_ref[...], vrow(0, hidden), vrow(1, hidden))   # (B*S, H)

    # --- transformer encoder layers, fully unrolled, all VMEM-resident ------
    for l in range(num_layers):
        base = 2 + l * _ROWS_PER_LAYER
        w_qkv = wqkv_ref[l]          # (H, 3H); Q columns pre-scaled by 1/sqrt(D)
        w_o   = wo_ref[l]            # (H, H)
        w_1   = w1_ref[l]            # (H, I)
        w_2   = w2_ref[l]            # (I, H)

        # fused Q/K/V projection over all B*S rows at once
        qkv = (jnp.dot(x, w_qkv, preferred_element_type=jnp.float32)
               + vrow(base + 0, 3 * hidden))                          # (B*S, 3H)

        # attention: per-batch (S,S) scores; per-head output-projection
        # accumulation (no lane concatenation of heads)
        attn_rows = []
        for b in range(batch):
            r0, r1 = b * seq, (b + 1) * seq
            mask_b = mask_ref[b:b + 1, :]                             # (1, S) additive
            acc = None
            for h in range(num_heads):
                c0 = h * head_dim
                q = qkv[r0:r1, c0:c0 + head_dim]                      # (S, D), pre-scaled
                k = qkv[r0:r1, hidden + c0: hidden + c0 + head_dim]
                v = qkv[r0:r1, 2 * hidden + c0: 2 * hidden + c0 + head_dim]
                s = jnp.einsum("qd,kd->qk", q, k,
                               preferred_element_type=jnp.float32)    # (S, S)
                s = s + mask_b                    # broadcast over query rows
                s = s - jnp.max(s, axis=-1, keepdims=True)
                p = jnp.exp(s)
                p = p / jnp.sum(p, axis=-1, keepdims=True)            # exact divide
                ctx = jnp.dot(p, v, preferred_element_type=jnp.float32)      # (S, D)
                contrib = jnp.dot(ctx, w_o[c0:c0 + head_dim, :],
                                  preferred_element_type=jnp.float32)        # (S, H)
                acc = contrib if acc is None else acc + contrib
            attn_rows.append(acc)
        attn_out = jnp.concatenate(attn_rows, axis=0) + vrow(base + 1, hidden)  # (B*S, H)
        x = _layernorm(attn_out + x, vrow(base + 2, hidden), vrow(base + 3, hidden))

        # feed-forward (exact-erf GELU) + post-LN residual
        inter = _gelu_erf(jnp.dot(x, w_1, preferred_element_type=jnp.float32)
                          + vrow(base + 4, w_1.shape[1]))
        ffn = jnp.dot(inter, w_2, preferred_element_type=jnp.float32) + vrow(base + 5, hidden)
        x = _layernorm(ffn + x, vrow(base + 6, hidden), vrow(base + 7, hidden))

    # --- classifier head: CLS token -> dropout (eval: identity) -> fc -------
    # TODO(synk): nn.Dropout(0.3) is identity in eval mode; train-mode masking
    # would use pltpu.prng_seed / pltpu.prng_random_bits here.
    cls = jnp.concatenate([x[b * seq:b * seq + 1, :] for b in range(batch)],
                          axis=0)                                     # (B, H)
    fc_b_row = 2 + num_layers * _ROWS_PER_LAYER
    logits = (jnp.dot(cls, fcw_ref[...], preferred_element_type=jnp.float32)
              + vec_ref[fc_b_row:fc_b_row + 1, :])                    # (B, 128) lane-dense
    o_ref[...] = logits.astype(o_ref.dtype)


# ---------------- parameter init (deterministic, synthetic) -----------------

def init_params(key):
    keys = iter(jax.random.split(key, 128))

    def nrm(shape):
        return (0.02 * jax.random.normal(next(keys), shape)).astype(jnp.float32)

    def zeros(shape):
        return jnp.zeros(shape, jnp.float32)

    def ones(shape):
        return jnp.ones(shape, jnp.float32)

    params = {
        "word_emb": nrm((VOCAB_SIZE, HIDDEN)),
        "pos_emb":  nrm((MAX_POS, HIDDEN)),
        "type_emb": nrm((TYPE_VOCAB, HIDDEN)),
        "emb_ln_g": ones((HIDDEN,)),
        "emb_ln_b": zeros((HIDDEN,)),
        "fc_w": nrm((HIDDEN, NUM_CLASSES)),
        "fc_b": zeros((NUM_CLASSES,)),
        "layers": [],
    }
    for _ in range(NUM_LAYERS):
        params["layers"].append({
            # Q|K|V fused along the output dim -> single lane-dense matmul
            "w_qkv": nrm((HIDDEN, 3 * HIDDEN)), "b_qkv": zeros((3 * HIDDEN,)),
            "wo": nrm((HIDDEN, HIDDEN)), "bo": zeros((HIDDEN,)),
            "ln1_g": ones((HIDDEN,)), "ln1_b": zeros((HIDDEN,)),
            "w1": nrm((HIDDEN, INTERMEDIATE)), "b1": zeros((INTERMEDIATE,)),
            "w2": nrm((INTERMEDIATE, HIDDEN)), "b2": zeros((HIDDEN,)),
            "ln2_g": ones((HIDDEN,)), "ln2_b": zeros((HIDDEN,)),
        })
    return params


def pack_params(params):
    """One-time host-side packing: few stacked slabs + folded attention scale."""
    h = HIDDEN
    scale = 1.0 / (HEAD_DIM ** 0.5)

    def row(v):
        v = jnp.asarray(v, jnp.float32).reshape(-1)
        return jnp.pad(v, (0, VEC_W - v.shape[0]))

    rows = [row(params["emb_ln_g"]), row(params["emb_ln_b"])]
    w_qkv_l, wo_l, w1_l, w2_l = [], [], [], []
    for lyr in params["layers"]:
        # fold 1/sqrt(head_dim) into the Q part of the fused QKV weight & bias
        w_qkv = lyr["w_qkv"].at[:, :h].multiply(scale)
        b_qkv = lyr["b_qkv"].at[:h].multiply(scale)
        w_qkv_l.append(w_qkv)
        wo_l.append(lyr["wo"])
        w1_l.append(lyr["w1"])
        w2_l.append(lyr["w2"])
        rows += [row(b_qkv), row(lyr["bo"]), row(lyr["ln1_g"]), row(lyr["ln1_b"]),
                 row(lyr["b1"]), row(lyr["b2"]), row(lyr["ln2_g"]), row(lyr["ln2_b"])]
    rows.append(row(params["fc_b"]))        # zero-padded beyond NUM_CLASSES

    return {
        "word_emb": params["word_emb"],
        "pos_emb":  params["pos_emb"],
        "type_emb": params["type_emb"],
        "vec_slab":  jnp.stack(rows, axis=0),        # (3 + 8L, 128)
        "w_qkv_all": jnp.stack(w_qkv_l, axis=0),     # (L, H, 3H)
        "wo_all":    jnp.stack(wo_l, axis=0),        # (L, H, H)
        "w1_all":    jnp.stack(w1_l, axis=0),        # (L, H, I)
        "w2_all":    jnp.stack(w2_l, axis=0),        # (L, I, H)
        "fc_w_pad":  jnp.pad(params["fc_w"],
                             ((0, 0), (0, VEC_W - NUM_CLASSES))),     # (H, 128)
    }


# ---------------- forward pass ------------------------------------------------

def bert_classifier_forward(packed, input_ids, attention_mask, token_type_ids):
    B, S = input_ids.shape

    # Embedding table gathers stay in XLA (glue); everything else is fused.
    emb = (packed["word_emb"][input_ids]
           + packed["pos_emb"][jnp.arange(S)][None, :, :]
           + packed["type_emb"][token_type_ids]).astype(jnp.float32)   # (B, S, H)
    emb2d = emb.reshape(B * S, HIDDEN)

    # Tiny additive key mask, broadcast in-kernel (no (B*H,S,S) materialization).
    mask = (1.0 - attention_mask.astype(jnp.float32)) * -10000.0       # (B, S)

    vmem = pl.BlockSpec(memory_space=pltpu.MemorySpace.VMEM)
    logits_pad = pl.pallas_call(
        functools.partial(_bert_fused_kernel,
                          num_heads=NUM_HEADS, batch=B, seq=S),
        out_shape=jax.ShapeDtypeStruct((B, VEC_W), jnp.float32),       # lane-dense slab
        in_specs=[vmem] * 8,
        out_specs=vmem,
    )(emb2d, mask, packed["vec_slab"], packed["w_qkv_all"], packed["wo_all"],
      packed["w1_all"], packed["w2_all"], packed["fc_w_pad"])

    return logits_pad[:, :NUM_CLASSES]


# ---------------- main --------------------------------------------------------

if __name__ == "__main__":
    key = jax.random.PRNGKey(0)
    pkey, ikey = jax.random.split(key)

    params = init_params(pkey)
    packed = pack_params(params)    # one-time host-side slab packing / scale fold

    input_ids = jax.random.randint(ikey, (BATCH, SEQ), 0, VOCAB_SIZE, dtype=jnp.int32)
    attention_mask = jnp.ones((BATCH, SEQ), dtype=jnp.int32)
    token_type_ids = jnp.zeros((BATCH, SEQ), dtype=jnp.int32)

    fwd = jax.jit(bert_classifier_forward)
    logits = fwd(packed, input_ids, attention_mask, token_type_ids)
    jax.block_until_ready(logits)

    assert logits.shape == (BATCH, NUM_CLASSES)
    assert logits.dtype == jnp.float32
    print("KERNEL_OK")
</pallas_src>

<mosaic_0001>
module attributes {stable_mosaic.version = 11 : i64} {
  func.func @_bert_fused_kernel(%arg0: memref<16x32xf32, #tpu.memory_space<vmem>>, %arg1: memref<2x8xf32, #tpu.memory_space<vmem>>, %arg2: memref<19x128xf32, #tpu.memory_space<vmem>>, %arg3: memref<2x32x96xf32, #tpu.memory_space<vmem>>, %arg4: memref<2x32x32xf32, #tpu.memory_space<vmem>>, %arg5: memref<2x32x64xf32, #tpu.memory_space<vmem>>, %arg6: memref<2x64x32xf32, #tpu.memory_space<vmem>>, %arg7: memref<32x128xf32, #tpu.memory_space<vmem>>, %arg8: memref<2x128xf32, #tpu.memory_space<vmem>>) attributes {dimension_semantics = [], scalar_prefetch = 0 : i64, scratch_operands = 0 : i64, tpu.core_type = #tpu.core_type<tc>} {
    %c0 = arith.constant 0 : index
    %c0_0 = arith.constant 0 : index
    %0 = vector.load %arg0[%c0, %c0_0] : memref<16x32xf32, #tpu.memory_space<vmem>>, vector<16x32xf32>
    %c0_1 = arith.constant 0 : index
    %c0_2 = arith.constant 0 : index
    %1 = vector.load %arg2[%c0_1, %c0_2] : memref<19x128xf32, #tpu.memory_space<vmem>>, vector<1x32xf32>
    %c1 = arith.constant 1 : index
    %c0_3 = arith.constant 0 : index
    %2 = vector.load %arg2[%c1, %c0_3] : memref<19x128xf32, #tpu.memory_space<vmem>>, vector<1x32xf32>
    %cst = arith.constant dense<0.000000e+00> : vector<16xf32>
    %3 = vector.multi_reduction <add>, %0, %cst [1] : vector<16x32xf32> to vector<16xf32>
    %4 = vector.shape_cast %3 : vector<16xf32> to vector<16x1xf32>
    %cst_4 = arith.constant 3.200000e+01 : f32
    %5 = vector.broadcast %cst_4 : f32 to vector<16x1xf32>
    %6 = arith.divf %4, %5 : vector<16x1xf32>
    %7 = vector.broadcast %6 : vector<16x1xf32> to vector<16x32xf32>
    %8 = arith.subf %0, %7 : vector<16x32xf32>
    %9 = arith.mulf %8, %8 : vector<16x32xf32>
    %cst_5 = arith.constant dense<0.000000e+00> : vector<16xf32>
    %10 = vector.multi_reduction <add>, %9, %cst_5 [1] : vector<16x32xf32> to vector<16xf32>
    %11 = vector.shape_cast %10 : vector<16xf32> to vector<16x1xf32>
    %cst_6 = arith.constant 3.200000e+01 : f32
    %12 = vector.broadcast %cst_6 : f32 to vector<16x1xf32>
    %13 = arith.divf %11, %12 : vector<16x1xf32>
    %cst_7 = arith.constant 9.99999996E-13 : f32
    %14 = vector.broadcast %cst_7 : f32 to vector<16x1xf32>
    %15 = arith.addf %13, %14 : vector<16x1xf32>
    %16 = math.rsqrt %15 : vector<16x1xf32>
    %17 = vector.broadcast %16 : vector<16x1xf32> to vector<16x32xf32>
    %18 = arith.mulf %8, %17 : vector<16x32xf32>
    %19 = vector.broadcast %1 : vector<1x32xf32> to vector<16x32xf32>
    %20 = arith.mulf %18, %19 : vector<16x32xf32>
    %21 = vector.broadcast %2 : vector<1x32xf32> to vector<16x32xf32>
    %22 = arith.addf %20, %21 : vector<16x32xf32>
    %c0_8 = arith.constant 0 : index
    %c0_9 = arith.constant 0 : index
    %c0_10 = arith.constant 0 : index
    %23 = vector.load %arg3[%c0_8, %c0_9, %c0_10] : memref<2x32x96xf32, #tpu.memory_space<vmem>>, vector<1x32x96xf32>
    %24 = vector.shape_cast %23 : vector<1x32x96xf32> to vector<32x96xf32>
    %c0_11 = arith.constant 0 : index
    %c0_12 = arith.constant 0 : index
    %c0_13 = arith.constant 0 : index
    %25 = vector.load %arg4[%c0_11, %c0_12, %c0_13] : memref<2x32x32xf32, #tpu.memory_space<vmem>>, vector<1x32x32xf32>
    %26 = vector.shape_cast %25 : vector<1x32x32xf32> to vector<32x32xf32>
    %c0_14 = arith.constant 0 : index
    %c0_15 = arith.constant 0 : index
    %c0_16 = arith.constant 0 : index
    %27 = vector.load %arg5[%c0_14, %c0_15, %c0_16] : memref<2x32x64xf32, #tpu.memory_space<vmem>>, vector<1x32x64xf32>
    %28 = vector.shape_cast %27 : vector<1x32x64xf32> to vector<32x64xf32>
    %c0_17 = arith.constant 0 : index
    %c0_18 = arith.constant 0 : index
    %c0_19 = arith.constant 0 : index
    %29 = vector.load %arg6[%c0_17, %c0_18, %c0_19] : memref<2x64x32xf32, #tpu.memory_space<vmem>>, vector<1x64x32xf32>
    %30 = vector.shape_cast %29 : vector<1x64x32xf32> to vector<64x32xf32>
    %cst_20 = arith.constant dense<0.000000e+00> : vector<16x96xf32>
    %31 = tpu.matmul %22, %24, %cst_20 {dimension_numbers = #tpu.dot_dimension_numbers<[1], [0], [0], [1], [0, 0, 1, 1], [], []>} : vector<16x32xf32>, vector<32x96xf32>, vector<16x96xf32> -> vector<16x96xf32>
    %c2 = arith.constant 2 : index
    %c0_21 = arith.constant 0 : index
    %32 = vector.load %arg2[%c2, %c0_21] : memref<19x128xf32, #tpu.memory_space<vmem>>, vector<1x96xf32>
    %33 = vector.broadcast %32 : vector<1x96xf32> to vector<16x96xf32>
    %34 = arith.addf %31, %33 : vector<16x96xf32>
    %c0_22 = arith.constant 0 : index
    %c0_23 = arith.constant 0 : index
    %35 = vector.load %arg1[%c0_22, %c0_23] : memref<2x8xf32, #tpu.memory_space<vmem>>, vector<1x8xf32>
    %36 = vector.extract_strided_slice %34 {offsets = [0, 0], sizes = [8, 16], strides = [1, 1]} : vector<16x96xf32> to vector<8x16xf32>
    %37 = vector.extract_strided_slice %34 {offsets = [0, 32], sizes = [8, 16], strides = [1, 1]} : vector<16x96xf32> to vector<8x16xf32>
    %38 = vector.extract_strided_slice %34 {offsets = [0, 64], sizes = [8, 16], strides = [1, 1]} : vector<16x96xf32> to vector<8x16xf32>
    "tpu.trace_start"() <{level = 10 : i32, message = "qd,kd->qk"}> : () -> ()
    %cst_24 = arith.constant dense<0.000000e+00> : vector<8x8xf32>
    %39 = tpu.matmul %36, %37, %cst_24 {dimension_numbers = #tpu.dot_dimension_numbers<[1], [1], [0], [0], [0, 0, 1, 0], [], []>} : vector<8x16xf32>, vector<8x16xf32>, vector<8x8xf32> -> vector<8x8xf32>
    "tpu.trace_stop"() : () -> ()
    %40 = vector.broadcast %35 : vector<1x8xf32> to vector<8x8xf32>
    %41 = arith.addf %39, %40 : vector<8x8xf32>
    %cst_25 = arith.constant dense<0xFF800000> : vector<8xf32>
    %42 = vector.multi_reduction <maximumf>, %41, %cst_25 [1] : vector<8x8xf32> to vector<8xf32>
    %43 = vector.shape_cast %42 : vector<8xf32> to vector<8x1xf32>
    %44 = vector.broadcast %43 : vector<8x1xf32> to vector<8x8xf32>
    %45 = arith.subf %41, %44 : vector<8x8xf32>
    %46 = math.exp %45 : vector<8x8xf32>
    %cst_26 = arith.constant dense<0.000000e+00> : vector<8xf32>
    %47 = vector.multi_reduction <add>, %46, %cst_26 [1] : vector<8x8xf32> to vector<8xf32>
    %48 = vector.shape_cast %47 : vector<8xf32> to vector<8x1xf32>
    %49 = vector.broadcast %48 : vector<8x1xf32> to vector<8x8xf32>
    %50 = arith.divf %46, %49 : vector<8x8xf32>
    %cst_27 = arith.constant dense<0.000000e+00> : vector<8x16xf32>
    %51 = tpu.matmul %50, %38, %cst_27 {dimension_numbers = #tpu.dot_dimension_numbers<[1], [0], [0], [1], [0, 0, 1, 1], [], []>} : vector<8x8xf32>, vector<8x16xf32>, vector<8x16xf32> -> vector<8x16xf32>
    %52 = vector.extract_strided_slice %26 {offsets = [0, 0], sizes = [16, 32], strides = [1, 1]} : vector<32x32xf32> to vector<16x32xf32>
    %cst_28 = arith.constant dense<0.000000e+00> : vector<8x32xf32>
    %53 = tpu.matmul %51, %52, %cst_28 {dimension_numbers = #tpu.dot_dimension_numbers<[1], [0], [0], [1], [0, 0, 1, 1], [], []>} : vector<8x16xf32>, vector<16x32xf32>, vector<8x32xf32> -> vector<8x32xf32>
    %54 = vector.extract_strided_slice %34 {offsets = [0, 16], sizes = [8, 16], strides = [1, 1]} : vector<16x96xf32> to vector<8x16xf32>
    %55 = vector.extract_strided_slice %34 {offsets = [0, 48], sizes = [8, 16], strides = [1, 1]} : vector<16x96xf32> to vector<8x16xf32>
    %56 = vector.extract_strided_slice %34 {offsets = [0, 80], sizes = [8, 16], strides = [1, 1]} : vector<16x96xf32> to vector<8x16xf32>
    "tpu.trace_start"() <{level = 10 : i32, message = "qd,kd->qk"}> : () -> ()
    %cst_29 = arith.constant dense<0.000000e+00> : vector<8x8xf32>
    %57 = tpu.matmul %54, %55, %cst_29 {dimension_numbers = #tpu.dot_dimension_numbers<[1], [1], [0], [0], [0, 0, 1, 0], [], []>} : vector<8x16xf32>, vector<8x16xf32>, vector<8x8xf32> -> vector<8x8xf32>
    "tpu.trace_stop"() : () -> ()
    %58 = vector.broadcast %35 : vector<1x8xf32> to vector<8x8xf32>
    %59 = arith.addf %57, %58 : vector<8x8xf32>
    %cst_30 = arith.constant dense<0xFF800000> : vector<8xf32>
    %60 = vector.multi_reduction <maximumf>, %59, %cst_30 [1] : vector<8x8xf32> to vector<8xf32>
    %61 = vector.shape_cast %60 : vector<8xf32> to vector<8x1xf32>
    %62 = vector.broadcast %61 : vector<8x1xf32> to vector<8x8xf32>
    %63 = arith.subf %59, %62 : vector<8x8xf32>
    %64 = math.exp %63 : vector<8x8xf32>
    %cst_31 = arith.constant dense<0.000000e+00> : vector<8xf32>
    %65 = vector.multi_reduction <add>, %64, %cst_31 [1] : vector<8x8xf32> to vector<8xf32>
    %66 = vector.shape_cast %65 : vector<8xf32> to vector<8x1xf32>
    %67 = vector.broadcast %66 : vector<8x1xf32> to vector<8x8xf32>
    %68 = arith.divf %64, %67 : vector<8x8xf32>
    %cst_32 = arith.constant dense<0.000000e+00> : vector<8x16xf32>
    %69 = tpu.matmul %68, %56, %cst_32 {dimension_numbers = #tpu.dot_dimension_numbers<[1], [0], [0], [1], [0, 0, 1, 1], [], []>} : vector<8x8xf32>, vector<8x16xf32>, vector<8x16xf32> -> vector<8x16xf32>
    %70 = vector.extract_strided_slice %26 {offsets = [16, 0], sizes = [16, 32], strides = [1, 1]} : vector<32x32xf32> to vector<16x32xf32>
    %cst_33 = arith.constant dense<0.000000e+00> : vector<8x32xf32>
    %71 = tpu.matmul %69, %70, %cst_33 {dimension_numbers = #tpu.dot_dimension_numbers<[1], [0], [0], [1], [0, 0, 1, 1], [], []>} : vector<8x16xf32>, vector<16x32xf32>, vector<8x32xf32> -> vector<8x32xf32>
    %72 = arith.addf %53, %71 : vector<8x32xf32>
    %c1_34 = arith.constant 1 : index
    %c0_35 = arith.constant 0 : index
    %73 = vector.load %arg1[%c1_34, %c0_35] : memref<2x8xf32, #tpu.memory_space<vmem>>, vector<1x8xf32>
    %74 = vector.extract_strided_slice %34 {offsets = [8, 0], sizes = [8, 16], strides = [1, 1]} : vector<16x96xf32> to vector<8x16xf32>
    %75 = vector.extract_strided_slice %34 {offsets = [8, 32], sizes = [8, 16], strides = [1, 1]} : vector<16x96xf32> to vector<8x16xf32>
    %76 = vector.extract_strided_slice %34 {offsets = [8, 64], sizes = [8, 16], strides = [1, 1]} : vector<16x96xf32> to vector<8x16xf32>
    "tpu.trace_start"() <{level = 10 : i32, message = "qd,kd->qk"}> : () -> ()
    %cst_36 = arith.constant dense<0.000000e+00> : vector<8x8xf32>
    %77 = tpu.matmul %74, %75, %cst_36 {dimension_numbers = #tpu.dot_dimension_numbers<[1], [1], [0], [0], [0, 0, 1, 0], [], []>} : vector<8x16xf32>, vector<8x16xf32>, vector<8x8xf32> -> vector<8x8xf32>
    "tpu.trace_stop"() : () -> ()
    %78 = vector.broadcast %73 : vector<1x8xf32> to vector<8x8xf32>
    %79 = arith.addf %77, %78 : vector<8x8xf32>
    %cst_37 = arith.constant dense<0xFF800000> : vector<8xf32>
    %80 = vector.multi_reduction <maximumf>, %79, %cst_37 [1] : vector<8x8xf32> to vector<8xf32>
    %81 = vector.shape_cast %80 : vector<8xf32> to vector<8x1xf32>
    %82 = vector.broadcast %81 : vector<8x1xf32> to vector<8x8xf32>
    %83 = arith.subf %79, %82 : vector<8x8xf32>
    %84 = math.exp %83 : vector<8x8xf32>
    %cst_38 = arith.constant dense<0.000000e+00> : vector<8xf32>
    %85 = vector.multi_reduction <add>, %84, %cst_38 [1] : vector<8x8xf32> to vector<8xf32>
    %86 = vector.shape_cast %85 : vector<8xf32> to vector<8x1xf32>
    %87 = vector.broadcast %86 : vector<8x1xf32> to vector<8x8xf32>
    %88 = arith.divf %84, %87 : vector<8x8xf32>
    %cst_39 = arith.constant dense<0.000000e+00> : vector<8x16xf32>
    %89 = tpu.matmul %88, %76, %cst_39 {dimension_numbers = #tpu.dot_dimension_numbers<[1], [0], [0], [1], [0, 0, 1, 1], [], []>} : vector<8x8xf32>, vector<8x16xf32>, vector<8x16xf32> -> vector<8x16xf32>
    %90 = vector.extract_strided_slice %26 {offsets = [0, 0], sizes = [16, 32], strides = [1, 1]} : vector<32x32xf32> to vector<16x32xf32>
    %cst_40 = arith.constant dense<0.000000e+00> : vector<8x32xf32>
    %91 = tpu.matmul %89, %90, %cst_40 {dimension_numbers = #tpu.dot_dimension_numbers<[1], [0], [0], [1], [0, 0, 1, 1], [], []>} : vector<8x16xf32>, vector<16x32xf32>, vector<8x32xf32> -> vector<8x32xf32>
    %92 = vector.extract_strided_slice %34 {offsets = [8, 16], sizes = [8, 16], strides = [1, 1]} : vector<16x96xf32> to vector<8x16xf32>
    %93 = vector.extract_strided_slice %34 {offsets = [8, 48], sizes = [8, 16], strides = [1, 1]} : vector<16x96xf32> to vector<8x16xf32>
    %94 = vector.extract_strided_slice %34 {offsets = [8, 80], sizes = [8, 16], strides = [1, 1]} : vector<16x96xf32> to vector<8x16xf32>
    "tpu.trace_start"() <{level = 10 : i32, message = "qd,kd->qk"}> : () -> ()
    %cst_41 = arith.constant dense<0.000000e+00> : vector<8x8xf32>
    %95 = tpu.matmul %92, %93, %cst_41 {dimension_numbers = #tpu.dot_dimension_numbers<[1], [1], [0], [0], [0, 0, 1, 0], [], []>} : vector<8x16xf32>, vector<8x16xf32>, vector<8x8xf32> -> vector<8x8xf32>
    "tpu.trace_stop"() : () -> ()
    %96 = vector.broadcast %73 : vector<1x8xf32> to vector<8x8xf32>
    %97 = arith.addf %95, %96 : vector<8x8xf32>
    %cst_42 = arith.constant dense<0xFF800000> : vector<8xf32>
    %98 = vector.multi_reduction <maximumf>, %97, %cst_42 [1] : vector<8x8xf32> to vector<8xf32>
    %99 = vector.shape_cast %98 : vector<8xf32> to vector<8x1xf32>
    %100 = vector.broadcast %99 : vector<8x1xf32> to vector<8x8xf32>
    %101 = arith.subf %97, %100 : vector<8x8xf32>
    %102 = math.exp %101 : vector<8x8xf32>
    %cst_43 = arith.constant dense<0.000000e+00> : vector<8xf32>
    %103 = vector.multi_reduction <add>, %102, %cst_43 [1] : vector<8x8xf32> to vector<8xf32>
    %104 = vector.shape_cast %103 : vector<8xf32> to vector<8x1xf32>
    %105 = vector.broadcast %104 : vector<8x1xf32> to vector<8x8xf32>
    %106 = arith.divf %102, %105 : vector<8x8xf32>
    %cst_44 = arith.constant dense<0.000000e+00> : vector<8x16xf32>
    %107 = tpu.matmul %106, %94, %cst_44 {dimension_numbers = #tpu.dot_dimension_numbers<[1], [0], [0], [1], [0, 0, 1, 1], [], []>} : vector<8x8xf32>, vector<8x16xf32>, vector<8x16xf32> -> vector<8x16xf32>
    %108 = vector.extract_strided_slice %26 {offsets = [16, 0], sizes = [16, 32], strides = [1, 1]} : vector<32x32xf32> to vector<16x32xf32>
    %cst_45 = arith.constant dense<0.000000e+00> : vector<8x32xf32>
    %109 = tpu.matmul %107, %108, %cst_45 {dimension_numbers = #tpu.dot_dimension_numbers<[1], [0], [0], [1], [0, 0, 1, 1], [], []>} : vector<8x16xf32>, vector<16x32xf32>, vector<8x32xf32> -> vector<8x32xf32>
    %110 = arith.addf %91, %109 : vector<8x32xf32>
    %111 = tpu.concatenate %72, %110 in 0 : vector<8x32xf32>, vector<8x32xf32> -> vector<16x32xf32>
    %c3 = arith.constant 3 : index
    %c0_46 = arith.constant 0 : index
    %112 = vector.load %arg2[%c3, %c0_46] : memref<19x128xf32, #tpu.memory_space<vmem>>, vector<1x32xf32>
    %113 = vector.broadcast %112 : vector<1x32xf32> to vector<16x32xf32>
    %114 = arith.addf %111, %113 : vector<16x32xf32>
    %115 = arith.addf %114, %22 : vector<16x32xf32>
    %c4 = arith.constant 4 : index
    %c0_47 = arith.constant 0 : index
    %116 = vector.load %arg2[%c4, %c0_47] : memref<19x128xf32, #tpu.memory_space<vmem>>, vector<1x32xf32>
    %c5 = arith.constant 5 : index
    %c0_48 = arith.constant 0 : index
    %117 = vector.load %arg2[%c5, %c0_48] : memref<19x128xf32, #tpu.memory_space<vmem>>, vector<1x32xf32>
    %cst_49 = arith.constant dense<0.000000e+00> : vector<16xf32>
    %118 = vector.multi_reduction <add>, %115, %cst_49 [1] : vector<16x32xf32> to vector<16xf32>
    %119 = vector.shape_cast %118 : vector<16xf32> to vector<16x1xf32>
    %cst_50 = arith.constant 3.200000e+01 : f32
    %120 = vector.broadcast %cst_50 : f32 to vector<16x1xf32>
    %121 = arith.divf %119, %120 : vector<16x1xf32>
    %122 = vector.broadcast %121 : vector<16x1xf32> to vector<16x32xf32>
    %123 = arith.subf %115, %122 : vector<16x32xf32>
    %124 = arith.mulf %123, %123 : vector<16x32xf32>
    %cst_51 = arith.constant dense<0.000000e+00> : vector<16xf32>
    %125 = vector.multi_reduction <add>, %124, %cst_51 [1] : vector<16x32xf32> to vector<16xf32>
    %126 = vector.shape_cast %125 : vector<16xf32> to vector<16x1xf32>
    %cst_52 = arith.constant 3.200000e+01 : f32
    %127 = vector.broadcast %cst_52 : f32 to vector<16x1xf32>
    %128 = arith.divf %126, %127 : vector<16x1xf32>
    %cst_53 = arith.constant 9.99999996E-13 : f32
    %129 = vector.broadcast %cst_53 : f32 to vector<16x1xf32>
    %130 = arith.addf %128, %129 : vector<16x1xf32>
    %131 = math.rsqrt %130 : vector<16x1xf32>
    %132 = vector.broadcast %131 : vector<16x1xf32> to vector<16x32xf32>
    %133 = arith.mulf %123, %132 : vector<16x32xf32>
    %134 = vector.broadcast %116 : vector<1x32xf32> to vector<16x32xf32>
    %135 = arith.mulf %133, %134 : vector<16x32xf32>
    %136 = vector.broadcast %117 : vector<1x32xf32> to vector<16x32xf32>
    %137 = arith.addf %135, %136 : vector<16x32xf32>
    %cst_54 = arith.constant dense<0.000000e+00> : vector<16x64xf32>
    %138 = tpu.matmul %137, %28, %cst_54 {dimension_numbers = #tpu.dot_dimension_numbers<[1], [0], [0], [1], [0, 0, 1, 1], [], []>} : vector<16x32xf32>, vector<32x64xf32>, vector<16x64xf32> -> vector<16x64xf32>
    %c6 = arith.constant 6 : index
    %c0_55 = arith.constant 0 : index
    %139 = vector.load %arg2[%c6, %c0_55] : memref<19x128xf32, #tpu.memory_space<vmem>>, vector<1x64xf32>
    %140 = vector.broadcast %139 : vector<1x64xf32> to vector<16x64xf32>
    %141 = arith.addf %138, %140 : vector<16x64xf32>
    %cst_56 = arith.constant 5.000000e-01 : f32
    %142 = vector.broadcast %cst_56 : f32 to vector<16x64xf32>
    %143 = arith.mulf %142, %141 : vector<16x64xf32>
    %cst_57 = arith.constant 0.707106769 : f32
    %144 = vector.broadcast %cst_57 : f32 to vector<16x64xf32>
    %145 = arith.mulf %141, %144 : vector<16x64xf32>
    %146 = math.erf %145 : vector<16x64xf32>
    %cst_58 = arith.constant 1.000000e+00 : f32
    %147 = vector.broadcast %cst_58 : f32 to vector<16x64xf32>
    %148 = arith.addf %147, %146 : vector<16x64xf32>
    %149 = arith.mulf %143, %148 : vector<16x64xf32>
    %cst_59 = arith.constant dense<0.000000e+00> : vector<16x32xf32>
    %150 = tpu.matmul %149, %30, %cst_59 {dimension_numbers = #tpu.dot_dimension_numbers<[1], [0], [0], [1], [0, 0, 1, 1], [], []>} : vector<16x64xf32>, vector<64x32xf32>, vector<16x32xf32> -> vector<16x32xf32>
    %c7 = arith.constant 7 : index
    %c0_60 = arith.constant 0 : index
    %151 = vector.load %arg2[%c7, %c0_60] : memref<19x128xf32, #tpu.memory_space<vmem>>, vector<1x32xf32>
    %152 = vector.broadcast %151 : vector<1x32xf32> to vector<16x32xf32>
    %153 = arith.addf %150, %152 : vector<16x32xf32>
    %154 = arith.addf %153, %137 : vector<16x32xf32>
    %c8 = arith.constant 8 : index
    %c0_61 = arith.constant 0 : index
    %155 = vector.load %arg2[%c8, %c0_61] : memref<19x128xf32, #tpu.memory_space<vmem>>, vector<1x32xf32>
    %c9 = arith.constant 9 : index
    %c0_62 = arith.constant 0 : index
    %156 = vector.load %arg2[%c9, %c0_62] : memref<19x128xf32, #tpu.memory_space<vmem>>, vector<1x32xf32>
    %cst_63 = arith.constant dense<0.000000e+00> : vector<16xf32>
    %157 = vector.multi_reduction <add>, %154, %cst_63 [1] : vector<16x32xf32> to vector<16xf32>
    %158 = vector.shape_cast %157 : vector<16xf32> to vector<16x1xf32>
    %cst_64 = arith.constant 3.200000e+01 : f32
    %159 = vector.broadcast %cst_64 : f32 to vector<16x1xf32>
    %160 = arith.divf %158, %159 : vector<16x1xf32>
    %161 = vector.broadcast %160 : vector<16x1xf32> to vector<16x32xf32>
    %162 = arith.subf %154, %161 : vector<16x32xf32>
    %163 = arith.mulf %162, %162 : vector<16x32xf32>
    %cst_65 = arith.constant dense<0.000000e+00> : vector<16xf32>
    %164 = vector.multi_reduction <add>, %163, %cst_65 [1] : vector<16x32xf32> to vector<16xf32>
    %165 = vector.shape_cast %164 : vector<16xf32> to vector<16x1xf32>
    %cst_66 = arith.constant 3.200000e+01 : f32
    %166 = vector.broadcast %cst_66 : f32 to vector<16x1xf32>
    %167 = arith.divf %165, %166 : vector<16x1xf32>
    %cst_67 = arith.constant 9.99999996E-13 : f32
    %168 = vector.broadcast %cst_67 : f32 to vector<16x1xf32>
    %169 = arith.addf %167, %168 : vector<16x1xf32>
    %170 = math.rsqrt %169 : vector<16x1xf32>
    %171 = vector.broadcast %170 : vector<16x1xf32> to vector<16x32xf32>
    %172 = arith.mulf %162, %171 : vector<16x32xf32>
    %173 = vector.broadcast %155 : vector<1x32xf32> to vector<16x32xf32>
    %174 = arith.mulf %172, %173 : vector<16x32xf32>
    %175 = vector.broadcast %156 : vector<1x32xf32> to vector<16x32xf32>
    %176 = arith.addf %174, %175 : vector<16x32xf32>
    %c1_68 = arith.constant 1 : index
    %c0_69 = arith.constant 0 : index
    %c0_70 = arith.constant 0 : index
    %177 = vector.load %arg3[%c1_68, %c0_69, %c0_70] : memref<2x32x96xf32, #tpu.memory_space<vmem>>, vector<1x32x96xf32>
    %178 = vector.shape_cast %177 : vector<1x32x96xf32> to vector<32x96xf32>
    %c1_71 = arith.constant 1 : index
    %c0_72 = arith.constant 0 : index
    %c0_73 = arith.constant 0 : index
    %179 = vector.load %arg4[%c1_71, %c0_72, %c0_73] : memref<2x32x32xf32, #tpu.memory_space<vmem>>, vector<1x32x32xf32>
    %180 = vector.shape_cast %179 : vector<1x32x32xf32> to vector<32x32xf32>
    %c1_74 = arith.constant 1 : index
    %c0_75 = arith.constant 0 : index
    %c0_76 = arith.constant 0 : index
    %181 = vector.load %arg5[%c1_74, %c0_75, %c0_76] : memref<2x32x64xf32, #tpu.memory_space<vmem>>, vector<1x32x64xf32>
    %182 = vector.shape_cast %181 : vector<1x32x64xf32> to vector<32x64xf32>
    %c1_77 = arith.constant 1 : index
    %c0_78 = arith.constant 0 : index
    %c0_79 = arith.constant 0 : index
    %183 = vector.load %arg6[%c1_77, %c0_78, %c0_79] : memref<2x64x32xf32, #tpu.memory_space<vmem>>, vector<1x64x32xf32>
    %184 = vector.shape_cast %183 : vector<1x64x32xf32> to vector<64x32xf32>
    %cst_80 = arith.constant dense<0.000000e+00> : vector<16x96xf32>
    %185 = tpu.matmul %176, %178, %cst_80 {dimension_numbers = #tpu.dot_dimension_numbers<[1], [0], [0], [1], [0, 0, 1, 1], [], []>} : vector<16x32xf32>, vector<32x96xf32>, vector<16x96xf32> -> vector<16x96xf32>
    %c10 = arith.constant 10 : index
    %c0_81 = arith.constant 0 : index
    %186 = vector.load %arg2[%c10, %c0_81] : memref<19x128xf32, #tpu.memory_space<vmem>>, vector<1x96xf32>
    %187 = vector.broadcast %186 : vector<1x96xf32> to vector<16x96xf32>
    %188 = arith.addf %185, %187 : vector<16x96xf32>
    %c0_82 = arith.constant 0 : index
    %c0_83 = arith.constant 0 : index
    %189 = vector.load %arg1[%c0_82, %c0_83] : memref<2x8xf32, #tpu.memory_space<vmem>>, vector<1x8xf32>
    %190 = vector.extract_strided_slice %188 {offsets = [0, 0], sizes = [8, 16], strides = [1, 1]} : vector<16x96xf32> to vector<8x16xf32>
    %191 = vector.extract_strided_slice %188 {offsets = [0, 32], sizes = [8, 16], strides = [1, 1]} : vector<16x96xf32> to vector<8x16xf32>
    %192 = vector.extract_strided_slice %188 {offsets = [0, 64], sizes = [8, 16], strides = [1, 1]} : vector<16x96xf32> to vector<8x16xf32>
    "tpu.trace_start"() <{level = 10 : i32, message = "qd,kd->qk"}> : () -> ()
    %cst_84 = arith.constant dense<0.000000e+00> : vector<8x8xf32>
    %193 = tpu.matmul %190, %191, %cst_84 {dimension_numbers = #tpu.dot_dimension_numbers<[1], [1], [0], [0], [0, 0, 1, 0], [], []>} : vector<8x16xf32>, vector<8x16xf32>, vector<8x8xf32> -> vector<8x8xf32>
    "tpu.trace_stop"() : () -> ()
    %194 = vector.broadcast %189 : vector<1x8xf32> to vector<8x8xf32>
    %195 = arith.addf %193, %194 : vector<8x8xf32>
    %cst_85 = arith.constant dense<0xFF800000> : vector<8xf32>
    %196 = vector.multi_reduction <maximumf>, %195, %cst_85 [1] : vector<8x8xf32> to vector<8xf32>
    %197 = vector.shape_cast %196 : vector<8xf32> to vector<8x1xf32>
    %198 = vector.broadcast %197 : vector<8x1xf32> to vector<8x8xf32>
    %199 = arith.subf %195, %198 : vector<8x8xf32>
    %200 = math.exp %199 : vector<8x8xf32>
    %cst_86 = arith.constant dense<0.000000e+00> : vector<8xf32>
    %201 = vector.multi_reduction <add>, %200, %cst_86 [1] : vector<8x8xf32> to vector<8xf32>
    %202 = vector.shape_cast %201 : vector<8xf32> to vector<8x1xf32>
    %203 = vector.broadcast %202 : vector<8x1xf32> to vector<8x8xf32>
    %204 = arith.divf %200, %203 : vector<8x8xf32>
    %cst_87 = arith.constant dense<0.000000e+00> : vector<8x16xf32>
    %205 = tpu.matmul %204, %192, %cst_87 {dimension_numbers = #tpu.dot_dimension_numbers<[1], [0], [0], [1], [0, 0, 1, 1], [], []>} : vector<8x8xf32>, vector<8x16xf32>, vector<8x16xf32> -> vector<8x16xf32>
    %206 = vector.extract_strided_slice %180 {offsets = [0, 0], sizes = [16, 32], strides = [1, 1]} : vector<32x32xf32> to vector<16x32xf32>
    %cst_88 = arith.constant dense<0.000000e+00> : vector<8x32xf32>
    %207 = tpu.matmul %205, %206, %cst_88 {dimension_numbers = #tpu.dot_dimension_numbers<[1], [0], [0], [1], [0, 0, 1, 1], [], []>} : vector<8x16xf32>, vector<16x32xf32>, vector<8x32xf32> -> vector<8x32xf32>
    %208 = vector.extract_strided_slice %188 {offsets = [0, 16], sizes = [8, 16], strides = [1, 1]} : vector<16x96xf32> to vector<8x16xf32>
    %209 = vector.extract_strided_slice %188 {offsets = [0, 48], sizes = [8, 16], strides = [1, 1]} : vector<16x96xf32> to vector<8x16xf32>
    %210 = vector.extract_strided_slice %188 {offsets = [0, 80], sizes = [8, 16], strides = [1, 1]} : vector<16x96xf32> to vector<8x16xf32>
    "tpu.trace_start"() <{level = 10 : i32, message = "qd,kd->qk"}> : () -> ()
    %cst_89 = arith.constant dense<0.000000e+00> : vector<8x8xf32>
    %211 = tpu.matmul %208, %209, %cst_89 {dimension_numbers = #tpu.dot_dimension_numbers<[1], [1], [0], [0], [0, 0, 1, 0], [], []>} : vector<8x16xf32>, vector<8x16xf32>, vector<8x8xf32> -> vector<8x8xf32>
    "tpu.trace_stop"() : () -> ()
    %212 = vector.broadcast %189 : vector<1x8xf32> to vector<8x8xf32>
    %213 = arith.addf %211, %212 : vector<8x8xf32>
    %cst_90 = arith.constant dense<0xFF800000> : vector<8xf32>
    %214 = vector.multi_reduction <maximumf>, %213, %cst_90 [1] : vector<8x8xf32> to vector<8xf32>
    %215 = vector.shape_cast %214 : vector<8xf32> to vector<8x1xf32>
    %216 = vector.broadcast %215 : vector<8x1xf32> to vector<8x8xf32>
    %217 = arith.subf %213, %216 : vector<8x8xf32>
    %218 = math.exp %217 : vector<8x8xf32>
    %cst_91 = arith.constant dense<0.000000e+00> : vector<8xf32>
    %219 = vector.multi_reduction <add>, %218, %cst_91 [1] : vector<8x8xf32> to vector<8xf32>
    %220 = vector.shape_cast %219 : vector<8xf32> to vector<8x1xf32>
    %221 = vector.broadcast %220 : vector<8x1xf32> to vector<8x8xf32>
    %222 = arith.divf %218, %221 : vector<8x8xf32>
    %cst_92 = arith.constant dense<0.000000e+00> : vector<8x16xf32>
    %223 = tpu.matmul %222, %210, %cst_92 {dimension_numbers = #tpu.dot_dimension_numbers<[1], [0], [0], [1], [0, 0, 1, 1], [], []>} : vector<8x8xf32>, vector<8x16xf32>, vector<8x16xf32> -> vector<8x16xf32>
    %224 = vector.extract_strided_slice %180 {offsets = [16, 0], sizes = [16, 32], strides = [1, 1]} : vector<32x32xf32> to vector<16x32xf32>
    %cst_93 = arith.constant dense<0.000000e+00> : vector<8x32xf32>
    %225 = tpu.matmul %223, %224, %cst_93 {dimension_numbers = #tpu.dot_dimension_numbers<[1], [0], [0], [1], [0, 0, 1, 1], [], []>} : vector<8x16xf32>, vector<16x32xf32>, vector<8x32xf32> -> vector<8x32xf32>
    %226 = arith.addf %207, %225 : vector<8x32xf32>
    %c1_94 = arith.constant 1 : index
    %c0_95 = arith.constant 0 : index
    %227 = vector.load %arg1[%c1_94, %c0_95] : memref<2x8xf32, #tpu.memory_space<vmem>>, vector<1x8xf32>
    %228 = vector.extract_strided_slice %188 {offsets = [8, 0], sizes = [8, 16], strides = [1, 1]} : vector<16x96xf32> to vector<8x16xf32>
    %229 = vector.extract_strided_slice %188 {offsets = [8, 32], sizes = [8, 16], strides = [1, 1]} : vector<16x96xf32> to vector<8x16xf32>
    %230 = vector.extract_strided_slice %188 {offsets = [8, 64], sizes = [8, 16], strides = [1, 1]} : vector<16x96xf32> to vector<8x16xf32>
    "tpu.trace_start"() <{level = 10 : i32, message = "qd,kd->qk"}> : () -> ()
    %cst_96 = arith.constant dense<0.000000e+00> : vector<8x8xf32>
    %231 = tpu.matmul %228, %229, %cst_96 {dimension_numbers = #tpu.dot_dimension_numbers<[1], [1], [0], [0], [0, 0, 1, 0], [], []>} : vector<8x16xf32>, vector<8x16xf32>, vector<8x8xf32> -> vector<8x8xf32>
    "tpu.trace_stop"() : () -> ()
    %232 = vector.broadcast %227 : vector<1x8xf32> to vector<8x8xf32>
    %233 = arith.addf %231, %232 : vector<8x8xf32>
    %cst_97 = arith.constant dense<0xFF800000> : vector<8xf32>
    %234 = vector.multi_reduction <maximumf>, %233, %cst_97 [1] : vector<8x8xf32> to vector<8xf32>
    %235 = vector.shape_cast %234 : vector<8xf32> to vector<8x1xf32>
    %236 = vector.broadcast %235 : vector<8x1xf32> to vector<8x8xf32>
    %237 = arith.subf %233, %236 : vector<8x8xf32>
    %238 = math.exp %237 : vector<8x8xf32>
    %cst_98 = arith.constant dense<0.000000e+00> : vector<8xf32>
    %239 = vector.multi_reduction <add>, %238, %cst_98 [1] : vector<8x8xf32> to vector<8xf32>
    %240 = vector.shape_cast %239 : vector<8xf32> to vector<8x1xf32>
    %241 = vector.broadcast %240 : vector<8x1xf32> to vector<8x8xf32>
    %242 = arith.divf %238, %241 : vector<8x8xf32>
    %cst_99 = arith.constant dense<0.000000e+00> : vector<8x16xf32>
    %243 = tpu.matmul %242, %230, %cst_99 {dimension_numbers = #tpu.dot_dimension_numbers<[1], [0], [0], [1], [0, 0, 1, 1], [], []>} : vector<8x8xf32>, vector<8x16xf32>, vector<8x16xf32> -> vector<8x16xf32>
    %244 = vector.extract_strided_slice %180 {offsets = [0, 0], sizes = [16, 32], strides = [1, 1]} : vector<32x32xf32> to vector<16x32xf32>
    %cst_100 = arith.constant dense<0.000000e+00> : vector<8x32xf32>
    %245 = tpu.matmul %243, %244, %cst_100 {dimension_numbers = #tpu.dot_dimension_numbers<[1], [0], [0], [1], [0, 0, 1, 1], [], []>} : vector<8x16xf32>, vector<16x32xf32>, vector<8x32xf32> -> vector<8x32xf32>
    %246 = vector.extract_strided_slice %188 {offsets = [8, 16], sizes = [8, 16], strides = [1, 1]} : vector<16x96xf32> to vector<8x16xf32>
    %247 = vector.extract_strided_slice %188 {offsets = [8, 48], sizes = [8, 16], strides = [1, 1]} : vector<16x96xf32> to vector<8x16xf32>
    %248 = vector.extract_strided_slice %188 {offsets = [8, 80], sizes = [8, 16], strides = [1, 1]} : vector<16x96xf32> to vector<8x16xf32>
    "tpu.trace_start"() <{level = 10 : i32, message = "qd,kd->qk"}> : () -> ()
    %cst_101 = arith.constant dense<0.000000e+00> : vector<8x8xf32>
    %249 = tpu.matmul %246, %247, %cst_101 {dimension_numbers = #tpu.dot_dimension_numbers<[1], [1], [0], [0], [0, 0, 1, 0], [], []>} : vector<8x16xf32>, vector<8x16xf32>, vector<8x8xf32> -> vector<8x8xf32>
    "tpu.trace_stop"() : () -> ()
    %250 = vector.broadcast %227 : vector<1x8xf32> to vector<8x8xf32>
    %251 = arith.addf %249, %250 : vector<8x8xf32>
    %cst_102 = arith.constant dense<0xFF800000> : vector<8xf32>
    %252 = vector.multi_reduction <maximumf>, %251, %cst_102 [1] : vector<8x8xf32> to vector<8xf32>
    %253 = vector.shape_cast %252 : vector<8xf32> to vector<8x1xf32>
    %254 = vector.broadcast %253 : vector<8x1xf32> to vector<8x8xf32>
    %255 = arith.subf %251, %254 : vector<8x8xf32>
    %256 = math.exp %255 : vector<8x8xf32>
    %cst_103 = arith.constant dense<0.000000e+00> : vector<8xf32>
    %257 = vector.multi_reduction <add>, %256, %cst_103 [1] : vector<8x8xf32> to vector<8xf32>
    %258 = vector.shape_cast %257 : vector<8xf32> to vector<8x1xf32>
    %259 = vector.broadcast %258 : vector<8x1xf32> to vector<8x8xf32>
    %260 = arith.divf %256, %259 : vector<8x8xf32>
    %cst_104 = arith.constant dense<0.000000e+00> : vector<8x16xf32>
    %261 = tpu.matmul %260, %248, %cst_104 {dimension_numbers = #tpu.dot_dimension_numbers<[1], [0], [0], [1], [0, 0, 1, 1], [], []>} : vector<8x8xf32>, vector<8x16xf32>, vector<8x16xf32> -> vector<8x16xf32>
    %262 = vector.extract_strided_slice %180 {offsets = [16, 0], sizes = [16, 32], strides = [1, 1]} : vector<32x32xf32> to vector<16x32xf32>
    %cst_105 = arith.constant dense<0.000000e+00> : vector<8x32xf32>
    %263 = tpu.matmul %261, %262, %cst_105 {dimension_numbers = #tpu.dot_dimension_numbers<[1], [0], [0], [1], [0, 0, 1, 1], [], []>} : vector<8x16xf32>, vector<16x32xf32>, vector<8x32xf32> -> vector<8x32xf32>
    %264 = arith.addf %245, %263 : vector<8x32xf32>
    %265 = tpu.concatenate %226, %264 in 0 : vector<8x32xf32>, vector<8x32xf32> -> vector<16x32xf32>
    %c11 = arith.constant 11 : index
    %c0_106 = arith.constant 0 : index
    %266 = vector.load %arg2[%c11, %c0_106] : memref<19x128xf32, #tpu.memory_space<vmem>>, vector<1x32xf32>
    %267 = vector.broadcast %266 : vector<1x32xf32> to vector<16x32xf32>
    %268 = arith.addf %265, %267 : vector<16x32xf32>
    %269 = arith.addf %268, %176 : vector<16x32xf32>
    %c12 = arith.constant 12 : index
    %c0_107 = arith.constant 0 : index
    %270 = vector.load %arg2[%c12, %c0_107] : memref<19x128xf32, #tpu.memory_space<vmem>>, vector<1x32xf32>
    %c13 = arith.constant 13 : index
    %c0_108 = arith.constant 0 : index
    %271 = vector.load %arg2[%c13, %c0_108] : memref<19x128xf32, #tpu.memory_space<vmem>>, vector<1x32xf32>
    %cst_109 = arith.constant dense<0.000000e+00> : vector<16xf32>
    %272 = vector.multi_reduction <add>, %269, %cst_109 [1] : vector<16x32xf32> to vector<16xf32>
    %273 = vector.shape_cast %272 : vector<16xf32> to vector<16x1xf32>
    %cst_110 = arith.constant 3.200000e+01 : f32
    %274 = vector.broadcast %cst_110 : f32 to vector<16x1xf32>
    %275 = arith.divf %273, %274 : vector<16x1xf32>
    %276 = vector.broadcast %275 : vector<16x1xf32> to vector<16x32xf32>
    %277 = arith.subf %269, %276 : vector<16x32xf32>
    %278 = arith.mulf %277, %277 : vector<16x32xf32>
    %cst_111 = arith.constant dense<0.000000e+00> : vector<16xf32>
    %279 = vector.multi_reduction <add>, %278, %cst_111 [1] : vector<16x32xf32> to vector<16xf32>
    %280 = vector.shape_cast %279 : vector<16xf32> to vector<16x1xf32>
    %cst_112 = arith.constant 3.200000e+01 : f32
    %281 = vector.broadcast %cst_112 : f32 to vector<16x1xf32>
    %282 = arith.divf %280, %281 : vector<16x1xf32>
    %cst_113 = arith.constant 9.99999996E-13 : f32
    %283 = vector.broadcast %cst_113 : f32 to vector<16x1xf32>
    %284 = arith.addf %282, %283 : vector<16x1xf32>
    %285 = math.rsqrt %284 : vector<16x1xf32>
    %286 = vector.broadcast %285 : vector<16x1xf32> to vector<16x32xf32>
    %287 = arith.mulf %277, %286 : vector<16x32xf32>
    %288 = vector.broadcast %270 : vector<1x32xf32> to vector<16x32xf32>
    %289 = arith.mulf %287, %288 : vector<16x32xf32>
    %290 = vector.broadcast %271 : vector<1x32xf32> to vector<16x32xf32>
    %291 = arith.addf %289, %290 : vector<16x32xf32>
    %cst_114 = arith.constant dense<0.000000e+00> : vector<16x64xf32>
    %292 = tpu.matmul %291, %182, %cst_114 {dimension_numbers = #tpu.dot_dimension_numbers<[1], [0], [0], [1], [0, 0, 1, 1], [], []>} : vector<16x32xf32>, vector<32x64xf32>, vector<16x64xf32> -> vector<16x64xf32>
    %c14 = arith.constant 14 : index
    %c0_115 = arith.constant 0 : index
    %293 = vector.load %arg2[%c14, %c0_115] : memref<19x128xf32, #tpu.memory_space<vmem>>, vector<1x64xf32>
    %294 = vector.broadcast %293 : vector<1x64xf32> to vector<16x64xf32>
    %295 = arith.addf %292, %294 : vector<16x64xf32>
    %cst_116 = arith.constant 5.000000e-01 : f32
    %296 = vector.broadcast %cst_116 : f32 to vector<16x64xf32>
    %297 = arith.mulf %296, %295 : vector<16x64xf32>
    %cst_117 = arith.constant 0.707106769 : f32
    %298 = vector.broadcast %cst_117 : f32 to vector<16x64xf32>
    %299 = arith.mulf %295, %298 : vector<16x64xf32>
    %300 = math.erf %299 : vector<16x64xf32>
    %cst_118 = arith.constant 1.000000e+00 : f32
    %301 = vector.broadcast %cst_118 : f32 to vector<16x64xf32>
    %302 = arith.addf %301, %300 : vector<16x64xf32>
    %303 = arith.mulf %297, %302 : vector<16x64xf32>
    %cst_119 = arith.constant dense<0.000000e+00> : vector<16x32xf32>
    %304 = tpu.matmul %303, %184, %cst_119 {dimension_numbers = #tpu.dot_dimension_numbers<[1], [0], [0], [1], [0, 0, 1, 1], [], []>} : vector<16x64xf32>, vector<64x32xf32>, vector<16x32xf32> -> vector<16x32xf32>
    %c15 = arith.constant 15 : index
    %c0_120 = arith.constant 0 : index
    %305 = vector.load %arg2[%c15, %c0_120] : memref<19x128xf32, #tpu.memory_space<vmem>>, vector<1x32xf32>
    %306 = vector.broadcast %305 : vector<1x32xf32> to vector<16x32xf32>
    %307 = arith.addf %304, %306 : vector<16x32xf32>
    %308 = arith.addf %307, %291 : vector<16x32xf32>
    %c16 = arith.constant 16 : index
    %c0_121 = arith.constant 0 : index
    %309 = vector.load %arg2[%c16, %c0_121] : memref<19x128xf32, #tpu.memory_space<vmem>>, vector<1x32xf32>
    %c17 = arith.constant 17 : index
    %c0_122 = arith.constant 0 : index
    %310 = vector.load %arg2[%c17, %c0_122] : memref<19x128xf32, #tpu.memory_space<vmem>>, vector<1x32xf32>
    %cst_123 = arith.constant dense<0.000000e+00> : vector<16xf32>
    %311 = vector.multi_reduction <add>, %308, %cst_123 [1] : vector<16x32xf32> to vector<16xf32>
    %312 = vector.shape_cast %311 : vector<16xf32> to vector<16x1xf32>
    %cst_124 = arith.constant 3.200000e+01 : f32
    %313 = vector.broadcast %cst_124 : f32 to vector<16x1xf32>
    %314 = arith.divf %312, %313 : vector<16x1xf32>
    %315 = vector.broadcast %314 : vector<16x1xf32> to vector<16x32xf32>
    %316 = arith.subf %308, %315 : vector<16x32xf32>
    %317 = arith.mulf %316, %316 : vector<16x32xf32>
    %cst_125 = arith.constant dense<0.000000e+00> : vector<16xf32>
    %318 = vector.multi_reduction <add>, %317, %cst_125 [1] : vector<16x32xf32> to vector<16xf32>
    %319 = vector.shape_cast %318 : vector<16xf32> to vector<16x1xf32>
    %cst_126 = arith.constant 3.200000e+01 : f32
    %320 = vector.broadcast %cst_126 : f32 to vector<16x1xf32>
    %321 = arith.divf %319, %320 : vector<16x1xf32>
    %cst_127 = arith.constant 9.99999996E-13 : f32
    %322 = vector.broadcast %cst_127 : f32 to vector<16x1xf32>
    %323 = arith.addf %321, %322 : vector<16x1xf32>
    %324 = math.rsqrt %323 : vector<16x1xf32>
    %325 = vector.broadcast %324 : vector<16x1xf32> to vector<16x32xf32>
    %326 = arith.mulf %316, %325 : vector<16x32xf32>
    %327 = vector.broadcast %309 : vector<1x32xf32> to vector<16x32xf32>
    %328 = arith.mulf %326, %327 : vector<16x32xf32>
    %329 = vector.broadcast %310 : vector<1x32xf32> to vector<16x32xf32>
    %330 = arith.addf %328, %329 : vector<16x32xf32>
    %331 = vector.extract_strided_slice %330 {offsets = [0, 0], sizes = [1, 32], strides = [1, 1]} : vector<16x32xf32> to vector<1x32xf32>
    %332 = vector.extract_strided_slice %330 {offsets = [8, 0], sizes = [1, 32], strides = [1, 1]} : vector<16x32xf32> to vector<1x32xf32>
    %333 = tpu.concatenate %331, %332 in 0 : vector<1x32xf32>, vector<1x32xf32> -> vector<2x32xf32>
    %c0_128 = arith.constant 0 : index
    %c0_129 = arith.constant 0 : index
    %334 = vector.load %arg7[%c0_128, %c0_129] : memref<32x128xf32, #tpu.memory_space<vmem>>, vector<32x128xf32>
    %cst_130 = arith.constant dense<0.000000e+00> : vector<2x128xf32>
    %335 = tpu.matmul %333, %334, %cst_130 {dimension_numbers = #tpu.dot_dimension_numbers<[1], [0], [0], [1], [0, 0, 1, 1], [], []>} : vector<2x32xf32>, vector<32x128xf32>, vector<2x128xf32> -> vector<2x128xf32>
    %c18 = arith.constant 18 : index
    %c0_131 = arith.constant 0 : index
    %336 = vector.load %arg2[%c18, %c0_131] : memref<19x128xf32, #tpu.memory_space<vmem>>, vector<1x128xf32>
    %337 = vector.broadcast %336 : vector<1x128xf32> to vector<2x128xf32>
    %338 = arith.addf %335, %337 : vector<2x128xf32>
    %c0_132 = arith.constant 0 : index
    %c0_133 = arith.constant 0 : index
    %339 = vector.load %arg8[%c0_132, %c0_133] : memref<2x128xf32, #tpu.memory_space<vmem>>, vector<2x128xf32>
    tpu.vector_store %arg8[%c0_132, %c0_133], %338 {strides = array<i32>} : memref<2x128xf32, #tpu.memory_space<vmem>>, vector<2x128xf32>,
    return
  }
}

</mosaic_0001>

<llo_original>
// kernel: bert_classifier_forward.1
$region0: #{bert_classifier_forward.1}
  #allocation0 [shape = 'u32[]', space=smem, size = 0x4, offset = 0x4, fixed_abs, tag = 'smem constant byte address 0x4 - core index']
  #allocation1 [shape = 'u32[144,128]{1,0:T(1,128)}', space=vmem, size = 0x12000, scoped, tag = 'internal scratch']
  %s0 = inlined_call_operand.vmem [shape: f32[16,32], index: 0, kind: input, shape index: {}]
  %s1 = inlined_call_operand.vmem [shape: f32[2,8], index: 1, kind: input, shape index: {}]
  %s2 = inlined_call_operand.vmem [shape: f32[19,128], index: 2, kind: input, shape index: {}]
  %s3 = inlined_call_operand.vmem [shape: f32[2,32,96], index: 3, kind: input, shape index: {}]
  %s4 = inlined_call_operand.vmem [shape: f32[2,32,32], index: 4, kind: input, shape index: {}]
  %s5 = inlined_call_operand.vmem [shape: f32[2,32,64], index: 5, kind: input, shape index: {}]
  %s6 = inlined_call_operand.vmem [shape: f32[2,64,32], index: 6, kind: input, shape index: {}]
  %s7 = inlined_call_operand.vmem [shape: f32[32,128], index: 7, kind: input, shape index: {}]
  %s8 = inlined_call_operand.hbm [shape: f32[2,128], index: 8, kind: output, shape index: {}]
  %s9 = sld [smem:[#allocation0]]
  $region42: #{bert_classifier_forward.1} parent=0
    _
  %s11 = ssub.s32 1, %s9
  %s12 = scalar_select 0, %s11, %s9
  $region1: #{bert_classifier_forward.1} parent=0
    #allocation2 [shape = 'u8[1024]{0}', space=vmem, size = 0x400, scoped, tag = 'output window, operand 0, single buffered']
    #allocation3 [shape = 's32[1]{0}', space=sflag, size = 0x4, scoped, tag = 'scoped memory for bert_classifier_forward.1']
    %13 = vsyncpa [#allocation3], 0
    // Predicated region
    $region2: #{bert_classifier_forward.1} parent=1 // pred_check
      _
    $region3: #{bert_classifier_forward.1} parent=1 // pred_check_branch
      %15 = sbr.rel (0) target = $region5
    $region4: #{bert_classifier_forward.1} parent=1 // pred_region
      _
    $region5: #{bert_classifier_forward.1} parent=1 // pred_fallthru
      _
    // Predicated region
    $region6: #{bert_classifier_forward.1} parent=1 // pred_check
      _
    $region7: #{bert_classifier_forward.1} parent=1 // pred_check_branch
      %17 = sbr.rel (0) target = $region9
    $region8: #{bert_classifier_forward.1} parent=1 // pred_region
      _
    $region9: #{bert_classifier_forward.1} parent=1 // pred_fallthru
      _
    // Predicated region
    $region10: #{bert_classifier_forward.1} parent=1 // pred_check
      _
    $region11: #{bert_classifier_forward.1} parent=1 // pred_check_branch
      %19 = sbr.rel (0) target = $region13
    $region12: #{bert_classifier_forward.1} parent=1 // pred_region
      _
    $region13: #{bert_classifier_forward.1} parent=1 // pred_fallthru
      _
    // Predicated region
    $region14: #{bert_classifier_forward.1} parent=1 // pred_check
      _
    $region15: #{bert_classifier_forward.1} parent=1 // pred_check_branch
      %21 = sbr.rel (0) target = $region17
    $region16: #{bert_classifier_forward.1} parent=1 // pred_region
      _
    $region17: #{bert_classifier_forward.1} parent=1 // pred_fallthru
      _
    // Predicated region
    $region18: #{bert_classifier_forward.1} parent=1 // pred_check
      _
    $region19: #{bert_classifier_forward.1} parent=1 // pred_check_branch
      %23 = sbr.rel (0) target = $region21
    $region20: #{bert_classifier_forward.1} parent=1 // pred_region
      _
    $region21: #{bert_classifier_forward.1} parent=1 // pred_fallthru
      _
    // Predicated region
    $region22: #{bert_classifier_forward.1} parent=1 // pred_check
      _
    $region23: #{bert_classifier_forward.1} parent=1 // pred_check_branch
      %25 = sbr.rel (0) target = $region25
    $region24: #{bert_classifier_forward.1} parent=1 // pred_region
      _
    $region25: #{bert_classifier_forward.1} parent=1 // pred_fallthru
      _
    // Predicated region
    $region26: #{bert_classifier_forward.1} parent=1 // pred_check
      _
    $region27: #{bert_classifier_forward.1} parent=1 // pred_check_branch
      %27 = sbr.rel (0) target = $region29
    $region28: #{bert_classifier_forward.1} parent=1 // pred_region
      _
    $region29: #{bert_classifier_forward.1} parent=1 // pred_fallthru
      _
    // Predicated region
    $region30: #{bert_classifier_forward.1} parent=1 // pred_check
      _
    $region31: #{bert_classifier_forward.1} parent=1 // pred_check_branch
      %29 = sbr.rel (0) target = $region33
    $region32: #{bert_classifier_forward.1} parent=1 // pred_region
      _
    $region33: #{bert_classifier_forward.1} parent=1 // pred_fallthru
      _
    %v30 = vld [vmem:[%s0] sm:$0xff]
    %v31 = vld [vmem:[%s0 + $0x8] sm:$0xff]
    %v32 = vld [vmem:[%s2] sm:$0x1]
    %v33 = vld [vmem:[%s2 + $0x1] sm:$0x1]
    %vm34 = vcmask 261120
    %v35 = vsel %vm34, %v30, 0.0
    %36 = vadd.xlane.f32.xlu0 %v35
    %v37 = vpop.xlane.xlu0 %36
    %v38 = vsel %vm34, %v31, 0.0
    %39 = vadd.xlane.f32.xlu0 %v38
    %v40 = vpop.xlane.xlu0 %39
    %v41 = vrcp.pop 32.0
    %v42 = vmul.f32 %v37, %v41
    %v43 = vmul.f32 %v40, %v41
    %v44 = vsub.f32 %v30, %v42
    %v45 = vsub.f32 %v31, %v43
    %v46 = vmul.f32 %v44, %v44
    %v47 = vmul.f32 %v45, %v45
    %v48 = vsel %vm34, %v46, 0.0
    %49 = vadd.xlane.f32.xlu0 %v48
    %v50 = vpop.xlane.xlu0 %49
    %v51 = vsel %vm34, %v47, 0.0
    %52 = vadd.xlane.f32.xlu0 %v51
    %v53 = vpop.xlane.xlu0 %52
    %v54 = vmul.f32 %v50, %v41
    %v55 = vmul.f32 %v53, %v41
    %v56 = vadd.f32 %v54, 1e-12
    %v57 = vadd.f32 %v55, 1e-12
    %v58 = vrsqrt.pop %v56
    %v59 = vrsqrt.pop %v57
    %v60 = vmul.f32 %v44, %v58
    %v61 = vmul.f32 %v45, %v59
    %v62 = vlaneseq
    %v63 = vshrl.u32 %v62, 7
    %v64 = vsub.s32 0, %v63
    %v65 = vrot.slane %v32, %v64
    %v66 = vmul.f32 %v60, %v65
    %v67 = vmul.f32 %v61, %v65
    %v68 = vlaneseq
    %v69 = vshrl.u32 %v68, 7
    %v70 = vsub.s32 0, %v69
    %v71 = vrot.slane %v33, %v70
    %v72 = vadd.f32 %v66, %v71
    %v73 = vadd.f32 %v67, %v71
    %v74 = vld [vmem:[%s3] sm:$0xff]
    %v75 = vld [vmem:[%s3 + $0x8] sm:$0xff]
    %v76 = vld [vmem:[%s3 + $0x10] sm:$0xff]
    %v77 = vld [vmem:[%s3 + $0x18] sm:$0xff]
    %v78 = vld [vmem:[%s4] sm:$0xff]
    %v79 = vld [vmem:[%s4 + $0x8] sm:$0xff]
    %v80 = vld [vmem:[%s4 + $0x10] sm:$0xff]
    %v81 = vld [vmem:[%s4 + $0x18] sm:$0xff]
    %v82 = vld [vmem:[%s5] sm:$0xff]
    %v83 = vld [vmem:[%s5 + $0x8] sm:$0xff]
    %v84 = vld [vmem:[%s5 + $0x10] sm:$0xff]
    %v85 = vld [vmem:[%s5 + $0x18] sm:$0xff]
    %v86 = vld [vmem:[%s6] sm:$0xff]
    %v87 = vld [vmem:[%s6 + $0x8] sm:$0xff]
    %v88 = vld [vmem:[%s6 + $0x10] sm:$0xff]
    %v89 = vld [vmem:[%s6 + $0x18] sm:$0xff]
    %v90 = vld [vmem:[%s6 + $0x20] sm:$0xff]
    %v91 = vld [vmem:[%s6 + $0x28] sm:$0xff]
    %v92 = vld [vmem:[%s6 + $0x30] sm:$0xff]
    %v93 = vld [vmem:[%s6 + $0x38] sm:$0xff]
    %v94 = vld [vmem:[%s2 + $0x2] sm:$0x1]
    %v95 = vlaneseq
    %v96 = vshrl.u32 %v95, 7
    %v97 = vsub.s32 0, %v96
    %v98 = vrot.slane %v94, %v97
    %v100 = vsel %vm34, %v72, 0
    %v103 = vsel %vm34, %v73, 0
    %105 = vmatprep.subr.mxu0 0.0
    %106 = vmatpush1.msra.mxu0 %v74
    %107 = vmatprep.subr.mxu0 0.0
    %108 = vmatpush1.msra.mxu0 %v75
    %109 = vmatprep.subr.mxu0 0.0
    %110 = vmatpush1.msra.mxu0 %v76
    %111 = vmatprep.subr.mxu0 0.0
    %112 = vmatpush1.msra.mxu0 %v77
    %113 = vmatprep.subr.mxu0 0.0
    %114 = vmatpush1.msra.mxu0 0.0
    %115 = vmatprep.subr.mxu0 0.0
    %116 = vmatpush1.msra.mxu0 0.0
    %117 = vmatprep.subr.mxu0 0.0
    %118 = vmatpush1.msra.mxu0 0.0
    %119 = vmatprep.subr.mxu0 0.0
    %120 = vmatpush1.msra.mxu0 0.0
    %121 = vmatprep.subr.mxu0 0.0
    %122 = vmatpush1.msra.mxu0 0.0
    %123 = vmatprep.subr.mxu0 0.0
    %124 = vmatpush1.msra.mxu0 0.0
    %125 = vmatprep.subr.mxu0 0.0
    %126 = vmatpush1.msra.mxu0 0.0
    %127 = vmatprep.subr.mxu0 0.0
    %128 = vmatpush1.msra.mxu0 0.0
    %129 = vmatprep.subr.mxu0 0.0
    %130 = vmatpush1.msra.mxu0 0.0
    %131 = vmatprep.subr.mxu0 0.0
    %132 = vmatpush1.msra.mxu0 0.0
    %133 = vmatprep.subr.mxu0 0.0
    %134 = vmatpush1.msra.mxu0 0.0
    %135 = vmatprep.subr.mxu0 0.0
    %136 = vmatpush1.msra.mxu0 0.0
    %137 = vmatprep.subr.mxu0 0.0
    %138 = vmatpush1.msra.mxu0 0.0
    %139 = vmatprep.subr.mxu0 0.0
    %140 = vmatpush1.msra.mxu0 0.0
    %141 = vmatprep.subr.mxu0 0.0
    %142 = vmatpush1.msra.mxu0 0.0
    %143 = vmatprep.subr.mxu0 0.0
    %144 = vmatpush1.msra.mxu0 0.0
    %145 = vmatprep.subr.mxu0 0.0
    %146 = vmatpush1.msra.mxu0 0.0
    %147 = vmatprep.subr.mxu0 0.0
    %148 = vmatpush1.msra.mxu0 0.0
    %149 = vmatprep.subr.mxu0 0.0
    %150 = vmatpush1.msra.mxu0 0.0
    %151 = vmatprep.subr.mxu0 0.0
    %152 = vmatpush1.msra.mxu0 0.0
    %153 = vmatprep.subr.mxu0 0.0
    %154 = vmatpush1.msra.mxu0 0.0
    %155 = vmatprep.subr.mxu0 0.0
    %156 = vmatpush1.msra.mxu0 0.0
    %157 = vmatprep.subr.mxu0 0.0
    %158 = vmatpush1.msra.mxu0 0.0
    %159 = vmatprep.subr.mxu0 0.0
    %160 = vmatpush1.msra.mxu0 0.0
    %161 = vmatprep.subr.mxu0 0.0
    %162 = vmatpush1.msra.mxu0 0.0
    %163 = vmatprep.subr.mxu0 0.0
    %164 = vmatpush1.msra.mxu0 0.0
    %165 = vmatprep.subr.mxu0 0.0
    %166 = vmatpush1.msra.mxu0 0.0
    %167 = vmatprep.subr.mxu0 0.0
    %168 = vmatpush1.msra.mxu0 0.0
    %169 = vmatprep.mubr.f32.mxu0 0.0
    %170 = vmatmul.mubr.f32.gmra.mrb[0].mxu0 %v100
    %v171 = vpop.f32.mrb[0].mxu0
    %v172 = vadd.f32 %v98, %v171
    %v173 = vpop.f32.mrb[0].mxu0
    %174 = vmatprep.mubr.f32.mxu0 0.0
    %175 = vmatmul.mubr.f32.gmra.mrb[0].mxu0 %v103
    %v176 = vpop.f32.mrb[0].mxu0
    %v177 = vadd.f32 %v98, %v176
    %v178 = vpop.f32.mrb[0].mxu0
    %179 = vdwg.mxu0
    %v180 = vld [vmem:[%s1] sm:$0x1]
    %v181 = vlaneseq
    %v182 = vshrl.u32 %v181, 7
    %v183 = vsub.s32 0, %v182
    %v184 = vrot.slane %v180, %v183
    %186 = vrot.lane.b32.xlu0 %v172, 96
    %v187 = vpop.permute.xlu0 %186
    %vm188 = vcmask 130048
    %v189 = vsel %vm188, %v172, 0
    %v191 = vsel %vm188, %v187, 0
    %193 = vmatprep.subr.mxu0 0.0
    %194 = vmatpush1.xpose.msra.mxu0 %v191
    %195 = vmatprep.subr.mxu0 0.0
    %196 = vmatpush1.xpose.msra.mxu0 0.0
    %197 = vmatprep.subr.mxu0 0.0
    %198 = vmatpush1.xpose.msra.mxu0 0.0
    %199 = vmatprep.subr.mxu0 0.0
    %200 = vmatpush1.xpose.msra.mxu0 0.0
    %201 = vmatprep.subr.mxu0 0.0
    %202 = vmatpush1.xpose.msra.mxu0 0.0
    %203 = vmatprep.subr.mxu0 0.0
    %204 = vmatpush1.xpose.msra.mxu0 0.0
    %205 = vmatprep.subr.mxu0 0.0
    %206 = vmatpush1.xpose.msra.mxu0 0.0
    %207 = vmatprep.subr.mxu0 0.0
    %208 = vmatpush1.xpose.msra.mxu0 0.0
    %209 = vmatprep.subr.mxu0 0.0
    %210 = vmatpush1.xpose.msra.mxu0 0.0
    %211 = vmatprep.subr.mxu0 0.0
    %212 = vmatpush1.xpose.msra.mxu0 0.0
    %213 = vmatprep.subr.mxu0 0.0
    %214 = vmatpush1.xpose.msra.mxu0 0.0
    %215 = vmatprep.subr.mxu0 0.0
    %216 = vmatpush1.xpose.msra.mxu0 0.0
    %217 = vmatprep.subr.mxu0 0.0
    %218 = vmatpush1.xpose.msra.mxu0 0.0
    %219 = vmatprep.subr.mxu0 0.0
    %220 = vmatpush1.xpose.msra.mxu0 0.0
    %221 = vmatprep.subr.mxu0 0.0
    %222 = vmatpush1.xpose.msra.mxu0 0.0
    %223 = vmatprep.subr.mxu0 0.0
    %224 = vmatpush1.xpose.msra.mxu0 0.0
    %225 = vmatprep.subr.mxu0 0.0
    %226 = vmatpush1.xpose.msra.mxu0 0.0
    %227 = vmatprep.subr.mxu0 0.0
    %228 = vmatpush1.xpose.msra.mxu0 0.0
    %229 = vmatprep.subr.mxu0 0.0
    %230 = vmatpush1.xpose.msra.mxu0 0.0
    %231 = vmatprep.subr.mxu0 0.0
    %232 = vmatpush1.xpose.msra.mxu0 0.0
    %233 = vmatprep.subr.mxu0 0.0
    %234 = vmatpush1.xpose.msra.mxu0 0.0
    %235 = vmatprep.subr.mxu0 0.0
    %236 = vmatpush1.xpose.msra.mxu0 0.0
    %237 = vmatprep.subr.mxu0 0.0
    %238 = vmatpush1.xpose.msra.mxu0 0.0
    %239 = vmatprep.subr.mxu0 0.0
    %240 = vmatpush1.xpose.msra.mxu0 0.0
    %241 = vmatprep.subr.mxu0 0.0
    %242 = vmatpush1.xpose.msra.mxu0 0.0
    %243 = vmatprep.subr.mxu0 0.0
    %244 = vmatpush1.xpose.msra.mxu0 0.0
    %245 = vmatprep.subr.mxu0 0.0
    %246 = vmatpush1.xpose.msra.mxu0 0.0
    %247 = vmatprep.subr.mxu0 0.0
    %248 = vmatpush1.xpose.msra.mxu0 0.0
    %249 = vmatprep.subr.mxu0 0.0
    %250 = vmatpush1.xpose.msra.mxu0 0.0
    %251 = vmatprep.subr.mxu0 0.0
    %252 = vmatpush1.xpose.msra.mxu0 0.0
    %253 = vmatprep.subr.mxu0 0.0
    %254 = vmatpush1.xpose.msra.mxu0 0.0
    %255 = vmatprep.subr.mxu0 0.0
    %256 = vmatpush1.xpose.msra.mxu0 0.0
    %257 = vmatprep.mubr.f32.mxu0 0.0
    %258 = vmatmul.mubr.f32.gmra.mrb[0].mxu0 %v189
    %v259 = vpop.f32.mrb[0].mxu0
    %v260 = vadd.f32 %v184, %v259
    %v261 = vpop.f32.mrb[0].mxu0
    %262 = vdwg.mxu0
    %vm263 = vcmask 64512
    %v264 = vsel %vm263, %v260, -inf
    %265 = vmax.xlane.f32.xlu0 %v264
    %v266 = vpop.xlane.xlu0 %265
    %v267 = vsub.f32 %v260, %v266
    %v268 = vmul.f32 %v267, 1.442695
    %v269 = vpow.pop %v268
    %v270 = vsel %vm263, %v269, 0.0
    %271 = vadd.xlane.f32.xlu0 %v270
    %v272 = vpop.xlane.xlu0 %271
    %v273 = vrcp.pop %v272
    %v274 = vmul.f32 %v269, %v273
    %275 = vrot.lane.b32.xlu0 %v172, 64
    %v276 = vpop.permute.xlu0 %275
    %v279 = vsel %vm263, %v274, 0
    %281 = vmatprep.subr.mxu0 0.0
    %282 = vmatpush1.msra.mxu0 %v276
    %283 = vmatprep.subr.mxu0 0.0
    %284 = vmatpush1.msra.mxu0 0.0
    %285 = vmatprep.subr.mxu0 0.0
    %286 = vmatpush1.msra.mxu0 0.0
    %287 = vmatprep.subr.mxu0 0.0
    %288 = vmatpush1.msra.mxu0 0.0
    %289 = vmatprep.subr.mxu0 0.0
    %290 = vmatpush1.msra.mxu0 0.0
    %291 = vmatprep.subr.mxu0 0.0
    %292 = vmatpush1.msra.mxu0 0.0
    %293 = vmatprep.subr.mxu0 0.0
    %294 = vmatpush1.msra.mxu0 0.0
    %295 = vmatprep.subr.mxu0 0.0
    %296 = vmatpush1.msra.mxu0 0.0
    %297 = vmatprep.subr.mxu0 0.0
    %298 = vmatpush1.msra.mxu0 0.0
    %299 = vmatprep.subr.mxu0 0.0
    %300 = vmatpush1.msra.mxu0 0.0
    %301 = vmatprep.subr.mxu0 0.0
    %302 = vmatpush1.msra.mxu0 0.0
    %303 = vmatprep.subr.mxu0 0.0
    %304 = vmatpush1.msra.mxu0 0.0
    %305 = vmatprep.subr.mxu0 0.0
    %306 = vmatpush1.msra.mxu0 0.0
    %307 = vmatprep.subr.mxu0 0.0
    %308 = vmatpush1.msra.mxu0 0.0
    %309 = vmatprep.subr.mxu0 0.0
    %310 = vmatpush1.msra.mxu0 0.0
    %311 = vmatprep.subr.mxu0 0.0
    %312 = vmatpush1.msra.mxu0 0.0
    %313 = vmatprep.subr.mxu0 0.0
    %314 = vmatpush1.msra.mxu0 0.0
    %315 = vmatprep.subr.mxu0 0.0
    %316 = vmatpush1.msra.mxu0 0.0
    %317 = vmatprep.subr.mxu0 0.0
    %318 = vmatpush1.msra.mxu0 0.0
    %319 = vmatprep.subr.mxu0 0.0
    %320 = vmatpush1.msra.mxu0 0.0
    %321 = vmatprep.subr.mxu0 0.0
    %322 = vmatpush1.msra.mxu0 0.0
    %323 = vmatprep.subr.mxu0 0.0
    %324 = vmatpush1.msra.mxu0 0.0
    %325 = vmatprep.subr.mxu0 0.0
    %326 = vmatpush1.msra.mxu0 0.0
    %327 = vmatprep.subr.mxu0 0.0
    %328 = vmatpush1.msra.mxu0 0.0
    %329 = vmatprep.subr.mxu0 0.0
    %330 = vmatpush1.msra.mxu0 0.0
    %331 = vmatprep.subr.mxu0 0.0
    %332 = vmatpush1.msra.mxu0 0.0
    %333 = vmatprep.subr.mxu0 0.0
    %334 = vmatpush1.msra.mxu0 0.0
    %335 = vmatprep.subr.mxu0 0.0
    %336 = vmatpush1.msra.mxu0 0.0
    %337 = vmatprep.subr.mxu0 0.0
    %338 = vmatpush1.msra.mxu0 0.0
    %339 = vmatprep.subr.mxu0 0.0
    %340 = vmatpush1.msra.mxu0 0.0
    %341 = vmatprep.subr.mxu0 0.0
    %342 = vmatpush1.msra.mxu0 0.0
    %343 = vmatprep.subr.mxu0 0.0
    %344 = vmatpush1.msra.mxu0 0.0
    %345 = vmatprep.mubr.f32.mxu0 0.0
    %346 = vmatmul.mubr.f32.gmra.mrb[0].mxu0 %v279
    %v347 = vpop.f32.mrb[0].mxu0
    %v348 = vadd.f32 0.0, %v347
    %v349 = vpop.f32.mrb[0].mxu0
    %350 = vdwg.mxu0
    %351 = vrot.lane.b32.xlu0 %v172, 112
    %v352 = vpop.permute.xlu0 %351
    %353 = vrot.lane.b32.xlu0 %v172, 80
    %v354 = vpop.permute.xlu0 %353
    %v355 = vsel %vm188, %v352, 0
    %v357 = vsel %vm188, %v354, 0
    %359 = vmatprep.subr.mxu0 0.0
    %360 = vmatpush1.xpose.msra.mxu0 %v357
    %361 = vmatprep.subr.mxu0 0.0
    %362 = vmatpush1.xpose.msra.mxu0 0.0
    %363 = vmatprep.subr.mxu0 0.0
    %364 = vmatpush1.xpose.msra.mxu0 0.0
    %365 = vmatprep.subr.mxu0 0.0
    %366 = vmatpush1.xpose.msra.mxu0 0.0
    %367 = vmatprep.subr.mxu0 0.0
    %368 = vmatpush1.xpose.msra.mxu0 0.0
    %369 = vmatprep.subr.mxu0 0.0
    %370 = vmatpush1.xpose.msra.mxu0 0.0
    %371 = vmatprep.subr.mxu0 0.0
    %372 = vmatpush1.xpose.msra.mxu0 0.0
    %373 = vmatprep.subr.mxu0 0.0
    %374 = vmatpush1.xpose.msra.mxu0 0.0
    %375 = vmatprep.subr.mxu0 0.0
    %376 = vmatpush1.xpose.msra.mxu0 0.0
    %377 = vmatprep.subr.mxu0 0.0
    %378 = vmatpush1.xpose.msra.mxu0 0.0
    %379 = vmatprep.subr.mxu0 0.0
    %380 = vmatpush1.xpose.msra.mxu0 0.0
    %381 = vmatprep.subr.mxu0 0.0
    %382 = vmatpush1.xpose.msra.mxu0 0.0
    %383 = vmatprep.subr.mxu0 0.0
    %384 = vmatpush1.xpose.msra.mxu0 0.0
    %385 = vmatprep.subr.mxu0 0.0
    %386 = vmatpush1.xpose.msra.mxu0 0.0
    %387 = vmatprep.subr.mxu0 0.0
    %388 = vmatpush1.xpose.msra.mxu0 0.0
    %389 = vmatprep.subr.mxu0 0.0
    %390 = vmatpush1.xpose.msra.mxu0 0.0
    %391 = vmatprep.subr.mxu0 0.0
    %392 = vmatpush1.xpose.msra.mxu0 0.0
    %393 = vmatprep.subr.mxu0 0.0
    %394 = vmatpush1.xpose.msra.mxu0 0.0
    %395 = vmatprep.subr.mxu0 0.0
    %396 = vmatpush1.xpose.msra.mxu0 0.0
    %397 = vmatprep.subr.mxu0 0.0
    %398 = vmatpush1.xpose.msra.mxu0 0.0
    %399 = vmatprep.subr.mxu0 0.0
    %400 = vmatpush1.xpose.msra.mxu0 0.0
    %401 = vmatprep.subr.mxu0 0.0
    %402 = vmatpush1.xpose.msra.mxu0 0.0
    %403 = vmatprep.subr.mxu0 0.0
    %404 = vmatpush1.xpose.msra.mxu0 0.0
    %405 = vmatprep.subr.mxu0 0.0
    %406 = vmatpush1.xpose.msra.mxu0 0.0
    %407 = vmatprep.subr.mxu0 0.0
    %408 = vmatpush1.xpose.msra.mxu0 0.0
    %409 = vmatprep.subr.mxu0 0.0
    %410 = vmatpush1.xpose.msra.mxu0 0.0
    %411 = vmatprep.subr.mxu0 0.0
    %412 = vmatpush1.xpose.msra.mxu0 0.0
    %413 = vmatprep.subr.mxu0 0.0
    %414 = vmatpush1.xpose.msra.mxu0 0.0
    %415 = vmatprep.subr.mxu0 0.0
    %416 = vmatpush1.xpose.msra.mxu0 0.0
    %417 = vmatprep.subr.mxu0 0.0
    %418 = vmatpush1.xpose.msra.mxu0 0.0
    %419 = vmatprep.subr.mxu0 0.0
    %420 = vmatpush1.xpose.msra.mxu0 0.0
    %421 = vmatprep.subr.mxu0 0.0
    %422 = vmatpush1.xpose.msra.mxu0 0.0
    %423 = vmatprep.mubr.f32.mxu0 0.0
    %424 = vmatmul.mubr.f32.gmra.mrb[0].mxu0 %v355
    %v425 = vpop.f32.mrb[0].mxu0
    %v426 = vadd.f32 %v184, %v425
    %v427 = vpop.f32.mrb[0].mxu0
    %428 = vdwg.mxu0
    %v429 = vsel %vm263, %v426, -inf
    %430 = vmax.xlane.f32.xlu0 %v429
    %v431 = vpop.xlane.xlu0 %430
    %v432 = vsub.f32 %v426, %v431
    %v433 = vmul.f32 %v432, 1.442695
    %v434 = vpow.pop %v433
    %v435 = vsel %vm263, %v434, 0.0
    %436 = vadd.xlane.f32.xlu0 %v435
    %v437 = vpop.xlane.xlu0 %436
    %v438 = vrcp.pop %v437
    %v439 = vmul.f32 %v434, %v438
    %440 = vrot.lane.b32.xlu0 %v172, 48
    %v441 = vpop.permute.xlu0 %440
    %v444 = vsel %vm263, %v439, 0
    %446 = vmatprep.subr.mxu0 0.0
    %447 = vmatpush1.msra.mxu0 %v441
    %448 = vmatprep.subr.mxu0 0.0
    %449 = vmatpush1.msra.mxu0 0.0
    %450 = vmatprep.subr.mxu0 0.0
    %451 = vmatpush1.msra.mxu0 0.0
    %452 = vmatprep.subr.mxu0 0.0
    %453 = vmatpush1.msra.mxu0 0.0
    %454 = vmatprep.subr.mxu0 0.0
    %455 = vmatpush1.msra.mxu0 0.0
    %456 = vmatprep.subr.mxu0 0.0
    %457 = vmatpush1.msra.mxu0 0.0
    %458 = vmatprep.subr.mxu0 0.0
    %459 = vmatpush1.msra.mxu0 0.0
    %460 = vmatprep.subr.mxu0 0.0
    %461 = vmatpush1.msra.mxu0 0.0
    %462 = vmatprep.subr.mxu0 0.0
    %463 = vmatpush1.msra.mxu0 0.0
    %464 = vmatprep.subr.mxu0 0.0
    %465 = vmatpush1.msra.mxu0 0.0
    %466 = vmatprep.subr.mxu0 0.0
    %467 = vmatpush1.msra.mxu0 0.0
    %468 = vmatprep.subr.mxu0 0.0
    %469 = vmatpush1.msra.mxu0 0.0
    %470 = vmatprep.subr.mxu0 0.0
    %471 = vmatpush1.msra.mxu0 0.0
    %472 = vmatprep.subr.mxu0 0.0
    %473 = vmatpush1.msra.mxu0 0.0
    %474 = vmatprep.subr.mxu0 0.0
    %475 = vmatpush1.msra.mxu0 0.0
    %476 = vmatprep.subr.mxu0 0.0
    %477 = vmatpush1.msra.mxu0 0.0
    %478 = vmatprep.subr.mxu0 0.0
    %479 = vmatpush1.msra.mxu0 0.0
    %480 = vmatprep.subr.mxu0 0.0
    %481 = vmatpush1.msra.mxu0 0.0
    %482 = vmatprep.subr.mxu0 0.0
    %483 = vmatpush1.msra.mxu0 0.0
    %484 = vmatprep.subr.mxu0 0.0
    %485 = vmatpush1.msra.mxu0 0.0
    %486 = vmatprep.subr.mxu0 0.0
    %487 = vmatpush1.msra.mxu0 0.0
    %488 = vmatprep.subr.mxu0 0.0
    %489 = vmatpush1.msra.mxu0 0.0
    %490 = vmatprep.subr.mxu0 0.0
    %491 = vmatpush1.msra.mxu0 0.0
    %492 = vmatprep.subr.mxu0 0.0
    %493 = vmatpush1.msra.mxu0 0.0
    %494 = vmatprep.subr.mxu0 0.0
    %495 = vmatpush1.msra.mxu0 0.0
    %496 = vmatprep.subr.mxu0 0.0
    %497 = vmatpush1.msra.mxu0 0.0
    %498 = vmatprep.subr.mxu0 0.0
    %499 = vmatpush1.msra.mxu0 0.0
    %500 = vmatprep.subr.mxu0 0.0
    %501 = vmatpush1.msra.mxu0 0.0
    %502 = vmatprep.subr.mxu0 0.0
    %503 = vmatpush1.msra.mxu0 0.0
    %504 = vmatprep.subr.mxu0 0.0
    %505 = vmatpush1.msra.mxu0 0.0
    %506 = vmatprep.subr.mxu0 0.0
    %507 = vmatpush1.msra.mxu0 0.0
    %508 = vmatprep.subr.mxu0 0.0
    %509 = vmatpush1.msra.mxu0 0.0
    %510 = vmatprep.mubr.f32.mxu0 0.0
    %511 = vmatmul.mubr.f32.gmra.mrb[0].mxu0 %v444
    %v512 = vpop.f32.mrb[0].mxu0
    %v513 = vadd.f32 0.0, %v512
    %v514 = vpop.f32.mrb[0].mxu0
    %515 = vdwg.mxu0
    %v517 = vsel %vm188, %v513, 0
    %519 = vmatprep.subr.mxu0 0.0
    %520 = vmatpush1.msra.mxu0 %v80
    %521 = vmatprep.subr.mxu0 0.0
    %522 = vmatpush1.msra.mxu0 %v81
    %523 = vmatprep.subr.mxu0 0.0
    %524 = vmatpush1.msra.mxu0 0.0
    %525 = vmatprep.subr.mxu0 0.0
    %526 = vmatpush1.msra.mxu0 0.0
    %527 = vmatprep.subr.mxu0 0.0
    %528 = vmatpush1.msra.mxu0 0.0
    %529 = vmatprep.subr.mxu0 0.0
    %530 = vmatpush1.msra.mxu0 0.0
    %531 = vmatprep.subr.mxu0 0.0
    %532 = vmatpush1.msra.mxu0 0.0
    %533 = vmatprep.subr.mxu0 0.0
    %534 = vmatpush1.msra.mxu0 0.0
    %535 = vmatprep.subr.mxu0 0.0
    %536 = vmatpush1.msra.mxu0 0.0
    %537 = vmatprep.subr.mxu0 0.0
    %538 = vmatpush1.msra.mxu0 0.0
    %539 = vmatprep.subr.mxu0 0.0
    %540 = vmatpush1.msra.mxu0 0.0
    %541 = vmatprep.subr.mxu0 0.0
    %542 = vmatpush1.msra.mxu0 0.0
    %543 = vmatprep.subr.mxu0 0.0
    %544 = vmatpush1.msra.mxu0 0.0
    %545 = vmatprep.subr.mxu0 0.0
    %546 = vmatpush1.msra.mxu0 0.0
    %547 = vmatprep.subr.mxu0 0.0
    %548 = vmatpush1.msra.mxu0 0.0
    %549 = vmatprep.subr.mxu0 0.0
    %550 = vmatpush1.msra.mxu0 0.0
    %551 = vmatprep.subr.mxu0 0.0
    %552 = vmatpush1.msra.mxu0 0.0
    %553 = vmatprep.subr.mxu0 0.0
    %554 = vmatpush1.msra.mxu0 0.0
    %555 = vmatprep.subr.mxu0 0.0
    %556 = vmatpush1.msra.mxu0 0.0
    %557 = vmatprep.subr.mxu0 0.0
    %558 = vmatpush1.msra.mxu0 0.0
    %559 = vmatprep.subr.mxu0 0.0
    %560 = vmatpush1.msra.mxu0 0.0
    %561 = vmatprep.subr.mxu0 0.0
    %562 = vmatpush1.msra.mxu0 0.0
    %563 = vmatprep.subr.mxu0 0.0
    %564 = vmatpush1.msra.mxu0 0.0
    %565 = vmatprep.subr.mxu0 0.0
    %566 = vmatpush1.msra.mxu0 0.0
    %567 = vmatprep.subr.mxu0 0.0
    %568 = vmatpush1.msra.mxu0 0.0
    %569 = vmatprep.subr.mxu0 0.0
    %570 = vmatpush1.msra.mxu0 0.0
    %571 = vmatprep.subr.mxu0 0.0
    %572 = vmatpush1.msra.mxu0 0.0
    %573 = vmatprep.subr.mxu0 0.0
    %574 = vmatpush1.msra.mxu0 0.0
    %575 = vmatprep.subr.mxu0 0.0
    %576 = vmatpush1.msra.mxu0 0.0
    %577 = vmatprep.subr.mxu0 0.0
    %578 = vmatpush1.msra.mxu0 0.0
    %579 = vmatprep.subr.mxu0 0.0
    %580 = vmatpush1.msra.mxu0 0.0
    %581 = vmatprep.subr.mxu0 0.0
    %582 = vmatpush1.msra.mxu0 0.0
    %583 = vmatprep.mubr.f32.mxu0 0.0
    %584 = vmatmul.mubr.f32.gmra.mrb[0].mxu0 %v517
    %v585 = vpop.f32.mrb[0].mxu0
    %v586 = vadd.f32 0.0, %v585
    %v587 = vpop.f32.mrb[0].mxu0
    %588 = vdwg.mxu0
    %v590 = vsel %vm188, %v348, 0
    %592 = vmatprep.subr.mxu0 0.0
    %593 = vmatpush1.msra.mxu0 %v78
    %594 = vmatprep.subr.mxu0 0.0
    %595 = vmatpush1.msra.mxu0 %v79
    %596 = vmatprep.subr.mxu0 0.0
    %597 = vmatpush1.msra.mxu0 0.0
    %598 = vmatprep.subr.mxu0 0.0
    %599 = vmatpush1.msra.mxu0 0.0
    %600 = vmatprep.subr.mxu0 0.0
    %601 = vmatpush1.msra.mxu0 0.0
    %602 = vmatprep.subr.mxu0 0.0
    %603 = vmatpush1.msra.mxu0 0.0
    %604 = vmatprep.subr.mxu0 0.0
    %605 = vmatpush1.msra.mxu0 0.0
    %606 = vmatprep.subr.mxu0 0.0
    %607 = vmatpush1.msra.mxu0 0.0
    %608 = vmatprep.subr.mxu0 0.0
    %609 = vmatpush1.msra.mxu0 0.0
    %610 = vmatprep.subr.mxu0 0.0
    %611 = vmatpush1.msra.mxu0 0.0
    %612 = vmatprep.subr.mxu0 0.0
    %613 = vmatpush1.msra.mxu0 0.0
    %614 = vmatprep.subr.mxu0 0.0
    %615 = vmatpush1.msra.mxu0 0.0
    %616 = vmatprep.subr.mxu0 0.0
    %617 = vmatpush1.msra.mxu0 0.0
    %618 = vmatprep.subr.mxu0 0.0
    %619 = vmatpush1.msra.mxu0 0.0
    %620 = vmatprep.subr.mxu0 0.0
    %621 = vmatpush1.msra.mxu0 0.0
    %622 = vmatprep.subr.mxu0 0.0
    %623 = vmatpush1.msra.mxu0 0.0
    %624 = vmatprep.subr.mxu0 0.0
    %625 = vmatpush1.msra.mxu0 0.0
    %626 = vmatprep.subr.mxu0 0.0
    %627 = vmatpush1.msra.mxu0 0.0
    %628 = vmatprep.subr.mxu0 0.0
    %629 = vmatpush1.msra.mxu0 0.0
    %630 = vmatprep.subr.mxu0 0.0
    %631 = vmatpush1.msra.mxu0 0.0
    %632 = vmatprep.subr.mxu0 0.0
    %633 = vmatpush1.msra.mxu0 0.0
    %634 = vmatprep.subr.mxu0 0.0
    %635 = vmatpush1.msra.mxu0 0.0
    %636 = vmatprep.subr.mxu0 0.0
    %637 = vmatpush1.msra.mxu0 0.0
    %638 = vmatprep.subr.mxu0 0.0
    %639 = vmatpush1.msra.mxu0 0.0
    %640 = vmatprep.subr.mxu0 0.0
    %641 = vmatpush1.msra.mxu0 0.0
    %642 = vmatprep.subr.mxu0 0.0
    %643 = vmatpush1.msra.mxu0 0.0
    %644 = vmatprep.subr.mxu0 0.0
    %645 = vmatpush1.msra.mxu0 0.0
    %646 = vmatprep.subr.mxu0 0.0
    %647 = vmatpush1.msra.mxu0 0.0
    %648 = vmatprep.subr.mxu0 0.0
    %649 = vmatpush1.msra.mxu0 0.0
    %650 = vmatprep.subr.mxu0 0.0
    %651 = vmatpush1.msra.mxu0 0.0
    %652 = vmatprep.subr.mxu0 0.0
    %653 = vmatpush1.msra.mxu0 0.0
    %654 = vmatprep.subr.mxu0 0.0
    %655 = vmatpush1.msra.mxu0 0.0
    %656 = vmatprep.mubr.f32.mxu0 0.0
    %657 = vmatmul.mubr.f32.gmra.mrb[0].mxu0 %v590
    %v658 = vpop.f32.mrb[0].mxu0
    %v659 = vadd.f32 %v586, %v658
    %v660 = vpop.f32.mrb[0].mxu0
    %661 = vdwg.mxu0
    %v662 = vld [vmem:[%s1 + $0x1] sm:$0x1]
    %v663 = vlaneseq
    %v664 = vshrl.u32 %v663, 7
    %v665 = vsub.s32 0, %v664
    %v666 = vrot.slane %v662, %v665
    %668 = vrot.lane.b32.xlu0 %v177, 96
    %v669 = vpop.permute.xlu0 %668
    %v670 = vsel %vm188, %v177, 0
    %v672 = vsel %vm188, %v669, 0
    %674 = vmatprep.subr.mxu0 0.0
    %675 = vmatpush1.xpose.msra.mxu0 %v672
    %676 = vmatprep.subr.mxu0 0.0
    %677 = vmatpush1.xpose.msra.mxu0 0.0
    %678 = vmatprep.subr.mxu0 0.0
    %679 = vmatpush1.xpose.msra.mxu0 0.0
    %680 = vmatprep.subr.mxu0 0.0
    %681 = vmatpush1.xpose.msra.mxu0 0.0
    %682 = vmatprep.subr.mxu0 0.0
    %683 = vmatpush1.xpose.msra.mxu0 0.0
    %684 = vmatprep.subr.mxu0 0.0
    %685 = vmatpush1.xpose.msra.mxu0 0.0
    %686 = vmatprep.subr.mxu0 0.0
    %687 = vmatpush1.xpose.msra.mxu0 0.0
    %688 = vmatprep.subr.mxu0 0.0
    %689 = vmatpush1.xpose.msra.mxu0 0.0
    %690 = vmatprep.subr.mxu0 0.0
    %691 = vmatpush1.xpose.msra.mxu0 0.0
    %692 = vmatprep.subr.mxu0 0.0
    %693 = vmatpush1.xpose.msra.mxu0 0.0
    %694 = vmatprep.subr.mxu0 0.0
    %695 = vmatpush1.xpose.msra.mxu0 0.0
    %696 = vmatprep.subr.mxu0 0.0
    %697 = vmatpush1.xpose.msra.mxu0 0.0
    %698 = vmatprep.subr.mxu0 0.0
    %699 = vmatpush1.xpose.msra.mxu0 0.0
    %700 = vmatprep.subr.mxu0 0.0
    %701 = vmatpush1.xpose.msra.mxu0 0.0
    %702 = vmatprep.subr.mxu0 0.0
    %703 = vmatpush1.xpose.msra.mxu0 0.0
    %704 = vmatprep.subr.mxu0 0.0
    %705 = vmatpush1.xpose.msra.mxu0 0.0
    %706 = vmatprep.subr.mxu0 0.0
    %707 = vmatpush1.xpose.msra.mxu0 0.0
    %708 = vmatprep.subr.mxu0 0.0
    %709 = vmatpush1.xpose.msra.mxu0 0.0
    %710 = vmatprep.subr.mxu0 0.0
    %711 = vmatpush1.xpose.msra.mxu0 0.0
    %712 = vmatprep.subr.mxu0 0.0
    %713 = vmatpush1.xpose.msra.mxu0 0.0
    %714 = vmatprep.subr.mxu0 0.0
    %715 = vmatpush1.xpose.msra.mxu0 0.0
    %716 = vmatprep.subr.mxu0 0.0
    %717 = vmatpush1.xpose.msra.mxu0 0.0
    %718 = vmatprep.subr.mxu0 0.0
    %719 = vmatpush1.xpose.msra.mxu0 0.0
    %720 = vmatprep.subr.mxu0 0.0
    %721 = vmatpush1.xpose.msra.mxu0 0.0
    %722 = vmatprep.subr.mxu0 0.0
    %723 = vmatpush1.xpose.msra.mxu0 0.0
    %724 = vmatprep.subr.mxu0 0.0
    %725 = vmatpush1.xpose.msra.mxu0 0.0
    %726 = vmatprep.subr.mxu0 0.0
    %727 = vmatpush1.xpose.msra.mxu0 0.0
    %728 = vmatprep.subr.mxu0 0.0
    %729 = vmatpush1.xpose.msra.mxu0 0.0
    %730 = vmatprep.subr.mxu0 0.0
    %731 = vmatpush1.xpose.msra.mxu0 0.0
    %732 = vmatprep.subr.mxu0 0.0
    %733 = vmatpush1.xpose.msra.mxu0 0.0
    %734 = vmatprep.subr.mxu0 0.0
    %735 = vmatpush1.xpose.msra.mxu0 0.0
    %736 = vmatprep.subr.mxu0 0.0
    %737 = vmatpush1.xpose.msra.mxu0 0.0
    %738 = vmatprep.mubr.f32.mxu0 0.0
    %739 = vmatmul.mubr.f32.gmra.mrb[0].mxu0 %v670
    %v740 = vpop.f32.mrb[0].mxu0
    %v741 = vadd.f32 %v666, %v740
    %v742 = vpop.f32.mrb[0].mxu0
    %743 = vdwg.mxu0
    %v744 = vsel %vm263, %v741, -inf
    %745 = vmax.xlane.f32.xlu0 %v744
    %v746 = vpop.xlane.xlu0 %745
    %v747 = vsub.f32 %v741, %v746
    %v748 = vmul.f32 %v747, 1.442695
    %v749 = vpow.pop %v748
    %v750 = vsel %vm263, %v749, 0.0
    %751 = vadd.xlane.f32.xlu0 %v750
    %v752 = vpop.xlane.xlu0 %751
    %v753 = vrcp.pop %v752
    %v754 = vmul.f32 %v749, %v753
    %755 = vrot.lane.b32.xlu0 %v177, 64
    %v756 = vpop.permute.xlu0 %755
    %v759 = vsel %vm263, %v754, 0
    %761 = vmatprep.subr.mxu0 0.0
    %762 = vmatpush1.msra.mxu0 %v756
    %763 = vmatprep.subr.mxu0 0.0
    %764 = vmatpush1.msra.mxu0 0.0
    %765 = vmatprep.subr.mxu0 0.0
    %766 = vmatpush1.msra.mxu0 0.0
    %767 = vmatprep.subr.mxu0 0.0
    %768 = vmatpush1.msra.mxu0 0.0
    %769 = vmatprep.subr.mxu0 0.0
    %770 = vmatpush1.msra.mxu0 0.0
    %771 = vmatprep.subr.mxu0 0.0
    %772 = vmatpush1.msra.mxu0 0.0
    %773 = vmatprep.subr.mxu0 0.0
    %774 = vmatpush1.msra.mxu0 0.0
    %775 = vmatprep.subr.mxu0 0.0
    %776 = vmatpush1.msra.mxu0 0.0
    %777 = vmatprep.subr.mxu0 0.0
    %778 = vmatpush1.msra.mxu0 0.0
    %779 = vmatprep.subr.mxu0 0.0
    %780 = vmatpush1.msra.mxu0 0.0
    %781 = vmatprep.subr.mxu0 0.0
    %782 = vmatpush1.msra.mxu0 0.0
    %783 = vmatprep.subr.mxu0 0.0
    %784 = vmatpush1.msra.mxu0 0.0
    %785 = vmatprep.subr.mxu0 0.0
    %786 = vmatpush1.msra.mxu0 0.0
    %787 = vmatprep.subr.mxu0 0.0
    %788 = vmatpush1.msra.mxu0 0.0
    %789 = vmatprep.subr.mxu0 0.0
    %790 = vmatpush1.msra.mxu0 0.0
    %791 = vmatprep.subr.mxu0 0.0
    %792 = vmatpush1.msra.mxu0 0.0
    %793 = vmatprep.subr.mxu0 0.0
    %794 = vmatpush1.msra.mxu0 0.0
    %795 = vmatprep.subr.mxu0 0.0
    %796 = vmatpush1.msra.mxu0 0.0
    %797 = vmatprep.subr.mxu0 0.0
    %798 = vmatpush1.msra.mxu0 0.0
    %799 = vmatprep.subr.mxu0 0.0
    %800 = vmatpush1.msra.mxu0 0.0
    %801 = vmatprep.subr.mxu0 0.0
    %802 = vmatpush1.msra.mxu0 0.0
    %803 = vmatprep.subr.mxu0 0.0
    %804 = vmatpush1.msra.mxu0 0.0
    %805 = vmatprep.subr.mxu0 0.0
    %806 = vmatpush1.msra.mxu0 0.0
    %807 = vmatprep.subr.mxu0 0.0
    %808 = vmatpush1.msra.mxu0 0.0
    %809 = vmatprep.subr.mxu0 0.0
    %810 = vmatpush1.msra.mxu0 0.0
    %811 = vmatprep.subr.mxu0 0.0
    %812 = vmatpush1.msra.mxu0 0.0
    %813 = vmatprep.subr.mxu0 0.0
    %814 = vmatpush1.msra.mxu0 0.0
    %815 = vmatprep.subr.mxu0 0.0
    %816 = vmatpush1.msra.mxu0 0.0
    %817 = vmatprep.subr.mxu0 0.0
    %818 = vmatpush1.msra.mxu0 0.0
    %819 = vmatprep.subr.mxu0 0.0
    %820 = vmatpush1.msra.mxu0 0.0
    %821 = vmatprep.subr.mxu0 0.0
    %822 = vmatpush1.msra.mxu0 0.0
    %823 = vmatprep.subr.mxu0 0.0
    %824 = vmatpush1.msra.mxu0 0.0
    %825 = vmatprep.mubr.f32.mxu0 0.0
    %826 = vmatmul.mubr.f32.gmra.mrb[0].mxu0 %v759
    %v827 = vpop.f32.mrb[0].mxu0
    %v828 = vadd.f32 0.0, %v827
    %v829 = vpop.f32.mrb[0].mxu0
    %830 = vdwg.mxu0
    %831 = vrot.lane.b32.xlu0 %v177, 112
    %v832 = vpop.permute.xlu0 %831
    %833 = vrot.lane.b32.xlu0 %v177, 80
    %v834 = vpop.permute.xlu0 %833
    %v835 = vsel %vm188, %v832, 0
    %v837 = vsel %vm188, %v834, 0
    %839 = vmatprep.subr.mxu0 0.0
    %840 = vmatpush1.xpose.msra.mxu0 %v837
    %841 = vmatprep.subr.mxu0 0.0
    %842 = vmatpush1.xpose.msra.mxu0 0.0
    %843 = vmatprep.subr.mxu0 0.0
    %844 = vmatpush1.xpose.msra.mxu0 0.0
    %845 = vmatprep.subr.mxu0 0.0
    %846 = vmatpush1.xpose.msra.mxu0 0.0
    %847 = vmatprep.subr.mxu0 0.0
    %848 = vmatpush1.xpose.msra.mxu0 0.0
    %849 = vmatprep.subr.mxu0 0.0
    %850 = vmatpush1.xpose.msra.mxu0 0.0
    %851 = vmatprep.subr.mxu0 0.0
    %852 = vmatpush1.xpose.msra.mxu0 0.0
    %853 = vmatprep.subr.mxu0 0.0
    %854 = vmatpush1.xpose.msra.mxu0 0.0
    %855 = vmatprep.subr.mxu0 0.0
    %856 = vmatpush1.xpose.msra.mxu0 0.0
    %857 = vmatprep.subr.mxu0 0.0
    %858 = vmatpush1.xpose.msra.mxu0 0.0
    %859 = vmatprep.subr.mxu0 0.0
    %860 = vmatpush1.xpose.msra.mxu0 0.0
    %861 = vmatprep.subr.mxu0 0.0
    %862 = vmatpush1.xpose.msra.mxu0 0.0
    %863 = vmatprep.subr.mxu0 0.0
    %864 = vmatpush1.xpose.msra.mxu0 0.0
    %865 = vmatprep.subr.mxu0 0.0
    %866 = vmatpush1.xpose.msra.mxu0 0.0
    %867 = vmatprep.subr.mxu0 0.0
    %868 = vmatpush1.xpose.msra.mxu0 0.0
    %869 = vmatprep.subr.mxu0 0.0
    %870 = vmatpush1.xpose.msra.mxu0 0.0
    %871 = vmatprep.subr.mxu0 0.0
    %872 = vmatpush1.xpose.msra.mxu0 0.0
    %873 = vmatprep.subr.mxu0 0.0
    %874 = vmatpush1.xpose.msra.mxu0 0.0
    %875 = vmatprep.subr.mxu0 0.0
    %876 = vmatpush1.xpose.msra.mxu0 0.0
    %877 = vmatprep.subr.mxu0 0.0
    %878 = vmatpush1.xpose.msra.mxu0 0.0
    %879 = vmatprep.subr.mxu0 0.0
    %880 = vmatpush1.xpose.msra.mxu0 0.0
    %881 = vmatprep.subr.mxu0 0.0
    %882 = vmatpush1.xpose.msra.mxu0 0.0
    %883 = vmatprep.subr.mxu0 0.0
    %884 = vmatpush1.xpose.msra.mxu0 0.0
    %885 = vmatprep.subr.mxu0 0.0
    %886 = vmatpush1.xpose.msra.mxu0 0.0
    %887 = vmatprep.subr.mxu0 0.0
    %888 = vmatpush1.xpose.msra.mxu0 0.0
    %889 = vmatprep.subr.mxu0 0.0
    %890 = vmatpush1.xpose.msra.mxu0 0.0
    %891 = vmatprep.subr.mxu0 0.0
    %892 = vmatpush1.xpose.msra.mxu0 0.0
    %893 = vmatprep.subr.mxu0 0.0
    %894 = vmatpush1.xpose.msra.mxu0 0.0
    %895 = vmatprep.subr.mxu0 0.0
    %896 = vmatpush1.xpose.msra.mxu0 0.0
    %897 = vmatprep.subr.mxu0 0.0
    %898 = vmatpush1.xpose.msra.mxu0 0.0
    %899 = vmatprep.subr.mxu0 0.0
    %900 = vmatpush1.xpose.msra.mxu0 0.0
    %901 = vmatprep.subr.mxu0 0.0
    %902 = vmatpush1.xpose.msra.mxu0 0.0
    %903 = vmatprep.mubr.f32.mxu0 0.0
    %904 = vmatmul.mubr.f32.gmra.mrb[0].mxu0 %v835
    %v905 = vpop.f32.mrb[0].mxu0
    %v906 = vadd.f32 %v666, %v905
    %v907 = vpop.f32.mrb[0].mxu0
    %908 = vdwg.mxu0
    %v909 = vsel %vm263, %v906, -inf
    %910 = vmax.xlane.f32.xlu0 %v909
    %v911 = vpop.xlane.xlu0 %910
    %v912 = vsub.f32 %v906, %v911
    %v913 = vmul.f32 %v912, 1.442695
    %v914 = vpow.pop %v913
    %v915 = vsel %vm263, %v914, 0.0
    %916 = vadd.xlane.f32.xlu0 %v915
    %v917 = vpop.xlane.xlu0 %916
    %v918 = vrcp.pop %v917
    %v919 = vmul.f32 %v914, %v918
    %920 = vrot.lane.b32.xlu0 %v177, 48
    %v921 = vpop.permute.xlu0 %920
    %v924 = vsel %vm263, %v919, 0
    %926 = vmatprep.subr.mxu0 0.0
    %927 = vmatpush1.msra.mxu0 %v921
    %928 = vmatprep.subr.mxu0 0.0
    %929 = vmatpush1.msra.mxu0 0.0
    %930 = vmatprep.subr.mxu0 0.0
    %931 = vmatpush1.msra.mxu0 0.0
    %932 = vmatprep.subr.mxu0 0.0
    %933 = vmatpush1.msra.mxu0 0.0
    %934 = vmatprep.subr.mxu0 0.0
    %935 = vmatpush1.msra.mxu0 0.0
    %936 = vmatprep.subr.mxu0 0.0
    %937 = vmatpush1.msra.mxu0 0.0
    %938 = vmatprep.subr.mxu0 0.0
    %939 = vmatpush1.msra.mxu0 0.0
    %940 = vmatprep.subr.mxu0 0.0
    %941 = vmatpush1.msra.mxu0 0.0
    %942 = vmatprep.subr.mxu0 0.0
    %943 = vmatpush1.msra.mxu0 0.0
    %944 = vmatprep.subr.mxu0 0.0
    %945 = vmatpush1.msra.mxu0 0.0
    %946 = vmatprep.subr.mxu0 0.0
    %947 = vmatpush1.msra.mxu0 0.0
    %948 = vmatprep.subr.mxu0 0.0
    %949 = vmatpush1.msra.mxu0 0.0
    %950 = vmatprep.subr.mxu0 0.0
    %951 = vmatpush1.msra.mxu0 0.0
    %952 = vmatprep.subr.mxu0 0.0
    %953 = vmatpush1.msra.mxu0 0.0
    %954 = vmatprep.subr.mxu0 0.0
    %955 = vmatpush1.msra.mxu0 0.0
    %956 = vmatprep.subr.mxu0 0.0
    %957 = vmatpush1.msra.mxu0 0.0
    %958 = vmatprep.subr.mxu0 0.0
    %959 = vmatpush1.msra.mxu0 0.0
    %960 = vmatprep.subr.mxu0 0.0
    %961 = vmatpush1.msra.mxu0 0.0
    %962 = vmatprep.subr.mxu0 0.0
    %963 = vmatpush1.msra.mxu0 0.0
    %964 = vmatprep.subr.mxu0 0.0
    %965 = vmatpush1.msra.mxu0 0.0
    %966 = vmatprep.subr.mxu0 0.0
    %967 = vmatpush1.msra.mxu0 0.0
    %968 = vmatprep.subr.mxu0 0.0
    %969 = vmatpush1.msra.mxu0 0.0
    %970 = vmatprep.subr.mxu0 0.0
    %971 = vmatpush1.msra.mxu0 0.0
    %972 = vmatprep.subr.mxu0 0.0
    %973 = vmatpush1.msra.mxu0 0.0
    %974 = vmatprep.subr.mxu0 0.0
    %975 = vmatpush1.msra.mxu0 0.0
    %976 = vmatprep.subr.mxu0 0.0
    %977 = vmatpush1.msra.mxu0 0.0
    %978 = vmatprep.subr.mxu0 0.0
    %979 = vmatpush1.msra.mxu0 0.0
    %980 = vmatprep.subr.mxu0 0.0
    %981 = vmatpush1.msra.mxu0 0.0
    %982 = vmatprep.subr.mxu0 0.0
    %983 = vmatpush1.msra.mxu0 0.0
    %984 = vmatprep.subr.mxu0 0.0
    %985 = vmatpush1.msra.mxu0 0.0
    %986 = vmatprep.subr.mxu0 0.0
    %987 = vmatpush1.msra.mxu0 0.0
    %988 = vmatprep.subr.mxu0 0.0
    %989 = vmatpush1.msra.mxu0 0.0
    %990 = vmatprep.mubr.f32.mxu0 0.0
    %991 = vmatmul.mubr.f32.gmra.mrb[0].mxu0 %v924
    %v992 = vpop.f32.mrb[0].mxu0
    %v993 = vadd.f32 0.0, %v992
    %v994 = vpop.f32.mrb[0].mxu0
    %995 = vdwg.mxu0
    %v997 = vsel %vm188, %v993, 0
    %999 = vmatprep.subr.mxu0 0.0
    %1000 = vmatpush1.msra.mxu0 %v80
    %1001 = vmatprep.subr.mxu0 0.0
    %1002 = vmatpush1.msra.mxu0 %v81
    %1003 = vmatprep.subr.mxu0 0.0
    %1004 = vmatpush1.msra.mxu0 0.0
    %1005 = vmatprep.subr.mxu0 0.0
    %1006 = vmatpush1.msra.mxu0 0.0
    %1007 = vmatprep.subr.mxu0 0.0
    %1008 = vmatpush1.msra.mxu0 0.0
    %1009 = vmatprep.subr.mxu0 0.0
    %1010 = vmatpush1.msra.mxu0 0.0
    %1011 = vmatprep.subr.mxu0 0.0
    %1012 = vmatpush1.msra.mxu0 0.0
    %1013 = vmatprep.subr.mxu0 0.0
    %1014 = vmatpush1.msra.mxu0 0.0
    %1015 = vmatprep.subr.mxu0 0.0
    %1016 = vmatpush1.msra.mxu0 0.0
    %1017 = vmatprep.subr.mxu0 0.0
    %1018 = vmatpush1.msra.mxu0 0.0
    %1019 = vmatprep.subr.mxu0 0.0
    %1020 = vmatpush1.msra.mxu0 0.0
    %1021 = vmatprep.subr.mxu0 0.0
    %1022 = vmatpush1.msra.mxu0 0.0
    %1023 = vmatprep.subr.mxu0 0.0
    %1024 = vmatpush1.msra.mxu0 0.0
    %1025 = vmatprep.subr.mxu0 0.0
    %1026 = vmatpush1.msra.mxu0 0.0
    %1027 = vmatprep.subr.mxu0 0.0
    %1028 = vmatpush1.msra.mxu0 0.0
    %1029 = vmatprep.subr.mxu0 0.0
    %1030 = vmatpush1.msra.mxu0 0.0
    %1031 = vmatprep.subr.mxu0 0.0
    %1032 = vmatpush1.msra.mxu0 0.0
    %1033 = vmatprep.subr.mxu0 0.0
    %1034 = vmatpush1.msra.mxu0 0.0
    %1035 = vmatprep.subr.mxu0 0.0
    %1036 = vmatpush1.msra.mxu0 0.0
    %1037 = vmatprep.subr.mxu0 0.0
    %1038 = vmatpush1.msra.mxu0 0.0
    %1039 = vmatprep.subr.mxu0 0.0
    %1040 = vmatpush1.msra.mxu0 0.0
    %1041 = vmatprep.subr.mxu0 0.0
    %1042 = vmatpush1.msra.mxu0 0.0
    %1043 = vmatprep.subr.mxu0 0.0
    %1044 = vmatpush1.msra.mxu0 0.0
    %1045 = vmatprep.subr.mxu0 0.0
    %1046 = vmatpush1.msra.mxu0 0.0
    %1047 = vmatprep.subr.mxu0 0.0
    %1048 = vmatpush1.msra.mxu0 0.0
    %1049 = vmatprep.subr.mxu0 0.0
    %1050 = vmatpush1.msra.mxu0 0.0
    %1051 = vmatprep.subr.mxu0 0.0
    %1052 = vmatpush1.msra.mxu0 0.0
    %1053 = vmatprep.subr.mxu0 0.0
    %1054 = vmatpush1.msra.mxu0 0.0
    %1055 = vmatprep.subr.mxu0 0.0
    %1056 = vmatpush1.msra.mxu0 0.0
    %1057 = vmatprep.subr.mxu0 0.0
    %1058 = vmatpush1.msra.mxu0 0.0
    %1059 = vmatprep.subr.mxu0 0.0
    %1060 = vmatpush1.msra.mxu0 0.0
    %1061 = vmatprep.subr.mxu0 0.0
    %1062 = vmatpush1.msra.mxu0 0.0
    %1063 = vmatprep.mubr.f32.mxu0 0.0
    %1064 = vmatmul.mubr.f32.gmra.mrb[0].mxu0 %v997
    %v1065 = vpop.f32.mrb[0].mxu0
    %v1066 = vadd.f32 0.0, %v1065
    %v1067 = vpop.f32.mrb[0].mxu0
    %1068 = vdwg.mxu0
    %v1070 = vsel %vm188, %v828, 0
    %1072 = vmatprep.subr.mxu0 0.0
    %1073 = vmatpush1.msra.mxu0 %v78
    %1074 = vmatprep.subr.mxu0 0.0
    %1075 = vmatpush1.msra.mxu0 %v79
    %1076 = vmatprep.subr.mxu0 0.0
    %1077 = vmatpush1.msra.mxu0 0.0
    %1078 = vmatprep.subr.mxu0 0.0
    %1079 = vmatpush1.msra.mxu0 0.0
    %1080 = vmatprep.subr.mxu0 0.0
    %1081 = vmatpush1.msra.mxu0 0.0
    %1082 = vmatprep.subr.mxu0 0.0
    %1083 = vmatpush1.msra.mxu0 0.0
    %1084 = vmatprep.subr.mxu0 0.0
    %1085 = vmatpush1.msra.mxu0 0.0
    %1086 = vmatprep.subr.mxu0 0.0
    %1087 = vmatpush1.msra.mxu0 0.0
    %1088 = vmatprep.subr.mxu0 0.0
    %1089 = vmatpush1.msra.mxu0 0.0
    %1090 = vmatprep.subr.mxu0 0.0
    %1091 = vmatpush1.msra.mxu0 0.0
    %1092 = vmatprep.subr.mxu0 0.0
    %1093 = vmatpush1.msra.mxu0 0.0
    %1094 = vmatprep.subr.mxu0 0.0
    %1095 = vmatpush1.msra.mxu0 0.0
    %1096 = vmatprep.subr.mxu0 0.0
    %1097 = vmatpush1.msra.mxu0 0.0
    %1098 = vmatprep.subr.mxu0 0.0
    %1099 = vmatpush1.msra.mxu0 0.0
    %1100 = vmatprep.subr.mxu0 0.0
    %1101 = vmatpush1.msra.mxu0 0.0
    %1102 = vmatprep.subr.mxu0 0.0
    %1103 = vmatpush1.msra.mxu0 0.0
    %1104 = vmatprep.subr.mxu0 0.0
    %1105 = vmatpush1.msra.mxu0 0.0
    %1106 = vmatprep.subr.mxu0 0.0
    %1107 = vmatpush1.msra.mxu0 0.0
    %1108 = vmatprep.subr.mxu0 0.0
    %1109 = vmatpush1.msra.mxu0 0.0
    %1110 = vmatprep.subr.mxu0 0.0
    %1111 = vmatpush1.msra.mxu0 0.0
    %1112 = vmatprep.subr.mxu0 0.0
    %1113 = vmatpush1.msra.mxu0 0.0
    %1114 = vmatprep.subr.mxu0 0.0
    %1115 = vmatpush1.msra.mxu0 0.0
    %1116 = vmatprep.subr.mxu0 0.0
    %1117 = vmatpush1.msra.mxu0 0.0
    %1118 = vmatprep.subr.mxu0 0.0
    %1119 = vmatpush1.msra.mxu0 0.0
    %1120 = vmatprep.subr.mxu0 0.0
    %1121 = vmatpush1.msra.mxu0 0.0
    %1122 = vmatprep.subr.mxu0 0.0
    %1123 = vmatpush1.msra.mxu0 0.0
    %1124 = vmatprep.subr.mxu0 0.0
    %1125 = vmatpush1.msra.mxu0 0.0
    %1126 = vmatprep.subr.mxu0 0.0
    %1127 = vmatpush1.msra.mxu0 0.0
    %1128 = vmatprep.subr.mxu0 0.0
    %1129 = vmatpush1.msra.mxu0 0.0
    %1130 = vmatprep.subr.mxu0 0.0
    %1131 = vmatpush1.msra.mxu0 0.0
    %1132 = vmatprep.subr.mxu0 0.0
    %1133 = vmatpush1.msra.mxu0 0.0
    %1134 = vmatprep.subr.mxu0 0.0
    %1135 = vmatpush1.msra.mxu0 0.0
    %1136 = vmatprep.mubr.f32.mxu0 0.0
    %1137 = vmatmul.mubr.f32.gmra.mrb[0].mxu0 %v1070
    %v1138 = vpop.f32.mrb[0].mxu0
    %v1139 = vadd.f32 %v1066, %v1138
    %v1140 = vpop.f32.mrb[0].mxu0
    %1141 = vdwg.mxu0
    %v1142 = vld [vmem:[%s2 + $0x3] sm:$0x1]
    %v1143 = vlaneseq
    %v1144 = vshrl.u32 %v1143, 7
    %v1145 = vsub.s32 0, %v1144
    %v1146 = vrot.slane %v1142, %v1145
    %v1147 = vadd.f32 %v659, %v1146
    %v1148 = vadd.f32 %v1139, %v1146
    %v1149 = vadd.f32 %v1147, %v72
    %v1150 = vadd.f32 %v1148, %v73
    %v1151 = vld [vmem:[%s2 + $0x4] sm:$0x1]
    %v1152 = vld [vmem:[%s2 + $0x5] sm:$0x1]
    %v1153 = vsel %vm34, %v1149, 0.0
    %1154 = vadd.xlane.f32.xlu0 %v1153
    %v1155 = vpop.xlane.xlu0 %1154
    %v1156 = vsel %vm34, %v1150, 0.0
    %1157 = vadd.xlane.f32.xlu0 %v1156
    %v1158 = vpop.xlane.xlu0 %1157
    %v1159 = vmul.f32 %v1155, %v41
    %v1160 = vmul.f32 %v1158, %v41
    %v1161 = vsub.f32 %v1149, %v1159
    %v1162 = vsub.f32 %v1150, %v1160
    %v1163 = vmul.f32 %v1161, %v1161
    %v1164 = vmul.f32 %v1162, %v1162
    %v1165 = vsel %vm34, %v1163, 0.0
    %1166 = vadd.xlane.f32.xlu0 %v1165
    %v1167 = vpop.xlane.xlu0 %1166
    %v1168 = vsel %vm34, %v1164, 0.0
    %1169 = vadd.xlane.f32.xlu0 %v1168
    %v1170 = vpop.xlane.xlu0 %1169
    %v1171 = vmul.f32 %v1167, %v41
    %v1172 = vmul.f32 %v1170, %v41
    %v1173 = vadd.f32 %v1171, 1e-12
    %v1174 = vadd.f32 %v1172, 1e-12
    %v1175 = vrsqrt.pop %v1173
    %v1176 = vrsqrt.pop %v1174
    %v1177 = vmul.f32 %v1161, %v1175
    %v1178 = vmul.f32 %v1162, %v1176
    %v1179 = vlaneseq
    %v1180 = vshrl.u32 %v1179, 7
    %v1181 = vsub.s32 0, %v1180
    %v1182 = vrot.slane %v1151, %v1181
    %v1183 = vmul.f32 %v1177, %v1182
    %v1184 = vmul.f32 %v1178, %v1182
    %v1185 = vlaneseq
    %v1186 = vshrl.u32 %v1185, 7
    %v1187 = vsub.s32 0, %v1186
    %v1188 = vrot.slane %v1152, %v1187
    %v1189 = vadd.f32 %v1183, %v1188
    %v1190 = vadd.f32 %v1184, %v1188
    %v1191 = vld [vmem:[%s2 + $0x6] sm:$0x1]
    %v1192 = vlaneseq
    %v1193 = vshrl.u32 %v1192, 7
    %v1194 = vsub.s32 0, %v1193
    %v1195 = vrot.slane %v1191, %v1194
    %v1197 = vsel %vm34, %v1189, 0
    %v1200 = vsel %vm34, %v1190, 0
    %1202 = vmatprep.subr.mxu0 0.0
    %1203 = vmatpush1.msra.mxu0 %v82
    %1204 = vmatprep.subr.mxu0 0.0
    %1205 = vmatpush1.msra.mxu0 %v83
    %1206 = vmatprep.subr.mxu0 0.0
    %1207 = vmatpush1.msra.mxu0 %v84
    %1208 = vmatprep.subr.mxu0 0.0
    %1209 = vmatpush1.msra.mxu0 %v85
    %1210 = vmatprep.subr.mxu0 0.0
    %1211 = vmatpush1.msra.mxu0 0.0
    %1212 = vmatprep.subr.mxu0 0.0
    %1213 = vmatpush1.msra.mxu0 0.0
    %1214 = vmatprep.subr.mxu0 0.0
    %1215 = vmatpush1.msra.mxu0 0.0
    %1216 = vmatprep.subr.mxu0 0.0
    %1217 = vmatpush1.msra.mxu0 0.0
    %1218 = vmatprep.subr.mxu0 0.0
    %1219 = vmatpush1.msra.mxu0 0.0
    %1220 = vmatprep.subr.mxu0 0.0
    %1221 = vmatpush1.msra.mxu0 0.0
    %1222 = vmatprep.subr.mxu0 0.0
    %1223 = vmatpush1.msra.mxu0 0.0
    %1224 = vmatprep.subr.mxu0 0.0
    %1225 = vmatpush1.msra.mxu0 0.0
    %1226 = vmatprep.subr.mxu0 0.0
    %1227 = vmatpush1.msra.mxu0 0.0
    %1228 = vmatprep.subr.mxu0 0.0
    %1229 = vmatpush1.msra.mxu0 0.0
    %1230 = vmatprep.subr.mxu0 0.0
    %1231 = vmatpush1.msra.mxu0 0.0
    %1232 = vmatprep.subr.mxu0 0.0
    %1233 = vmatpush1.msra.mxu0 0.0
    %1234 = vmatprep.subr.mxu0 0.0
    %1235 = vmatpush1.msra.mxu0 0.0
    %1236 = vmatprep.subr.mxu0 0.0
    %1237 = vmatpush1.msra.mxu0 0.0
    %1238 = vmatprep.subr.mxu0 0.0
    %1239 = vmatpush1.msra.mxu0 0.0
    %1240 = vmatprep.subr.mxu0 0.0
    %1241 = vmatpush1.msra.mxu0 0.0
    %1242 = vmatprep.subr.mxu0 0.0
    %1243 = vmatpush1.msra.mxu0 0.0
    %1244 = vmatprep.subr.mxu0 0.0
    %1245 = vmatpush1.msra.mxu0 0.0
    %1246 = vmatprep.subr.mxu0 0.0
    %1247 = vmatpush1.msra.mxu0 0.0
    %1248 = vmatprep.subr.mxu0 0.0
    %1249 = vmatpush1.msra.mxu0 0.0
    %1250 = vmatprep.subr.mxu0 0.0
    %1251 = vmatpush1.msra.mxu0 0.0
    %1252 = vmatprep.subr.mxu0 0.0
    %1253 = vmatpush1.msra.mxu0 0.0
    %1254 = vmatprep.subr.mxu0 0.0
    %1255 = vmatpush1.msra.mxu0 0.0
    %1256 = vmatprep.subr.mxu0 0.0
    %1257 = vmatpush1.msra.mxu0 0.0
    %1258 = vmatprep.subr.mxu0 0.0
    %1259 = vmatpush1.msra.mxu0 0.0
    %1260 = vmatprep.subr.mxu0 0.0
    %1261 = vmatpush1.msra.mxu0 0.0
    %1262 = vmatprep.subr.mxu0 0.0
    %1263 = vmatpush1.msra.mxu0 0.0
    %1264 = vmatprep.subr.mxu0 0.0
    %1265 = vmatpush1.msra.mxu0 0.0
    %1266 = vmatprep.mubr.f32.mxu0 0.0
    %1267 = vmatmul.mubr.f32.gmra.mrb[0].mxu0 %v1197
    %v1268 = vpop.f32.mrb[0].mxu0
    %v1269 = vadd.f32 %v1195, %v1268
    %v1270 = vpop.f32.mrb[0].mxu0
    %1271 = vmatprep.mubr.f32.mxu0 0.0
    %1272 = vmatmul.mubr.f32.gmra.mrb[0].mxu0 %v1200
    %v1273 = vpop.f32.mrb[0].mxu0
    %v1274 = vadd.f32 %v1195, %v1273
    %v1275 = vpop.f32.mrb[0].mxu0
    %1276 = vdwg.mxu0
    %v1277 = vmul.f32 %v1269, 0.5
    %v1278 = vmul.f32 %v1274, 0.5
    %v1279 = vmul.f32 %v1269, 0.70710677
    %v1280 = vmul.f32 %v1274, 0.70710677
    %v1281 = verf.f32.pop %v1279
    %v1282 = verf.f32.pop %v1280
    %v1283 = vadd.f32 %v1281, 1.0
    %v1284 = vadd.f32 %v1282, 1.0
    %v1285 = vmul.f32 %v1277, %v1283
    %v1286 = vmul.f32 %v1278, %v1284
    %v1287 = vld [vmem:[%s2 + $0x7] sm:$0x1]
    %v1288 = vlaneseq
    %v1289 = vshrl.u32 %v1288, 7
    %v1290 = vsub.s32 0, %v1289
    %v1291 = vrot.slane %v1287, %v1290
    %vm1292 = vcmask 523264
    %v1294 = vsel %vm1292, %v1285, 0
    %v1297 = vsel %vm1292, %v1286, 0
    %1299 = vmatprep.subr.mxu0 0.0
    %1300 = vmatpush1.msra.mxu0 %v86
    %1301 = vmatprep.subr.mxu0 0.0
    %1302 = vmatpush1.msra.mxu0 %v87
    %1303 = vmatprep.subr.mxu0 0.0
    %1304 = vmatpush1.msra.mxu0 %v88
    %1305 = vmatprep.subr.mxu0 0.0
    %1306 = vmatpush1.msra.mxu0 %v89
    %1307 = vmatprep.subr.mxu0 0.0
    %1308 = vmatpush1.msra.mxu0 %v90
    %1309 = vmatprep.subr.mxu0 0.0
    %1310 = vmatpush1.msra.mxu0 %v91
    %1311 = vmatprep.subr.mxu0 0.0
    %1312 = vmatpush1.msra.mxu0 %v92
    %1313 = vmatprep.subr.mxu0 0.0
    %1314 = vmatpush1.msra.mxu0 %v93
    %1315 = vmatprep.subr.mxu0 0.0
    %1316 = vmatpush1.msra.mxu0 0.0
    %1317 = vmatprep.subr.mxu0 0.0
    %1318 = vmatpush1.msra.mxu0 0.0
    %1319 = vmatprep.subr.mxu0 0.0
    %1320 = vmatpush1.msra.mxu0 0.0
    %1321 = vmatprep.subr.mxu0 0.0
    %1322 = vmatpush1.msra.mxu0 0.0
    %1323 = vmatprep.subr.mxu0 0.0
    %1324 = vmatpush1.msra.mxu0 0.0
    %1325 = vmatprep.subr.mxu0 0.0
    %1326 = vmatpush1.msra.mxu0 0.0
    %1327 = vmatprep.subr.mxu0 0.0
    %1328 = vmatpush1.msra.mxu0 0.0
    %1329 = vmatprep.subr.mxu0 0.0
    %1330 = vmatpush1.msra.mxu0 0.0
    %1331 = vmatprep.subr.mxu0 0.0
    %1332 = vmatpush1.msra.mxu0 0.0
    %1333 = vmatprep.subr.mxu0 0.0
    %1334 = vmatpush1.msra.mxu0 0.0
    %1335 = vmatprep.subr.mxu0 0.0
    %1336 = vmatpush1.msra.mxu0 0.0
    %1337 = vmatprep.subr.mxu0 0.0
    %1338 = vmatpush1.msra.mxu0 0.0
    %1339 = vmatprep.subr.mxu0 0.0
    %1340 = vmatpush1.msra.mxu0 0.0
    %1341 = vmatprep.subr.mxu0 0.0
    %1342 = vmatpush1.msra.mxu0 0.0
    %1343 = vmatprep.subr.mxu0 0.0
    %1344 = vmatpush1.msra.mxu0 0.0
    %1345 = vmatprep.subr.mxu0 0.0
    %1346 = vmatpush1.msra.mxu0 0.0
    %1347 = vmatprep.subr.mxu0 0.0
    %1348 = vmatpush1.msra.mxu0 0.0
    %1349 = vmatprep.subr.mxu0 0.0
    %1350 = vmatpush1.msra.mxu0 0.0
    %1351 = vmatprep.subr.mxu0 0.0
    %1352 = vmatpush1.msra.mxu0 0.0
    %1353 = vmatprep.subr.mxu0 0.0
    %1354 = vmatpush1.msra.mxu0 0.0
    %1355 = vmatprep.subr.mxu0 0.0
    %1356 = vmatpush1.msra.mxu0 0.0
    %1357 = vmatprep.subr.mxu0 0.0
    %1358 = vmatpush1.msra.mxu0 0.0
    %1359 = vmatprep.subr.mxu0 0.0
    %1360 = vmatpush1.msra.mxu0 0.0
    %1361 = vmatprep.subr.mxu0 0.0
    %1362 = vmatpush1.msra.mxu0 0.0
    %1363 = vmatprep.mubr.f32.mxu0 0.0
    %1364 = vmatmul.mubr.f32.gmra.mrb[0].mxu0 %v1294
    %v1365 = vpop.f32.mrb[0].mxu0
    %v1366 = vadd.f32 %v1291, %v1365
    %v1367 = vpop.f32.mrb[0].mxu0
    %1368 = vmatprep.mubr.f32.mxu0 0.0
    %1369 = vmatmul.mubr.f32.gmra.mrb[0].mxu0 %v1297
    %v1370 = vpop.f32.mrb[0].mxu0
    %v1371 = vadd.f32 %v1291, %v1370
    %v1372 = vpop.f32.mrb[0].mxu0
    %1373 = vdwg.mxu0
    %v1374 = vadd.f32 %v1366, %v1189
    %v1375 = vadd.f32 %v1371, %v1190
    %v1376 = vld [vmem:[%s2 + $0x8] sm:$0x1]
    %v1377 = vld [vmem:[%s2 + $0x9] sm:$0x1]
    %v1378 = vsel %vm34, %v1374, 0.0
    %1379 = vadd.xlane.f32.xlu0 %v1378
    %v1380 = vpop.xlane.xlu0 %1379
    %v1381 = vsel %vm34, %v1375, 0.0
    %1382 = vadd.xlane.f32.xlu0 %v1381
    %v1383 = vpop.xlane.xlu0 %1382
    %v1384 = vmul.f32 %v1380, %v41
    %v1385 = vmul.f32 %v1383, %v41
    %v1386 = vsub.f32 %v1374, %v1384
    %v1387 = vsub.f32 %v1375, %v1385
    %v1388 = vmul.f32 %v1386, %v1386
    %v1389 = vmul.f32 %v1387, %v1387
    %v1390 = vsel %vm34, %v1388, 0.0
    %1391 = vadd.xlane.f32.xlu0 %v1390
    %v1392 = vpop.xlane.xlu0 %1391
    %v1393 = vsel %vm34, %v1389, 0.0
    %1394 = vadd.xlane.f32.xlu0 %v1393
    %v1395 = vpop.xlane.xlu0 %1394
    %v1396 = vmul.f32 %v1392, %v41
    %v1397 = vmul.f32 %v1395, %v41
    %v1398 = vadd.f32 %v1396, 1e-12
    %v1399 = vadd.f32 %v1397, 1e-12
    %v1400 = vrsqrt.pop %v1398
    %v1401 = vrsqrt.pop %v1399
    %v1402 = vmul.f32 %v1386, %v1400
    %v1403 = vmul.f32 %v1387, %v1401
    %v1404 = vlaneseq
    %v1405 = vshrl.u32 %v1404, 7
    %v1406 = vsub.s32 0, %v1405
    %v1407 = vrot.slane %v1376, %v1406
    %v1408 = vmul.f32 %v1402, %v1407
    %v1409 = vmul.f32 %v1403, %v1407
    %v1410 = vlaneseq
    %v1411 = vshrl.u32 %v1410, 7
    %v1412 = vsub.s32 0, %v1411
    %v1413 = vrot.slane %v1377, %v1412
    %v1414 = vadd.f32 %v1408, %v1413
    %v1415 = vadd.f32 %v1409, %v1413
    %s1416 = scalar_lea.vmem %s3, 32
    %v1417 = vld [vmem:[%s1416] sm:$0xff]
    %v1418 = vld [vmem:[%s1416 + $0x8] sm:$0xff]
    %v1419 = vld [vmem:[%s1416 + $0x10] sm:$0xff]
    %v1420 = vld [vmem:[%s1416 + $0x18] sm:$0xff]
    %s1421 = scalar_lea.vmem %s4, 32
    %v1422 = vld [vmem:[%s1421] sm:$0xff]
    %v1423 = vld [vmem:[%s1421 + $0x8] sm:$0xff]
    %v1424 = vld [vmem:[%s1421 + $0x10] sm:$0xff]
    %v1425 = vld [vmem:[%s1421 + $0x18] sm:$0xff]
    %s1426 = scalar_lea.vmem %s5, 32
    %v1427 = vld [vmem:[%s1426] sm:$0xff]
    %v1428 = vld [vmem:[%s1426 + $0x8] sm:$0xff]
    %v1429 = vld [vmem:[%s1426 + $0x10] sm:$0xff]
    %v1430 = vld [vmem:[%s1426 + $0x18] sm:$0xff]
    %s1431 = scalar_lea.vmem %s6, 64
    %v1432 = vld [vmem:[%s1431] sm:$0xff]
    %v1433 = vld [vmem:[%s1431 + $0x8] sm:$0xff]
    %v1434 = vld [vmem:[%s1431 + $0x10] sm:$0xff]
    %v1435 = vld [vmem:[%s1431 + $0x18] sm:$0xff]
    %v1436 = vld [vmem:[%s1431 + $0x20] sm:$0xff]
    %v1437 = vld [vmem:[%s1431 + $0x28] sm:$0xff]
    %v1438 = vld [vmem:[%s1431 + $0x30] sm:$0xff]
    %v1439 = vld [vmem:[%s1431 + $0x38] sm:$0xff]
    %v1440 = vld [vmem:[%s2 + $0xa] sm:$0x1]
    %v1441 = vlaneseq
    %v1442 = vshrl.u32 %v1441, 7
    %v1443 = vsub.s32 0, %v1442
    %v1444 = vrot.slane %v1440, %v1443
    %v1446 = vsel %vm34, %v1414, 0
    %v1449 = vsel %vm34, %v1415, 0
    %1451 = vmatprep.subr.mxu0 0.0
    %1452 = vmatpush1.msra.mxu0 %v1417
    %1453 = vmatprep.subr.mxu0 0.0
    %1454 = vmatpush1.msra.mxu0 %v1418
    %1455 = vmatprep.subr.mxu0 0.0
    %1456 = vmatpush1.msra.mxu0 %v1419
    %1457 = vmatprep.subr.mxu0 0.0
    %1458 = vmatpush1.msra.mxu0 %v1420
    %1459 = vmatprep.subr.mxu0 0.0
    %1460 = vmatpush1.msra.mxu0 0.0
    %1461 = vmatprep.subr.mxu0 0.0
    %1462 = vmatpush1.msra.mxu0 0.0
    %1463 = vmatprep.subr.mxu0 0.0
    %1464 = vmatpush1.msra.mxu0 0.0
    %1465 = vmatprep.subr.mxu0 0.0
    %1466 = vmatpush1.msra.mxu0 0.0
    %1467 = vmatprep.subr.mxu0 0.0
    %1468 = vmatpush1.msra.mxu0 0.0
    %1469 = vmatprep.subr.mxu0 0.0
    %1470 = vmatpush1.msra.mxu0 0.0
    %1471 = vmatprep.subr.mxu0 0.0
    %1472 = vmatpush1.msra.mxu0 0.0
    %1473 = vmatprep.subr.mxu0 0.0
    %1474 = vmatpush1.msra.mxu0 0.0
    %1475 = vmatprep.subr.mxu0 0.0
    %1476 = vmatpush1.msra.mxu0 0.0
    %1477 = vmatprep.subr.mxu0 0.0
    %1478 = vmatpush1.msra.mxu0 0.0
    %1479 = vmatprep.subr.mxu0 0.0
    %1480 = vmatpush1.msra.mxu0 0.0
    %1481 = vmatprep.subr.mxu0 0.0
    %1482 = vmatpush1.msra.mxu0 0.0
    %1483 = vmatprep.subr.mxu0 0.0
    %1484 = vmatpush1.msra.mxu0 0.0
    %1485 = vmatprep.subr.mxu0 0.0
    %1486 = vmatpush1.msra.mxu0 0.0
    %1487 = vmatprep.subr.mxu0 0.0
    %1488 = vmatpush1.msra.mxu0 0.0
    %1489 = vmatprep.subr.mxu0 0.0
    %1490 = vmatpush1.msra.mxu0 0.0
    %1491 = vmatprep.subr.mxu0 0.0
    %1492 = vmatpush1.msra.mxu0 0.0
    %1493 = vmatprep.subr.mxu0 0.0
    %1494 = vmatpush1.msra.mxu0 0.0
    %1495 = vmatprep.subr.mxu0 0.0
    %1496 = vmatpush1.msra.mxu0 0.0
    %1497 = vmatprep.subr.mxu0 0.0
    %1498 = vmatpush1.msra.mxu0 0.0
    %1499 = vmatprep.subr.mxu0 0.0
    %1500 = vmatpush1.msra.mxu0 0.0
    %1501 = vmatprep.subr.mxu0 0.0
    %1502 = vmatpush1.msra.mxu0 0.0
    %1503 = vmatprep.subr.mxu0 0.0
    %1504 = vmatpush1.msra.mxu0 0.0
    %1505 = vmatprep.subr.mxu0 0.0
    %1506 = vmatpush1.msra.mxu0 0.0
    %1507 = vmatprep.subr.mxu0 0.0
    %1508 = vmatpush1.msra.mxu0 0.0
    %1509 = vmatprep.subr.mxu0 0.0
    %1510 = vmatpush1.msra.mxu0 0.0
    %1511 = vmatprep.subr.mxu0 0.0
    %1512 = vmatpush1.msra.mxu0 0.0
    %1513 = vmatprep.subr.mxu0 0.0
    %1514 = vmatpush1.msra.mxu0 0.0
    %1515 = vmatprep.mubr.f32.mxu0 0.0
    %1516 = vmatmul.mubr.f32.gmra.mrb[0].mxu0 %v1446
    %v1517 = vpop.f32.mrb[0].mxu0
    %v1518 = vadd.f32 %v1444, %v1517
    %v1519 = vpop.f32.mrb[0].mxu0
    %1520 = vmatprep.mubr.f32.mxu0 0.0
    %1521 = vmatmul.mubr.f32.gmra.mrb[0].mxu0 %v1449
    %v1522 = vpop.f32.mrb[0].mxu0
    %v1523 = vadd.f32 %v1444, %v1522
    %v1524 = vpop.f32.mrb[0].mxu0
    %1525 = vdwg.mxu0
    %v1526 = vld [vmem:[%s1] sm:$0x1]
    %v1527 = vlaneseq
    %v1528 = vshrl.u32 %v1527, 7
    %v1529 = vsub.s32 0, %v1528
    %v1530 = vrot.slane %v1526, %v1529
    %1532 = vrot.lane.b32.xlu0 %v1518, 96
    %v1533 = vpop.permute.xlu0 %1532
    %v1534 = vsel %vm188, %v1518, 0
    %v1536 = vsel %vm188, %v1533, 0
    %1538 = vmatprep.subr.mxu0 0.0
    %1539 = vmatpush1.xpose.msra.mxu0 %v1536
    %1540 = vmatprep.subr.mxu0 0.0
    %1541 = vmatpush1.xpose.msra.mxu0 0.0
    %1542 = vmatprep.subr.mxu0 0.0
    %1543 = vmatpush1.xpose.msra.mxu0 0.0
    %1544 = vmatprep.subr.mxu0 0.0
    %1545 = vmatpush1.xpose.msra.mxu0 0.0
    %1546 = vmatprep.subr.mxu0 0.0
    %1547 = vmatpush1.xpose.msra.mxu0 0.0
    %1548 = vmatprep.subr.mxu0 0.0
    %1549 = vmatpush1.xpose.msra.mxu0 0.0
    %1550 = vmatprep.subr.mxu0 0.0
    %1551 = vmatpush1.xpose.msra.mxu0 0.0
    %1552 = vmatprep.subr.mxu0 0.0
    %1553 = vmatpush1.xpose.msra.mxu0 0.0
    %1554 = vmatprep.subr.mxu0 0.0
    %1555 = vmatpush1.xpose.msra.mxu0 0.0
    %1556 = vmatprep.subr.mxu0 0.0
    %1557 = vmatpush1.xpose.msra.mxu0 0.0
    %1558 = vmatprep.subr.mxu0 0.0
    %1559 = vmatpush1.xpose.msra.mxu0 0.0
    %1560 = vmatprep.subr.mxu0 0.0
    %1561 = vmatpush1.xpose.msra.mxu0 0.0
    %1562 = vmatprep.subr.mxu0 0.0
    %1563 = vmatpush1.xpose.msra.mxu0 0.0
    %1564 = vmatprep.subr.mxu0 0.0
    %1565 = vmatpush1.xpose.msra.mxu0 0.0
    %1566 = vmatprep.subr.mxu0 0.0
    %1567 = vmatpush1.xpose.msra.mxu0 0.0
    %1568 = vmatprep.subr.mxu0 0.0
    %1569 = vmatpush1.xpose.msra.mxu0 0.0
    %1570 = vmatprep.subr.mxu0 0.0
    %1571 = vmatpush1.xpose.msra.mxu0 0.0
    %1572 = vmatprep.subr.mxu0 0.0
    %1573 = vmatpush1.xpose.msra.mxu0 0.0
    %1574 = vmatprep.subr.mxu0 0.0
    %1575 = vmatpush1.xpose.msra.mxu0 0.0
    %1576 = vmatprep.subr.mxu0 0.0
    %1577 = vmatpush1.xpose.msra.mxu0 0.0
    %1578 = vmatprep.subr.mxu0 0.0
    %1579 = vmatpush1.xpose.msra.mxu0 0.0
    %1580 = vmatprep.subr.mxu0 0.0
    %1581 = vmatpush1.xpose.msra.mxu0 0.0
    %1582 = vmatprep.subr.mxu0 0.0
    %1583 = vmatpush1.xpose.msra.mxu0 0.0
    %1584 = vmatprep.subr.mxu0 0.0
    %1585 = vmatpush1.xpose.msra.mxu0 0.0
    %1586 = vmatprep.subr.mxu0 0.0
    %1587 = vmatpush1.xpose.msra.mxu0 0.0
    %1588 = vmatprep.subr.mxu0 0.0
    %1589 = vmatpush1.xpose.msra.mxu0 0.0
    %1590 = vmatprep.subr.mxu0 0.0
    %1591 = vmatpush1.xpose.msra.mxu0 0.0
    %1592 = vmatprep.subr.mxu0 0.0
    %1593 = vmatpush1.xpose.msra.mxu0 0.0
    %1594 = vmatprep.subr.mxu0 0.0
    %1595 = vmatpush1.xpose.msra.mxu0 0.0
    %1596 = vmatprep.subr.mxu0 0.0
    %1597 = vmatpush1.xpose.msra.mxu0 0.0
    %1598 = vmatprep.subr.mxu0 0.0
    %1599 = vmatpush1.xpose.msra.mxu0 0.0
    %1600 = vmatprep.subr.mxu0 0.0
    %1601 = vmatpush1.xpose.msra.mxu0 0.0
    %1602 = vmatprep.mubr.f32.mxu0 0.0
    %1603 = vmatmul.mubr.f32.gmra.mrb[0].mxu0 %v1534
    %v1604 = vpop.f32.mrb[0].mxu0
    %v1605 = vadd.f32 %v1530, %v1604
    %v1606 = vpop.f32.mrb[0].mxu0
    %1607 = vdwg.mxu0
    %v1608 = vsel %vm263, %v1605, -inf
    %1609 = vmax.xlane.f32.xlu0 %v1608
    %v1610 = vpop.xlane.xlu0 %1609
    %v1611 = vsub.f32 %v1605, %v1610
    %v1612 = vmul.f32 %v1611, 1.442695
    %v1613 = vpow.pop %v1612
    %v1614 = vsel %vm263, %v1613, 0.0
    %1615 = vadd.xlane.f32.xlu0 %v1614
    %v1616 = vpop.xlane.xlu0 %1615
    %v1617 = vrcp.pop %v1616
    %v1618 = vmul.f32 %v1613, %v1617
    %1619 = vrot.lane.b32.xlu0 %v1518, 64
    %v1620 = vpop.permute.xlu0 %1619
    %v1623 = vsel %vm263, %v1618, 0
    %1625 = vmatprep.subr.mxu0 0.0
    %1626 = vmatpush1.msra.mxu0 %v1620
    %1627 = vmatprep.subr.mxu0 0.0
    %1628 = vmatpush1.msra.mxu0 0.0
    %1629 = vmatprep.subr.mxu0 0.0
    %1630 = vmatpush1.msra.mxu0 0.0
    %1631 = vmatprep.subr.mxu0 0.0
    %1632 = vmatpush1.msra.mxu0 0.0
    %1633 = vmatprep.subr.mxu0 0.0
    %1634 = vmatpush1.msra.mxu0 0.0
    %1635 = vmatprep.subr.mxu0 0.0
    %1636 = vmatpush1.msra.mxu0 0.0
    %1637 = vmatprep.subr.mxu0 0.0
    %1638 = vmatpush1.msra.mxu0 0.0
    %1639 = vmatprep.subr.mxu0 0.0
    %1640 = vmatpush1.msra.mxu0 0.0
    %1641 = vmatprep.subr.mxu0 0.0
    %1642 = vmatpush1.msra.mxu0 0.0
    %1643 = vmatprep.subr.mxu0 0.0
    %1644 = vmatpush1.msra.mxu0 0.0
    %1645 = vmatprep.subr.mxu0 0.0
    %1646 = vmatpush1.msra.mxu0 0.0
    %1647 = vmatprep.subr.mxu0 0.0
    %1648 = vmatpush1.msra.mxu0 0.0
    %1649 = vmatprep.subr.mxu0 0.0
    %1650 = vmatpush1.msra.mxu0 0.0
    %1651 = vmatprep.subr.mxu0 0.0
    %1652 = vmatpush1.msra.mxu0 0.0
    %1653 = vmatprep.subr.mxu0 0.0
    %1654 = vmatpush1.msra.mxu0 0.0
    %1655 = vmatprep.subr.mxu0 0.0
    %1656 = vmatpush1.msra.mxu0 0.0
    %1657 = vmatprep.subr.mxu0 0.0
    %1658 = vmatpush1.msra.mxu0 0.0
    %1659 = vmatprep.subr.mxu0 0.0
    %1660 = vmatpush1.msra.mxu0 0.0
    %1661 = vmatprep.subr.mxu0 0.0
    %1662 = vmatpush1.msra.mxu0 0.0
    %1663 = vmatprep.subr.mxu0 0.0
    %1664 = vmatpush1.msra.mxu0 0.0
    %1665 = vmatprep.subr.mxu0 0.0
    %1666 = vmatpush1.msra.mxu0 0.0
    %1667 = vmatprep.subr.mxu0 0.0
    %1668 = vmatpush1.msra.mxu0 0.0
    %1669 = vmatprep.subr.mxu0 0.0
    %1670 = vmatpush1.msra.mxu0 0.0
    %1671 = vmatprep.subr.mxu0 0.0
    %1672 = vmatpush1.msra.mxu0 0.0
    %1673 = vmatprep.subr.mxu0 0.0
    %1674 = vmatpush1.msra.mxu0 0.0
    %1675 = vmatprep.subr.mxu0 0.0
    %1676 = vmatpush1.msra.mxu0 0.0
    %1677 = vmatprep.subr.mxu0 0.0
    %1678 = vmatpush1.msra.mxu0 0.0
    %1679 = vmatprep.subr.mxu0 0.0
    %1680 = vmatpush1.msra.mxu0 0.0
    %1681 = vmatprep.subr.mxu0 0.0
    %1682 = vmatpush1.msra.mxu0 0.0
    %1683 = vmatprep.subr.mxu0 0.0
    %1684 = vmatpush1.msra.mxu0 0.0
    %1685 = vmatprep.subr.mxu0 0.0
    %1686 = vmatpush1.msra.mxu0 0.0
    %1687 = vmatprep.subr.mxu0 0.0
    %1688 = vmatpush1.msra.mxu0 0.0
    %1689 = vmatprep.mubr.f32.mxu0 0.0
    %1690 = vmatmul.mubr.f32.gmra.mrb[0].mxu0 %v1623
    %v1691 = vpop.f32.mrb[0].mxu0
    %v1692 = vadd.f32 0.0, %v1691
    %v1693 = vpop.f32.mrb[0].mxu0
    %1694 = vdwg.mxu0
    %1695 = vrot.lane.b32.xlu0 %v1518, 112
    %v1696 = vpop.permute.xlu0 %1695
    %1697 = vrot.lane.b32.xlu0 %v1518, 80
    %v1698 = vpop.permute.xlu0 %1697
    %v1699 = vsel %vm188, %v1696, 0
    %v1701 = vsel %vm188, %v1698, 0
    %1703 = vmatprep.subr.mxu0 0.0
    %1704 = vmatpush1.xpose.msra.mxu0 %v1701
    %1705 = vmatprep.subr.mxu0 0.0
    %1706 = vmatpush1.xpose.msra.mxu0 0.0
    %1707 = vmatprep.subr.mxu0 0.0
    %1708 = vmatpush1.xpose.msra.mxu0 0.0
    %1709 = vmatprep.subr.mxu0 0.0
    %1710 = vmatpush1.xpose.msra.mxu0 0.0
    %1711 = vmatprep.subr.mxu0 0.0
    %1712 = vmatpush1.xpose.msra.mxu0 0.0
    %1713 = vmatprep.subr.mxu0 0.0
    %1714 = vmatpush1.xpose.msra.mxu0 0.0
    %1715 = vmatprep.subr.mxu0 0.0
    %1716 = vmatpush1.xpose.msra.mxu0 0.0
    %1717 = vmatprep.subr.mxu0 0.0
    %1718 = vmatpush1.xpose.msra.mxu0 0.0
    %1719 = vmatprep.subr.mxu0 0.0
    %1720 = vmatpush1.xpose.msra.mxu0 0.0
    %1721 = vmatprep.subr.mxu0 0.0
    %1722 = vmatpush1.xpose.msra.mxu0 0.0
    %1723 = vmatprep.subr.mxu0 0.0
    %1724 = vmatpush1.xpose.msra.mxu0 0.0
    %1725 = vmatprep.subr.mxu0 0.0
    %1726 = vmatpush1.xpose.msra.mxu0 0.0
    %1727 = vmatprep.subr.mxu0 0.0
    %1728 = vmatpush1.xpose.msra.mxu0 0.0
    %1729 = vmatprep.subr.mxu0 0.0
    %1730 = vmatpush1.xpose.msra.mxu0 0.0
    %1731 = vmatprep.subr.mxu0 0.0
    %1732 = vmatpush1.xpose.msra.mxu0 0.0
    %1733 = vmatprep.subr.mxu0 0.0
    %1734 = vmatpush1.xpose.msra.mxu0 0.0
    %1735 = vmatprep.subr.mxu0 0.0
    %1736 = vmatpush1.xpose.msra.mxu0 0.0
    %1737 = vmatprep.subr.mxu0 0.0
    %1738 = vmatpush1.xpose.msra.mxu0 0.0
    %1739 = vmatprep.subr.mxu0 0.0
    %1740 = vmatpush1.xpose.msra.mxu0 0.0
    %1741 = vmatprep.subr.mxu0 0.0
    %1742 = vmatpush1.xpose.msra.mxu0 0.0
    %1743 = vmatprep.subr.mxu0 0.0
    %1744 = vmatpush1.xpose.msra.mxu0 0.0
    %1745 = vmatprep.subr.mxu0 0.0
    %1746 = vmatpush1.xpose.msra.mxu0 0.0
    %1747 = vmatprep.subr.mxu0 0.0
    %1748 = vmatpush1.xpose.msra.mxu0 0.0
    %1749 = vmatprep.subr.mxu0 0.0
    %1750 = vmatpush1.xpose.msra.mxu0 0.0
    %1751 = vmatprep.subr.mxu0 0.0
    %1752 = vmatpush1.xpose.msra.mxu0 0.0
    %1753 = vmatprep.subr.mxu0 0.0
    %1754 = vmatpush1.xpose.msra.mxu0 0.0
    %1755 = vmatprep.subr.mxu0 0.0
    %1756 = vmatpush1.xpose.msra.mxu0 0.0
    %1757 = vmatprep.subr.mxu0 0.0
    %1758 = vmatpush1.xpose.msra.mxu0 0.0
    %1759 = vmatprep.subr.mxu0 0.0
    %1760 = vmatpush1.xpose.msra.mxu0 0.0
    %1761 = vmatprep.subr.mxu0 0.0
    %1762 = vmatpush1.xpose.msra.mxu0 0.0
    %1763 = vmatprep.subr.mxu0 0.0
    %1764 = vmatpush1.xpose.msra.mxu0 0.0
    %1765 = vmatprep.subr.mxu0 0.0
    %1766 = vmatpush1.xpose.msra.mxu0 0.0
    %1767 = vmatprep.mubr.f32.mxu0 0.0
    %1768 = vmatmul.mubr.f32.gmra.mrb[0].mxu0 %v1699
    %v1769 = vpop.f32.mrb[0].mxu0
    %v1770 = vadd.f32 %v1530, %v1769
    %v1771 = vpop.f32.mrb[0].mxu0
    %1772 = vdwg.mxu0
    %v1773 = vsel %vm263, %v1770, -inf
    %1774 = vmax.xlane.f32.xlu0 %v1773
    %v1775 = vpop.xlane.xlu0 %1774
    %v1776 = vsub.f32 %v1770, %v1775
    %v1777 = vmul.f32 %v1776, 1.442695
    %v1778 = vpow.pop %v1777
    %v1779 = vsel %vm263, %v1778, 0.0
    %1780 = vadd.xlane.f32.xlu0 %v1779
    %v1781 = vpop.xlane.xlu0 %1780
    %v1782 = vrcp.pop %v1781
    %v1783 = vmul.f32 %v1778, %v1782
    %1784 = vrot.lane.b32.xlu0 %v1518, 48
    %v1785 = vpop.permute.xlu0 %1784
    %v1788 = vsel %vm263, %v1783, 0
    %1790 = vmatprep.subr.mxu0 0.0
    %1791 = vmatpush1.msra.mxu0 %v1785
    %1792 = vmatprep.subr.mxu0 0.0
    %1793 = vmatpush1.msra.mxu0 0.0
    %1794 = vmatprep.subr.mxu0 0.0
    %1795 = vmatpush1.msra.mxu0 0.0
    %1796 = vmatprep.subr.mxu0 0.0
    %1797 = vmatpush1.msra.mxu0 0.0
    %1798 = vmatprep.subr.mxu0 0.0
    %1799 = vmatpush1.msra.mxu0 0.0
    %1800 = vmatprep.subr.mxu0 0.0
    %1801 = vmatpush1.msra.mxu0 0.0
    %1802 = vmatprep.subr.mxu0 0.0
    %1803 = vmatpush1.msra.mxu0 0.0
    %1804 = vmatprep.subr.mxu0 0.0
    %1805 = vmatpush1.msra.mxu0 0.0
    %1806 = vmatprep.subr.mxu0 0.0
    %1807 = vmatpush1.msra.mxu0 0.0
    %1808 = vmatprep.subr.mxu0 0.0
    %1809 = vmatpush1.msra.mxu0 0.0
    %1810 = vmatprep.subr.mxu0 0.0
    %1811 = vmatpush1.msra.mxu0 0.0
    %1812 = vmatprep.subr.mxu0 0.0
    %1813 = vmatpush1.msra.mxu0 0.0
    %1814 = vmatprep.subr.mxu0 0.0
    %1815 = vmatpush1.msra.mxu0 0.0
    %1816 = vmatprep.subr.mxu0 0.0
    %1817 = vmatpush1.msra.mxu0 0.0
    %1818 = vmatprep.subr.mxu0 0.0
    %1819 = vmatpush1.msra.mxu0 0.0
    %1820 = vmatprep.subr.mxu0 0.0
    %1821 = vmatpush1.msra.mxu0 0.0
    %1822 = vmatprep.subr.mxu0 0.0
    %1823 = vmatpush1.msra.mxu0 0.0
    %1824 = vmatprep.subr.mxu0 0.0
    %1825 = vmatpush1.msra.mxu0 0.0
    %1826 = vmatprep.subr.mxu0 0.0
    %1827 = vmatpush1.msra.mxu0 0.0
    %1828 = vmatprep.subr.mxu0 0.0
    %1829 = vmatpush1.msra.mxu0 0.0
    %1830 = vmatprep.subr.mxu0 0.0
    %1831 = vmatpush1.msra.mxu0 0.0
    %1832 = vmatprep.subr.mxu0 0.0
    %1833 = vmatpush1.msra.mxu0 0.0
    %1834 = vmatprep.subr.mxu0 0.0
    %1835 = vmatpush1.msra.mxu0 0.0
    %1836 = vmatprep.subr.mxu0 0.0
    %1837 = vmatpush1.msra.mxu0 0.0
    %1838 = vmatprep.subr.mxu0 0.0
    %1839 = vmatpush1.msra.mxu0 0.0
    %1840 = vmatprep.subr.mxu0 0.0
    %1841 = vmatpush1.msra.mxu0 0.0
    %1842 = vmatprep.subr.mxu0 0.0
    %1843 = vmatpush1.msra.mxu0 0.0
    %1844 = vmatprep.subr.mxu0 0.0
    %1845 = vmatpush1.msra.mxu0 0.0
    %1846 = vmatprep.subr.mxu0 0.0
    %1847 = vmatpush1.msra.mxu0 0.0
    %1848 = vmatprep.subr.mxu0 0.0
    %1849 = vmatpush1.msra.mxu0 0.0
    %1850 = vmatprep.subr.mxu0 0.0
    %1851 = vmatpush1.msra.mxu0 0.0
    %1852 = vmatprep.subr.mxu0 0.0
    %1853 = vmatpush1.msra.mxu0 0.0
    %1854 = vmatprep.mubr.f32.mxu0 0.0
    %1855 = vmatmul.mubr.f32.gmra.mrb[0].mxu0 %v1788
    %v1856 = vpop.f32.mrb[0].mxu0
    %v1857 = vadd.f32 0.0, %v1856
    %v1858 = vpop.f32.mrb[0].mxu0
    %1859 = vdwg.mxu0
    %v1861 = vsel %vm188, %v1857, 0
    %1863 = vmatprep.subr.mxu0 0.0
    %1864 = vmatpush1.msra.mxu0 %v1424
    %1865 = vmatprep.subr.mxu0 0.0
    %1866 = vmatpush1.msra.mxu0 %v1425
    %1867 = vmatprep.subr.mxu0 0.0
    %1868 = vmatpush1.msra.mxu0 0.0
    %1869 = vmatprep.subr.mxu0 0.0
    %1870 = vmatpush1.msra.mxu0 0.0
    %1871 = vmatprep.subr.mxu0 0.0
    %1872 = vmatpush1.msra.mxu0 0.0
    %1873 = vmatprep.subr.mxu0 0.0
    %1874 = vmatpush1.msra.mxu0 0.0
    %1875 = vmatprep.subr.mxu0 0.0
    %1876 = vmatpush1.msra.mxu0 0.0
    %1877 = vmatprep.subr.mxu0 0.0
    %1878 = vmatpush1.msra.mxu0 0.0
    %1879 = vmatprep.subr.mxu0 0.0
    %1880 = vmatpush1.msra.mxu0 0.0
    %1881 = vmatprep.subr.mxu0 0.0
    %1882 = vmatpush1.msra.mxu0 0.0
    %1883 = vmatprep.subr.mxu0 0.0
    %1884 = vmatpush1.msra.mxu0 0.0
    %1885 = vmatprep.subr.mxu0 0.0
    %1886 = vmatpush1.msra.mxu0 0.0
    %1887 = vmatprep.subr.mxu0 0.0
    %1888 = vmatpush1.msra.mxu0 0.0
    %1889 = vmatprep.subr.mxu0 0.0
    %1890 = vmatpush1.msra.mxu0 0.0
    %1891 = vmatprep.subr.mxu0 0.0
    %1892 = vmatpush1.msra.mxu0 0.0
    %1893 = vmatprep.subr.mxu0 0.0
    %1894 = vmatpush1.msra.mxu0 0.0
    %1895 = vmatprep.subr.mxu0 0.0
    %1896 = vmatpush1.msra.mxu0 0.0
    %1897 = vmatprep.subr.mxu0 0.0
    %1898 = vmatpush1.msra.mxu0 0.0
    %1899 = vmatprep.subr.mxu0 0.0
    %1900 = vmatpush1.msra.mxu0 0.0
    %1901 = vmatprep.subr.mxu0 0.0
    %1902 = vmatpush1.msra.mxu0 0.0
    %1903 = vmatprep.subr.mxu0 0.0
    %1904 = vmatpush1.msra.mxu0 0.0
    %1905 = vmatprep.subr.mxu0 0.0
    %1906 = vmatpush1.msra.mxu0 0.0
    %1907 = vmatprep.subr.mxu0 0.0
    %1908 = vmatpush1.msra.mxu0 0.0
    %1909 = vmatprep.subr.mxu0 0.0
    %1910 = vmatpush1.msra.mxu0 0.0
    %1911 = vmatprep.subr.mxu0 0.0
    %1912 = vmatpush1.msra.mxu0 0.0
    %1913 = vmatprep.subr.mxu0 0.0
    %1914 = vmatpush1.msra.mxu0 0.0
    %1915 = vmatprep.subr.mxu0 0.0
    %1916 = vmatpush1.msra.mxu0 0.0
    %1917 = vmatprep.subr.mxu0 0.0
    %1918 = vmatpush1.msra.mxu0 0.0
    %1919 = vmatprep.subr.mxu0 0.0
    %1920 = vmatpush1.msra.mxu0 0.0
    %1921 = vmatprep.subr.mxu0 0.0
    %1922 = vmatpush1.msra.mxu0 0.0
    %1923 = vmatprep.subr.mxu0 0.0
    %1924 = vmatpush1.msra.mxu0 0.0
    %1925 = vmatprep.subr.mxu0 0.0
    %1926 = vmatpush1.msra.mxu0 0.0
    %1927 = vmatprep.mubr.f32.mxu0 0.0
    %1928 = vmatmul.mubr.f32.gmra.mrb[0].mxu0 %v1861
    %v1929 = vpop.f32.mrb[0].mxu0
    %v1930 = vadd.f32 0.0, %v1929
    %v1931 = vpop.f32.mrb[0].mxu0
    %1932 = vdwg.mxu0
    %v1934 = vsel %vm188, %v1692, 0
    %1936 = vmatprep.subr.mxu0 0.0
    %1937 = vmatpush1.msra.mxu0 %v1422
    %1938 = vmatprep.subr.mxu0 0.0
    %1939 = vmatpush1.msra.mxu0 %v1423
    %1940 = vmatprep.subr.mxu0 0.0
    %1941 = vmatpush1.msra.mxu0 0.0
    %1942 = vmatprep.subr.mxu0 0.0
    %1943 = vmatpush1.msra.mxu0 0.0
    %1944 = vmatprep.subr.mxu0 0.0
    %1945 = vmatpush1.msra.mxu0 0.0
    %1946 = vmatprep.subr.mxu0 0.0
    %1947 = vmatpush1.msra.mxu0 0.0
    %1948 = vmatprep.subr.mxu0 0.0
    %1949 = vmatpush1.msra.mxu0 0.0
    %1950 = vmatprep.subr.mxu0 0.0
    %1951 = vmatpush1.msra.mxu0 0.0
    %1952 = vmatprep.subr.mxu0 0.0
    %1953 = vmatpush1.msra.mxu0 0.0
    %1954 = vmatprep.subr.mxu0 0.0
    %1955 = vmatpush1.msra.mxu0 0.0
    %1956 = vmatprep.subr.mxu0 0.0
    %1957 = vmatpush1.msra.mxu0 0.0
    %1958 = vmatprep.subr.mxu0 0.0
    %1959 = vmatpush1.msra.mxu0 0.0
    %1960 = vmatprep.subr.mxu0 0.0
    %1961 = vmatpush1.msra.mxu0 0.0
    %1962 = vmatprep.subr.mxu0 0.0
    %1963 = vmatpush1.msra.mxu0 0.0
    %1964 = vmatprep.subr.mxu0 0.0
    %1965 = vmatpush1.msra.mxu0 0.0
    %1966 = vmatprep.subr.mxu0 0.0
    %1967 = vmatpush1.msra.mxu0 0.0
    %1968 = vmatprep.subr.mxu0 0.0
    %1969 = vmatpush1.msra.mxu0 0.0
    %1970 = vmatprep.subr.mxu0 0.0
    %1971 = vmatpush1.msra.mxu0 0.0
    %1972 = vmatprep.subr.mxu0 0.0
    %1973 = vmatpush1.msra.mxu0 0.0
    %1974 = vmatprep.subr.mxu0 0.0
    %1975 = vmatpush1.msra.mxu0 0.0
    %1976 = vmatprep.subr.mxu0 0.0
    %1977 = vmatpush1.msra.mxu0 0.0
    %1978 = vmatprep.subr.mxu0 0.0
    %1979 = vmatpush1.msra.mxu0 0.0
    %1980 = vmatprep.subr.mxu0 0.0
    %1981 = vmatpush1.msra.mxu0 0.0
    %1982 = vmatprep.subr.mxu0 0.0
    %1983 = vmatpush1.msra.mxu0 0.0
    %1984 = vmatprep.subr.mxu0 0.0
    %1985 = vmatpush1.msra.mxu0 0.0
    %1986 = vmatprep.subr.mxu0 0.0
    %1987 = vmatpush1.msra.mxu0 0.0
    %1988 = vmatprep.subr.mxu0 0.0
    %1989 = vmatpush1.msra.mxu0 0.0
    %1990 = vmatprep.subr.mxu0 0.0
    %1991 = vmatpush1.msra.mxu0 0.0
    %1992 = vmatprep.subr.mxu0 0.0
    %1993 = vmatpush1.msra.mxu0 0.0
    %1994 = vmatprep.subr.mxu0 0.0
    %1995 = vmatpush1.msra.mxu0 0.0
    %1996 = vmatprep.subr.mxu0 0.0
    %1997 = vmatpush1.msra.mxu0 0.0
    %1998 = vmatprep.subr.mxu0 0.0
    %1999 = vmatpush1.msra.mxu0 0.0
    %2000 = vmatprep.mubr.f32.mxu0 0.0
    %2001 = vmatmul.mubr.f32.gmra.mrb[0].mxu0 %v1934
    %v2002 = vpop.f32.mrb[0].mxu0
    %v2003 = vadd.f32 %v1930, %v2002
    %v2004 = vpop.f32.mrb[0].mxu0
    %2005 = vdwg.mxu0
    %v2006 = vld [vmem:[%s1 + $0x1] sm:$0x1]
    %v2007 = vlaneseq
    %v2008 = vshrl.u32 %v2007, 7
    %v2009 = vsub.s32 0, %v2008
    %v2010 = vrot.slane %v2006, %v2009
    %2012 = vrot.lane.b32.xlu0 %v1523, 96
    %v2013 = vpop.permute.xlu0 %2012
    %v2014 = vsel %vm188, %v1523, 0
    %v2016 = vsel %vm188, %v2013, 0
    %2018 = vmatprep.subr.mxu0 0.0
    %2019 = vmatpush1.xpose.msra.mxu0 %v2016
    %2020 = vmatprep.subr.mxu0 0.0
    %2021 = vmatpush1.xpose.msra.mxu0 0.0
    %2022 = vmatprep.subr.mxu0 0.0
    %2023 = vmatpush1.xpose.msra.mxu0 0.0
    %2024 = vmatprep.subr.mxu0 0.0
    %2025 = vmatpush1.xpose.msra.mxu0 0.0
    %2026 = vmatprep.subr.mxu0 0.0
    %2027 = vmatpush1.xpose.msra.mxu0 0.0
    %2028 = vmatprep.subr.mxu0 0.0
    %2029 = vmatpush1.xpose.msra.mxu0 0.0
    %2030 = vmatprep.subr.mxu0 0.0
    %2031 = vmatpush1.xpose.msra.mxu0 0.0
    %2032 = vmatprep.subr.mxu0 0.0
    %2033 = vmatpush1.xpose.msra.mxu0 0.0
    %2034 = vmatprep.subr.mxu0 0.0
    %2035 = vmatpush1.xpose.msra.mxu0 0.0
    %2036 = vmatprep.subr.mxu0 0.0
    %2037 = vmatpush1.xpose.msra.mxu0 0.0
    %2038 = vmatprep.subr.mxu0 0.0
    %2039 = vmatpush1.xpose.msra.mxu0 0.0
    %2040 = vmatprep.subr.mxu0 0.0
    %2041 = vmatpush1.xpose.msra.mxu0 0.0
    %2042 = vmatprep.subr.mxu0 0.0
    %2043 = vmatpush1.xpose.msra.mxu0 0.0
    %2044 = vmatprep.subr.mxu0 0.0
    %2045 = vmatpush1.xpose.msra.mxu0 0.0
    %2046 = vmatprep.subr.mxu0 0.0
    %2047 = vmatpush1.xpose.msra.mxu0 0.0
    %2048 = vmatprep.subr.mxu0 0.0
    %2049 = vmatpush1.xpose.msra.mxu0 0.0
    %2050 = vmatprep.subr.mxu0 0.0
    %2051 = vmatpush1.xpose.msra.mxu0 0.0
    %2052 = vmatprep.subr.mxu0 0.0
    %2053 = vmatpush1.xpose.msra.mxu0 0.0
    %2054 = vmatprep.subr.mxu0 0.0
    %2055 = vmatpush1.xpose.msra.mxu0 0.0
    %2056 = vmatprep.subr.mxu0 0.0
    %2057 = vmatpush1.xpose.msra.mxu0 0.0
    %2058 = vmatprep.subr.mxu0 0.0
    %2059 = vmatpush1.xpose.msra.mxu0 0.0
    %2060 = vmatprep.subr.mxu0 0.0
    %2061 = vmatpush1.xpose.msra.mxu0 0.0
    %2062 = vmatprep.subr.mxu0 0.0
    %2063 = vmatpush1.xpose.msra.mxu0 0.0
    %2064 = vmatprep.subr.mxu0 0.0
    %2065 = vmatpush1.xpose.msra.mxu0 0.0
    %2066 = vmatprep.subr.mxu0 0.0
    %2067 = vmatpush1.xpose.msra.mxu0 0.0
    %2068 = vmatprep.subr.mxu0 0.0
    %2069 = vmatpush1.xpose.msra.mxu0 0.0
    %2070 = vmatprep.subr.mxu0 0.0
    %2071 = vmatpush1.xpose.msra.mxu0 0.0
    %2072 = vmatprep.subr.mxu0 0.0
    %2073 = vmatpush1.xpose.msra.mxu0 0.0
    %2074 = vmatprep.subr.mxu0 0.0
    %2075 = vmatpush1.xpose.msra.mxu0 0.0
    %2076 = vmatprep.subr.mxu0 0.0
    %2077 = vmatpush1.xpose.msra.mxu0 0.0
    %2078 = vmatprep.subr.mxu0 0.0
    %2079 = vmatpush1.xpose.msra.mxu0 0.0
    %2080 = vmatprep.subr.mxu0 0.0
    %2081 = vmatpush1.xpose.msra.mxu0 0.0
    %2082 = vmatprep.mubr.f32.mxu0 0.0
    %2083 = vmatmul.mubr.f32.gmra.mrb[0].mxu0 %v2014
    %v2084 = vpop.f32.mrb[0].mxu0
    %v2085 = vadd.f32 %v2010, %v2084
    %v2086 = vpop.f32.mrb[0].mxu0
    %2087 = vdwg.mxu0
    %v2088 = vsel %vm263, %v2085, -inf
    %2089 = vmax.xlane.f32.xlu0 %v2088
    %v2090 = vpop.xlane.xlu0 %2089
    %v2091 = vsub.f32 %v2085, %v2090
    %v2092 = vmul.f32 %v2091, 1.442695
    %v2093 = vpow.pop %v2092
    %v2094 = vsel %vm263, %v2093, 0.0
    %2095 = vadd.xlane.f32.xlu0 %v2094
    %v2096 = vpop.xlane.xlu0 %2095
    %v2097 = vrcp.pop %v2096
    %v2098 = vmul.f32 %v2093, %v2097
    %2099 = vrot.lane.b32.xlu0 %v1523, 64
    %v2100 = vpop.permute.xlu0 %2099
    %v2103 = vsel %vm263, %v2098, 0
    %2105 = vmatprep.subr.mxu0 0.0
    %2106 = vmatpush1.msra.mxu0 %v2100
    %2107 = vmatprep.subr.mxu0 0.0
    %2108 = vmatpush1.msra.mxu0 0.0
    %2109 = vmatprep.subr.mxu0 0.0
    %2110 = vmatpush1.msra.mxu0 0.0
    %2111 = vmatprep.subr.mxu0 0.0
    %2112 = vmatpush1.msra.mxu0 0.0
    %2113 = vmatprep.subr.mxu0 0.0
    %2114 = vmatpush1.msra.mxu0 0.0
    %2115 = vmatprep.subr.mxu0 0.0
    %2116 = vmatpush1.msra.mxu0 0.0
    %2117 = vmatprep.subr.mxu0 0.0
    %2118 = vmatpush1.msra.mxu0 0.0
    %2119 = vmatprep.subr.mxu0 0.0
    %2120 = vmatpush1.msra.mxu0 0.0
    %2121 = vmatprep.subr.mxu0 0.0
    %2122 = vmatpush1.msra.mxu0 0.0
    %2123 = vmatprep.subr.mxu0 0.0
    %2124 = vmatpush1.msra.mxu0 0.0
    %2125 = vmatprep.subr.mxu0 0.0
    %2126 = vmatpush1.msra.mxu0 0.0
    %2127 = vmatprep.subr.mxu0 0.0
    %2128 = vmatpush1.msra.mxu0 0.0
    %2129 = vmatprep.subr.mxu0 0.0
    %2130 = vmatpush1.msra.mxu0 0.0
    %2131 = vmatprep.subr.mxu0 0.0
    %2132 = vmatpush1.msra.mxu0 0.0
    %2133 = vmatprep.subr.mxu0 0.0
    %2134 = vmatpush1.msra.mxu0 0.0
    %2135 = vmatprep.subr.mxu0 0.0
    %2136 = vmatpush1.msra.mxu0 0.0
    %2137 = vmatprep.subr.mxu0 0.0
    %2138 = vmatpush1.msra.mxu0 0.0
    %2139 = vmatprep.subr.mxu0 0.0
    %2140 = vmatpush1.msra.mxu0 0.0
    %2141 = vmatprep.subr.mxu0 0.0
    %2142 = vmatpush1.msra.mxu0 0.0
    %2143 = vmatprep.subr.mxu0 0.0
    %2144 = vmatpush1.msra.mxu0 0.0
    %2145 = vmatprep.subr.mxu0 0.0
    %2146 = vmatpush1.msra.mxu0 0.0
    %2147 = vmatprep.subr.mxu0 0.0
    %2148 = vmatpush1.msra.mxu0 0.0
    %2149 = vmatprep.subr.mxu0 0.0
    %2150 = vmatpush1.msra.mxu0 0.0
    %2151 = vmatprep.subr.mxu0 0.0
    %2152 = vmatpush1.msra.mxu0 0.0
    %2153 = vmatprep.subr.mxu0 0.0
    %2154 = vmatpush1.msra.mxu0 0.0
    %2155 = vmatprep.subr.mxu0 0.0
    %2156 = vmatpush1.msra.mxu0 0.0
    %2157 = vmatprep.subr.mxu0 0.0
    %2158 = vmatpush1.msra.mxu0 0.0
    %2159 = vmatprep.subr.mxu0 0.0
    %2160 = vmatpush1.msra.mxu0 0.0
    %2161 = vmatprep.subr.mxu0 0.0
    %2162 = vmatpush1.msra.mxu0 0.0
    %2163 = vmatprep.subr.mxu0 0.0
    %2164 = vmatpush1.msra.mxu0 0.0
    %2165 = vmatprep.subr.mxu0 0.0
    %2166 = vmatpush1.msra.mxu0 0.0
    %2167 = vmatprep.subr.mxu0 0.0
    %2168 = vmatpush1.msra.mxu0 0.0
    %2169 = vmatprep.mubr.f32.mxu0 0.0
    %2170 = vmatmul.mubr.f32.gmra.mrb[0].mxu0 %v2103
    %v2171 = vpop.f32.mrb[0].mxu0
    %v2172 = vadd.f32 0.0, %v2171
    %v2173 = vpop.f32.mrb[0].mxu0
    %2174 = vdwg.mxu0
    %2175 = vrot.lane.b32.xlu0 %v1523, 112
    %v2176 = vpop.permute.xlu0 %2175
    %2177 = vrot.lane.b32.xlu0 %v1523, 80
    %v2178 = vpop.permute.xlu0 %2177
    %v2179 = vsel %vm188, %v2176, 0
    %v2181 = vsel %vm188, %v2178, 0
    %2183 = vmatprep.subr.mxu0 0.0
    %2184 = vmatpush1.xpose.msra.mxu0 %v2181
    %2185 = vmatprep.subr.mxu0 0.0
    %2186 = vmatpush1.xpose.msra.mxu0 0.0
    %2187 = vmatprep.subr.mxu0 0.0
    %2188 = vmatpush1.xpose.msra.mxu0 0.0
    %2189 = vmatprep.subr.mxu0 0.0
    %2190 = vmatpush1.xpose.msra.mxu0 0.0
    %2191 = vmatprep.subr.mxu0 0.0
    %2192 = vmatpush1.xpose.msra.mxu0 0.0
    %2193 = vmatprep.subr.mxu0 0.0
    %2194 = vmatpush1.xpose.msra.mxu0 0.0
    %2195 = vmatprep.subr.mxu0 0.0
    %2196 = vmatpush1.xpose.msra.mxu0 0.0
    %2197 = vmatprep.subr.mxu0 0.0
    %2198 = vmatpush1.xpose.msra.mxu0 0.0
    %2199 = vmatprep.subr.mxu0 0.0
    %2200 = vmatpush1.xpose.msra.mxu0 0.0
    %2201 = vmatprep.subr.mxu0 0.0
    %2202 = vmatpush1.xpose.msra.mxu0 0.0
    %2203 = vmatprep.subr.mxu0 0.0
    %2204 = vmatpush1.xpose.msra.mxu0 0.0
    %2205 = vmatprep.subr.mxu0 0.0
    %2206 = vmatpush1.xpose.msra.mxu0 0.0
    %2207 = vmatprep.subr.mxu0 0.0
    %2208 = vmatpush1.xpose.msra.mxu0 0.0
    %2209 = vmatprep.subr.mxu0 0.0
    %2210 = vmatpush1.xpose.msra.mxu0 0.0
    %2211 = vmatprep.subr.mxu0 0.0
    %2212 = vmatpush1.xpose.msra.mxu0 0.0
    %2213 = vmatprep.subr.mxu0 0.0
    %2214 = vmatpush1.xpose.msra.mxu0 0.0
    %2215 = vmatprep.subr.mxu0 0.0
    %2216 = vmatpush1.xpose.msra.mxu0 0.0
    %2217 = vmatprep.subr.mxu0 0.0
    %2218 = vmatpush1.xpose.msra.mxu0 0.0
    %2219 = vmatprep.subr.mxu0 0.0
    %2220 = vmatpush1.xpose.msra.mxu0 0.0
    %2221 = vmatprep.subr.mxu0 0.0
    %2222 = vmatpush1.xpose.msra.mxu0 0.0
    %2223 = vmatprep.subr.mxu0 0.0
    %2224 = vmatpush1.xpose.msra.mxu0 0.0
    %2225 = vmatprep.subr.mxu0 0.0
    %2226 = vmatpush1.xpose.msra.mxu0 0.0
    %2227 = vmatprep.subr.mxu0 0.0
    %2228 = vmatpush1.xpose.msra.mxu0 0.0
    %2229 = vmatprep.subr.mxu0 0.0
    %2230 = vmatpush1.xpose.msra.mxu0 0.0
    %2231 = vmatprep.subr.mxu0 0.0
    %2232 = vmatpush1.xpose.msra.mxu0 0.0
    %2233 = vmatprep.subr.mxu0 0.0
    %2234 = vmatpush1.xpose.msra.mxu0 0.0
    %2235 = vmatprep.subr.mxu0 0.0
    %2236 = vmatpush1.xpose.msra.mxu0 0.0
    %2237 = vmatprep.subr.mxu0 0.0
    %2238 = vmatpush1.xpose.msra.mxu0 0.0
    %2239 = vmatprep.subr.mxu0 0.0
    %2240 = vmatpush1.xpose.msra.mxu0 0.0
    %2241 = vmatprep.subr.mxu0 0.0
    %2242 = vmatpush1.xpose.msra.mxu0 0.0
    %2243 = vmatprep.subr.mxu0 0.0
    %2244 = vmatpush1.xpose.msra.mxu0 0.0
    %2245 = vmatprep.subr.mxu0 0.0
    %2246 = vmatpush1.xpose.msra.mxu0 0.0
    %2247 = vmatprep.mubr.f32.mxu0 0.0
    %2248 = vmatmul.mubr.f32.gmra.mrb[0].mxu0 %v2179
    %v2249 = vpop.f32.mrb[0].mxu0
    %v2250 = vadd.f32 %v2010, %v2249
    %v2251 = vpop.f32.mrb[0].mxu0
    %2252 = vdwg.mxu0
    %v2253 = vsel %vm263, %v2250, -inf
    %2254 = vmax.xlane.f32.xlu0 %v2253
    %v2255 = vpop.xlane.xlu0 %2254
    %v2256 = vsub.f32 %v2250, %v2255
    %v2257 = vmul.f32 %v2256, 1.442695
    %v2258 = vpow.pop %v2257
    %v2259 = vsel %vm263, %v2258, 0.0
    %2260 = vadd.xlane.f32.xlu0 %v2259
    %v2261 = vpop.xlane.xlu0 %2260
    %v2262 = vrcp.pop %v2261
    %v2263 = vmul.f32 %v2258, %v2262
    %2264 = vrot.lane.b32.xlu0 %v1523, 48
    %v2265 = vpop.permute.xlu0 %2264
    %v2268 = vsel %vm263, %v2263, 0
    %2270 = vmatprep.subr.mxu0 0.0
    %2271 = vmatpush1.msra.mxu0 %v2265
    %2272 = vmatprep.subr.mxu0 0.0
    %2273 = vmatpush1.msra.mxu0 0.0
    %2274 = vmatprep.subr.mxu0 0.0
    %2275 = vmatpush1.msra.mxu0 0.0
    %2276 = vmatprep.subr.mxu0 0.0
    %2277 = vmatpush1.msra.mxu0 0.0
    %2278 = vmatprep.subr.mxu0 0.0
    %2279 = vmatpush1.msra.mxu0 0.0
    %2280 = vmatprep.subr.mxu0 0.0
    %2281 = vmatpush1.msra.mxu0 0.0
    %2282 = vmatprep.subr.mxu0 0.0
    %2283 = vmatpush1.msra.mxu0 0.0
    %2284 = vmatprep.subr.mxu0 0.0
    %2285 = vmatpush1.msra.mxu0 0.0
    %2286 = vmatprep.subr.mxu0 0.0
    %2287 = vmatpush1.msra.mxu0 0.0
    %2288 = vmatprep.subr.mxu0 0.0
    %2289 = vmatpush1.msra.mxu0 0.0
    %2290 = vmatprep.subr.mxu0 0.0
    %2291 = vmatpush1.msra.mxu0 0.0
    %2292 = vmatprep.subr.mxu0 0.0
    %2293 = vmatpush1.msra.mxu0 0.0
    %2294 = vmatprep.subr.mxu0 0.0
    %2295 = vmatpush1.msra.mxu0 0.0
    %2296 = vmatprep.subr.mxu0 0.0
    %2297 = vmatpush1.msra.mxu0 0.0
    %2298 = vmatprep.subr.mxu0 0.0
    %2299 = vmatpush1.msra.mxu0 0.0
    %2300 = vmatprep.subr.mxu0 0.0
    %2301 = vmatpush1.msra.mxu0 0.0
    %2302 = vmatprep.subr.mxu0 0.0
    %2303 = vmatpush1.msra.mxu0 0.0
    %2304 = vmatprep.subr.mxu0 0.0
    %2305 = vmatpush1.msra.mxu0 0.0
    %2306 = vmatprep.subr.mxu0 0.0
    %2307 = vmatpush1.msra.mxu0 0.0
    %2308 = vmatprep.subr.mxu0 0.0
    %2309 = vmatpush1.msra.mxu0 0.0
    %2310 = vmatprep.subr.mxu0 0.0
    %2311 = vmatpush1.msra.mxu0 0.0
    %2312 = vmatprep.subr.mxu0 0.0
    %2313 = vmatpush1.msra.mxu0 0.0
    %2314 = vmatprep.subr.mxu0 0.0
    %2315 = vmatpush1.msra.mxu0 0.0
    %2316 = vmatprep.subr.mxu0 0.0
    %2317 = vmatpush1.msra.mxu0 0.0
    %2318 = vmatprep.subr.mxu0 0.0
    %2319 = vmatpush1.msra.mxu0 0.0
    %2320 = vmatprep.subr.mxu0 0.0
    %2321 = vmatpush1.msra.mxu0 0.0
    %2322 = vmatprep.subr.mxu0 0.0
    %2323 = vmatpush1.msra.mxu0 0.0
    %2324 = vmatprep.subr.mxu0 0.0
    %2325 = vmatpush1.msra.mxu0 0.0
    %2326 = vmatprep.subr.mxu0 0.0
    %2327 = vmatpush1.msra.mxu0 0.0
    %2328 = vmatprep.subr.mxu0 0.0
    %2329 = vmatpush1.msra.mxu0 0.0
    %2330 = vmatprep.subr.mxu0 0.0
    %2331 = vmatpush1.msra.mxu0 0.0
    %2332 = vmatprep.subr.mxu0 0.0
    %2333 = vmatpush1.msra.mxu0 0.0
    %2334 = vmatprep.mubr.f32.mxu0 0.0
    %2335 = vmatmul.mubr.f32.gmra.mrb[0].mxu0 %v2268
    %v2336 = vpop.f32.mrb[0].mxu0
    %v2337 = vadd.f32 0.0, %v2336
    %v2338 = vpop.f32.mrb[0].mxu0
    %2339 = vdwg.mxu0
    %v2341 = vsel %vm188, %v2337, 0
    %2343 = vmatprep.subr.mxu0 0.0
    %2344 = vmatpush1.msra.mxu0 %v1424
    %2345 = vmatprep.subr.mxu0 0.0
    %2346 = vmatpush1.msra.mxu0 %v1425
    %2347 = vmatprep.subr.mxu0 0.0
    %2348 = vmatpush1.msra.mxu0 0.0
    %2349 = vmatprep.subr.mxu0 0.0
    %2350 = vmatpush1.msra.mxu0 0.0
    %2351 = vmatprep.subr.mxu0 0.0
    %2352 = vmatpush1.msra.mxu0 0.0
    %2353 = vmatprep.subr.mxu0 0.0
    %2354 = vmatpush1.msra.mxu0 0.0
    %2355 = vmatprep.subr.mxu0 0.0
    %2356 = vmatpush1.msra.mxu0 0.0
    %2357 = vmatprep.subr.mxu0 0.0
    %2358 = vmatpush1.msra.mxu0 0.0
    %2359 = vmatprep.subr.mxu0 0.0
    %2360 = vmatpush1.msra.mxu0 0.0
    %2361 = vmatprep.subr.mxu0 0.0
    %2362 = vmatpush1.msra.mxu0 0.0
    %2363 = vmatprep.subr.mxu0 0.0
    %2364 = vmatpush1.msra.mxu0 0.0
    %2365 = vmatprep.subr.mxu0 0.0
    %2366 = vmatpush1.msra.mxu0 0.0
    %2367 = vmatprep.subr.mxu0 0.0
    %2368 = vmatpush1.msra.mxu0 0.0
    %2369 = vmatprep.subr.mxu0 0.0
    %2370 = vmatpush1.msra.mxu0 0.0
    %2371 = vmatprep.subr.mxu0 0.0
    %2372 = vmatpush1.msra.mxu0 0.0
    %2373 = vmatprep.subr.mxu0 0.0
    %2374 = vmatpush1.msra.mxu0 0.0
    %2375 = vmatprep.subr.mxu0 0.0
    %2376 = vmatpush1.msra.mxu0 0.0
    %2377 = vmatprep.subr.mxu0 0.0
    %2378 = vmatpush1.msra.mxu0 0.0
    %2379 = vmatprep.subr.mxu0 0.0
    %2380 = vmatpush1.msra.mxu0 0.0
    %2381 = vmatprep.subr.mxu0 0.0
    %2382 = vmatpush1.msra.mxu0 0.0
    %2383 = vmatprep.subr.mxu0 0.0
    %2384 = vmatpush1.msra.mxu0 0.0
    %2385 = vmatprep.subr.mxu0 0.0
    %2386 = vmatpush1.msra.mxu0 0.0
    %2387 = vmatprep.subr.mxu0 0.0
    %2388 = vmatpush1.msra.mxu0 0.0
    %2389 = vmatprep.subr.mxu0 0.0
    %2390 = vmatpush1.msra.mxu0 0.0
    %2391 = vmatprep.subr.mxu0 0.0
    %2392 = vmatpush1.msra.mxu0 0.0
    %2393 = vmatprep.subr.mxu0 0.0
    %2394 = vmatpush1.msra.mxu0 0.0
    %2395 = vmatprep.subr.mxu0 0.0
    %2396 = vmatpush1.msra.mxu0 0.0
    %2397 = vmatprep.subr.mxu0 0.0
    %2398 = vmatpush1.msra.mxu0 0.0
    %2399 = vmatprep.subr.mxu0 0.0
    %2400 = vmatpush1.msra.mxu0 0.0
    %2401 = vmatprep.subr.mxu0 0.0
    %2402 = vmatpush1.msra.mxu0 0.0
    %2403 = vmatprep.subr.mxu0 0.0
    %2404 = vmatpush1.msra.mxu0 0.0
    %2405 = vmatprep.subr.mxu0 0.0
    %2406 = vmatpush1.msra.mxu0 0.0
    %2407 = vmatprep.mubr.f32.mxu0 0.0
    %2408 = vmatmul.mubr.f32.gmra.mrb[0].mxu0 %v2341
    %v2409 = vpop.f32.mrb[0].mxu0
    %v2410 = vadd.f32 0.0, %v2409
    %v2411 = vpop.f32.mrb[0].mxu0
    %2412 = vdwg.mxu0
    %v2414 = vsel %vm188, %v2172, 0
    %2416 = vmatprep.subr.mxu0 0.0
    %2417 = vmatpush1.msra.mxu0 %v1422
    %2418 = vmatprep.subr.mxu0 0.0
    %2419 = vmatpush1.msra.mxu0 %v1423
    %2420 = vmatprep.subr.mxu0 0.0
    %2421 = vmatpush1.msra.mxu0 0.0
    %2422 = vmatprep.subr.mxu0 0.0
    %2423 = vmatpush1.msra.mxu0 0.0
    %2424 = vmatprep.subr.mxu0 0.0
    %2425 = vmatpush1.msra.mxu0 0.0
    %2426 = vmatprep.subr.mxu0 0.0
    %2427 = vmatpush1.msra.mxu0 0.0
    %2428 = vmatprep.subr.mxu0 0.0
    %2429 = vmatpush1.msra.mxu0 0.0
    %2430 = vmatprep.subr.mxu0 0.0
    %2431 = vmatpush1.msra.mxu0 0.0
    %2432 = vmatprep.subr.mxu0 0.0
    %2433 = vmatpush1.msra.mxu0 0.0
    %2434 = vmatprep.subr.mxu0 0.0
    %2435 = vmatpush1.msra.mxu0 0.0
    %2436 = vmatprep.subr.mxu0 0.0
    %2437 = vmatpush1.msra.mxu0 0.0
    %2438 = vmatprep.subr.mxu0 0.0
    %2439 = vmatpush1.msra.mxu0 0.0
    %2440 = vmatprep.subr.mxu0 0.0
    %2441 = vmatpush1.msra.mxu0 0.0
    %2442 = vmatprep.subr.mxu0 0.0
    %2443 = vmatpush1.msra.mxu0 0.0
    %2444 = vmatprep.subr.mxu0 0.0
    %2445 = vmatpush1.msra.mxu0 0.0
    %2446 = vmatprep.subr.mxu0 0.0
    %2447 = vmatpush1.msra.mxu0 0.0
    %2448 = vmatprep.subr.mxu0 0.0
    %2449 = vmatpush1.msra.mxu0 0.0
    %2450 = vmatprep.subr.mxu0 0.0
    %2451 = vmatpush1.msra.mxu0 0.0
    %2452 = vmatprep.subr.mxu0 0.0
    %2453 = vmatpush1.msra.mxu0 0.0
    %2454 = vmatprep.subr.mxu0 0.0
    %2455 = vmatpush1.msra.mxu0 0.0
    %2456 = vmatprep.subr.mxu0 0.0
    %2457 = vmatpush1.msra.mxu0 0.0
    %2458 = vmatprep.subr.mxu0 0.0
    %2459 = vmatpush1.msra.mxu0 0.0
    %2460 = vmatprep.subr.mxu0 0.0
    %2461 = vmatpush1.msra.mxu0 0.0
    %2462 = vmatprep.subr.mxu0 0.0
    %2463 = vmatpush1.msra.mxu0 0.0
    %2464 = vmatprep.subr.mxu0 0.0
    %2465 = vmatpush1.msra.mxu0 0.0
    %2466 = vmatprep.subr.mxu0 0.0
    %2467 = vmatpush1.msra.mxu0 0.0
    %2468 = vmatprep.subr.mxu0 0.0
    %2469 = vmatpush1.msra.mxu0 0.0
    %2470 = vmatprep.subr.mxu0 0.0
    %2471 = vmatpush1.msra.mxu0 0.0
    %2472 = vmatprep.subr.mxu0 0.0
    %2473 = vmatpush1.msra.mxu0 0.0
    %2474 = vmatprep.subr.mxu0 0.0
    %2475 = vmatpush1.msra.mxu0 0.0
    %2476 = vmatprep.subr.mxu0 0.0
    %2477 = vmatpush1.msra.mxu0 0.0
    %2478 = vmatprep.subr.mxu0 0.0
    %2479 = vmatpush1.msra.mxu0 0.0
    %2480 = vmatprep.mubr.f32.mxu0 0.0
    %2481 = vmatmul.mubr.f32.gmra.mrb[0].mxu0 %v2414
    %v2482 = vpop.f32.mrb[0].mxu0
    %v2483 = vadd.f32 %v2410, %v2482
    %v2484 = vpop.f32.mrb[0].mxu0
    %2485 = vdwg.mxu0
    %v2486 = vld [vmem:[%s2 + $0xb] sm:$0x1]
    %v2487 = vlaneseq
    %v2488 = vshrl.u32 %v2487, 7
    %v2489 = vsub.s32 0, %v2488
    %v2490 = vrot.slane %v2486, %v2489
    %v2491 = vadd.f32 %v2003, %v2490
    %v2492 = vadd.f32 %v2483, %v2490
    %v2493 = vadd.f32 %v2491, %v1414
    %v2494 = vadd.f32 %v2492, %v1415
    %v2495 = vld [vmem:[%s2 + $0xc] sm:$0x1]
    %v2496 = vld [vmem:[%s2 + $0xd] sm:$0x1]
    %v2497 = vsel %vm34, %v2493, 0.0
    %2498 = vadd.xlane.f32.xlu0 %v2497
    %v2499 = vpop.xlane.xlu0 %2498
    %v2500 = vsel %vm34, %v2494, 0.0
    %2501 = vadd.xlane.f32.xlu0 %v2500
    %v2502 = vpop.xlane.xlu0 %2501
    %v2503 = vmul.f32 %v2499, %v41
    %v2504 = vmul.f32 %v2502, %v41
    %v2505 = vsub.f32 %v2493, %v2503
    %v2506 = vsub.f32 %v2494, %v2504
    %v2507 = vmul.f32 %v2505, %v2505
    %v2508 = vmul.f32 %v2506, %v2506
    %v2509 = vsel %vm34, %v2507, 0.0
    %2510 = vadd.xlane.f32.xlu0 %v2509
    %v2511 = vpop.xlane.xlu0 %2510
    %v2512 = vsel %vm34, %v2508, 0.0
    %2513 = vadd.xlane.f32.xlu0 %v2512
    %v2514 = vpop.xlane.xlu0 %2513
    %v2515 = vmul.f32 %v2511, %v41
    %v2516 = vmul.f32 %v2514, %v41
    %v2517 = vadd.f32 %v2515, 1e-12
    %v2518 = vadd.f32 %v2516, 1e-12
    %v2519 = vrsqrt.pop %v2517
    %v2520 = vrsqrt.pop %v2518
    %v2521 = vmul.f32 %v2505, %v2519
    %v2522 = vmul.f32 %v2506, %v2520
    %v2523 = vlaneseq
    %v2524 = vshrl.u32 %v2523, 7
    %v2525 = vsub.s32 0, %v2524
    %v2526 = vrot.slane %v2495, %v2525
    %v2527 = vmul.f32 %v2521, %v2526
    %v2528 = vmul.f32 %v2522, %v2526
    %v2529 = vlaneseq
    %v2530 = vshrl.u32 %v2529, 7
    %v2531 = vsub.s32 0, %v2530
    %v2532 = vrot.slane %v2496, %v2531
    %v2533 = vadd.f32 %v2527, %v2532
    %v2534 = vadd.f32 %v2528, %v2532
    %v2535 = vld [vmem:[%s2 + $0xe] sm:$0x1]
    %v2536 = vlaneseq
    %v2537 = vshrl.u32 %v2536, 7
    %v2538 = vsub.s32 0, %v2537
    %v2539 = vrot.slane %v2535, %v2538
    %v2541 = vsel %vm34, %v2533, 0
    %v2544 = vsel %vm34, %v2534, 0
    %2546 = vmatprep.subr.mxu0 0.0
    %2547 = vmatpush1.msra.mxu0 %v1427
    %2548 = vmatprep.subr.mxu0 0.0
    %2549 = vmatpush1.msra.mxu0 %v1428
    %2550 = vmatprep.subr.mxu0 0.0
    %2551 = vmatpush1.msra.mxu0 %v1429
    %2552 = vmatprep.subr.mxu0 0.0
    %2553 = vmatpush1.msra.mxu0 %v1430
    %2554 = vmatprep.subr.mxu0 0.0
    %2555 = vmatpush1.msra.mxu0 0.0
    %2556 = vmatprep.subr.mxu0 0.0
    %2557 = vmatpush1.msra.mxu0 0.0
    %2558 = vmatprep.subr.mxu0 0.0
    %2559 = vmatpush1.msra.mxu0 0.0
    %2560 = vmatprep.subr.mxu0 0.0
    %2561 = vmatpush1.msra.mxu0 0.0
    %2562 = vmatprep.subr.mxu0 0.0
    %2563 = vmatpush1.msra.mxu0 0.0
    %2564 = vmatprep.subr.mxu0 0.0
    %2565 = vmatpush1.msra.mxu0 0.0
    %2566 = vmatprep.subr.mxu0 0.0
    %2567 = vmatpush1.msra.mxu0 0.0
    %2568 = vmatprep.subr.mxu0 0.0
    %2569 = vmatpush1.msra.mxu0 0.0
    %2570 = vmatprep.subr.mxu0 0.0
    %2571 = vmatpush1.msra.mxu0 0.0
    %2572 = vmatprep.subr.mxu0 0.0
    %2573 = vmatpush1.msra.mxu0 0.0
    %2574 = vmatprep.subr.mxu0 0.0
    %2575 = vmatpush1.msra.mxu0 0.0
    %2576 = vmatprep.subr.mxu0 0.0
    %2577 = vmatpush1.msra.mxu0 0.0
    %2578 = vmatprep.subr.mxu0 0.0
    %2579 = vmatpush1.msra.mxu0 0.0
    %2580 = vmatprep.subr.mxu0 0.0
    %2581 = vmatpush1.msra.mxu0 0.0
    %2582 = vmatprep.subr.mxu0 0.0
    %2583 = vmatpush1.msra.mxu0 0.0
    %2584 = vmatprep.subr.mxu0 0.0
    %2585 = vmatpush1.msra.mxu0 0.0
    %2586 = vmatprep.subr.mxu0 0.0
    %2587 = vmatpush1.msra.mxu0 0.0
    %2588 = vmatprep.subr.mxu0 0.0
    %2589 = vmatpush1.msra.mxu0 0.0
    %2590 = vmatprep.subr.mxu0 0.0
    %2591 = vmatpush1.msra.mxu0 0.0
    %2592 = vmatprep.subr.mxu0 0.0
    %2593 = vmatpush1.msra.mxu0 0.0
    %2594 = vmatprep.subr.mxu0 0.0
    %2595 = vmatpush1.msra.mxu0 0.0
    %2596 = vmatprep.subr.mxu0 0.0
    %2597 = vmatpush1.msra.mxu0 0.0
    %2598 = vmatprep.subr.mxu0 0.0
    %2599 = vmatpush1.msra.mxu0 0.0
    %2600 = vmatprep.subr.mxu0 0.0
    %2601 = vmatpush1.msra.mxu0 0.0
    %2602 = vmatprep.subr.mxu0 0.0
    %2603 = vmatpush1.msra.mxu0 0.0
    %2604 = vmatprep.subr.mxu0 0.0
    %2605 = vmatpush1.msra.mxu0 0.0
    %2606 = vmatprep.subr.mxu0 0.0
    %2607 = vmatpush1.msra.mxu0 0.0
    %2608 = vmatprep.subr.mxu0 0.0
    %2609 = vmatpush1.msra.mxu0 0.0
    %2610 = vmatprep.mubr.f32.mxu0 0.0
    %2611 = vmatmul.mubr.f32.gmra.mrb[0].mxu0 %v2541
    %v2612 = vpop.f32.mrb[0].mxu0
    %v2613 = vadd.f32 %v2539, %v2612
    %v2614 = vpop.f32.mrb[0].mxu0
    %2615 = vmatprep.mubr.f32.mxu0 0.0
    %2616 = vmatmul.mubr.f32.gmra.mrb[0].mxu0 %v2544
    %v2617 = vpop.f32.mrb[0].mxu0
    %v2618 = vadd.f32 %v2539, %v2617
    %v2619 = vpop.f32.mrb[0].mxu0
    %2620 = vdwg.mxu0
    %v2621 = vmul.f32 %v2613, 0.5
    %v2622 = vmul.f32 %v2618, 0.5
    %v2623 = vmul.f32 %v2613, 0.70710677
    %v2624 = vmul.f32 %v2618, 0.70710677
    %v2625 = verf.f32.pop %v2623
    %v2626 = verf.f32.pop %v2624
    %v2627 = vadd.f32 %v2625, 1.0
    %v2628 = vadd.f32 %v2626, 1.0
    %v2629 = vmul.f32 %v2621, %v2627
    %v2630 = vmul.f32 %v2622, %v2628
    %v2631 = vld [vmem:[%s2 + $0xf] sm:$0x1]
    %v2632 = vlaneseq
    %v2633 = vshrl.u32 %v2632, 7
    %v2634 = vsub.s32 0, %v2633
    %v2635 = vrot.slane %v2631, %v2634
    %v2637 = vsel %vm1292, %v2629, 0
    %v2640 = vsel %vm1292, %v2630, 0
    %2642 = vmatprep.subr.mxu0 0.0
    %2643 = vmatpush1.msra.mxu0 %v1432
    %2644 = vmatprep.subr.mxu0 0.0
    %2645 = vmatpush1.msra.mxu0 %v1433
    %2646 = vmatprep.subr.mxu0 0.0
    %2647 = vmatpush1.msra.mxu0 %v1434
    %2648 = vmatprep.subr.mxu0 0.0
    %2649 = vmatpush1.msra.mxu0 %v1435
    %2650 = vmatprep.subr.mxu0 0.0
    %2651 = vmatpush1.msra.mxu0 %v1436
    %2652 = vmatprep.subr.mxu0 0.0
    %2653 = vmatpush1.msra.mxu0 %v1437
    %2654 = vmatprep.subr.mxu0 0.0
    %2655 = vmatpush1.msra.mxu0 %v1438
    %2656 = vmatprep.subr.mxu0 0.0
    %2657 = vmatpush1.msra.mxu0 %v1439
    %2658 = vmatprep.subr.mxu0 0.0
    %2659 = vmatpush1.msra.mxu0 0.0
    %2660 = vmatprep.subr.mxu0 0.0
    %2661 = vmatpush1.msra.mxu0 0.0
    %2662 = vmatprep.subr.mxu0 0.0
    %2663 = vmatpush1.msra.mxu0 0.0
    %2664 = vmatprep.subr.mxu0 0.0
    %2665 = vmatpush1.msra.mxu0 0.0
    %2666 = vmatprep.subr.mxu0 0.0
    %2667 = vmatpush1.msra.mxu0 0.0
    %2668 = vmatprep.subr.mxu0 0.0
    %2669 = vmatpush1.msra.mxu0 0.0
    %2670 = vmatprep.subr.mxu0 0.0
    %2671 = vmatpush1.msra.mxu0 0.0
    %2672 = vmatprep.subr.mxu0 0.0
    %2673 = vmatpush1.msra.mxu0 0.0
    %2674 = vmatprep.subr.mxu0 0.0
    %2675 = vmatpush1.msra.mxu0 0.0
    %2676 = vmatprep.subr.mxu0 0.0
    %2677 = vmatpush1.msra.mxu0 0.0
    %2678 = vmatprep.subr.mxu0 0.0
    %2679 = vmatpush1.msra.mxu0 0.0
    %2680 = vmatprep.subr.mxu0 0.0
    %2681 = vmatpush1.msra.mxu0 0.0
    %2682 = vmatprep.subr.mxu0 0.0
    %2683 = vmatpush1.msra.mxu0 0.0
    %2684 = vmatprep.subr.mxu0 0.0
    %2685 = vmatpush1.msra.mxu0 0.0
    %2686 = vmatprep.subr.mxu0 0.0
    %2687 = vmatpush1.msra.mxu0 0.0
    %2688 = vmatprep.subr.mxu0 0.0
    %2689 = vmatpush1.msra.mxu0 0.0
    %2690 = vmatprep.subr.mxu0 0.0
    %2691 = vmatpush1.msra.mxu0 0.0
    %2692 = vmatprep.subr.mxu0 0.0
    %2693 = vmatpush1.msra.mxu0 0.0
    %2694 = vmatprep.subr.mxu0 0.0
    %2695 = vmatpush1.msra.mxu0 0.0
    %2696 = vmatprep.subr.mxu0 0.0
    %2697 = vmatpush1.msra.mxu0 0.0
    %2698 = vmatprep.subr.mxu0 0.0
    %2699 = vmatpush1.msra.mxu0 0.0
    %2700 = vmatprep.subr.mxu0 0.0
    %2701 = vmatpush1.msra.mxu0 0.0
    %2702 = vmatprep.subr.mxu0 0.0
    %2703 = vmatpush1.msra.mxu0 0.0
    %2704 = vmatprep.subr.mxu0 0.0
    %2705 = vmatpush1.msra.mxu0 0.0
    %2706 = vmatprep.mubr.f32.mxu0 0.0
    %2707 = vmatmul.mubr.f32.gmra.mrb[0].mxu0 %v2637
    %v2708 = vpop.f32.mrb[0].mxu0
    %v2709 = vadd.f32 %v2635, %v2708
    %v2710 = vpop.f32.mrb[0].mxu0
    %2711 = vmatprep.mubr.f32.mxu0 0.0
    %2712 = vmatmul.mubr.f32.gmra.mrb[0].mxu0 %v2640
    %v2713 = vpop.f32.mrb[0].mxu0
    %v2714 = vadd.f32 %v2635, %v2713
    %v2715 = vpop.f32.mrb[0].mxu0
    %2716 = vdwg.mxu0
    %v2717 = vadd.f32 %v2709, %v2533
    %v2718 = vadd.f32 %v2714, %v2534
    %v2719 = vld [vmem:[%s2 + $0x10] sm:$0x1]
    %v2720 = vld [vmem:[%s2 + $0x11] sm:$0x1]
    %v2721 = vsel %vm34, %v2717, 0.0
    %2722 = vadd.xlane.f32.xlu0 %v2721
    %v2723 = vpop.xlane.xlu0 %2722
    %v2724 = vsel %vm34, %v2718, 0.0
    %2725 = vadd.xlane.f32.xlu0 %v2724
    %v2726 = vpop.xlane.xlu0 %2725
    %v2727 = vmul.f32 %v2723, %v41
    %v2728 = vmul.f32 %v2726, %v41
    %v2729 = vsub.f32 %v2717, %v2727
    %v2730 = vsub.f32 %v2718, %v2728
    %v2731 = vmul.f32 %v2729, %v2729
    %v2732 = vmul.f32 %v2730, %v2730
    %v2733 = vsel %vm34, %v2731, 0.0
    %2734 = vadd.xlane.f32.xlu0 %v2733
    %v2735 = vpop.xlane.xlu0 %2734
    %v2736 = vsel %vm34, %v2732, 0.0
    %2737 = vadd.xlane.f32.xlu0 %v2736
    %v2738 = vpop.xlane.xlu0 %2737
    %v2739 = vmul.f32 %v2735, %v41
    %v2740 = vmul.f32 %v2738, %v41
    %v2741 = vadd.f32 %v2739, 1e-12
    %v2742 = vadd.f32 %v2740, 1e-12
    %v2743 = vrsqrt.pop %v2741
    %v2744 = vrsqrt.pop %v2742
    %v2745 = vmul.f32 %v2729, %v2743
    %v2746 = vmul.f32 %v2730, %v2744
    %v2747 = vlaneseq
    %v2748 = vshrl.u32 %v2747, 7
    %v2749 = vsub.s32 0, %v2748
    %v2750 = vrot.slane %v2719, %v2749
    %v2751 = vmul.f32 %v2745, %v2750
    %v2752 = vmul.f32 %v2746, %v2750
    %v2753 = vlaneseq
    %v2754 = vshrl.u32 %v2753, 7
    %v2755 = vsub.s32 0, %v2754
    %v2756 = vrot.slane %v2720, %v2755
    %v2757 = vadd.f32 %v2751, %v2756
    %v2758 = vadd.f32 %v2752, %v2756
    %v2760 = vrot.slane %v2758, 7
    %vm2762 = vcmask 1040384
    %v2763 = vsel %vm2762, %v2757, %v2760
    %v2764 = vld [vmem:[%s7] sm:$0xff]
    %v2765 = vld [vmem:[%s7 + $0x8] sm:$0xff]
    %v2766 = vld [vmem:[%s7 + $0x10] sm:$0xff]
    %v2767 = vld [vmem:[%s7 + $0x18] sm:$0xff]
    %v2768 = vld [vmem:[%s2 + $0x12] sm:$0x1]
    %v2769 = vlaneseq
    %v2770 = vshrl.u32 %v2769, 7
    %v2771 = vsub.s32 0, %v2770
    %v2772 = vrot.slane %v2768, %v2771
    %v2774 = vsel %vm34, %v2763, 0
    %2776 = vmatprep.subr.mxu0 0.0
    %2777 = vmatpush1.msra.mxu0 %v2764
    %2778 = vmatprep.subr.mxu0 0.0
    %2779 = vmatpush1.msra.mxu0 %v2765
    %2780 = vmatprep.subr.mxu0 0.0
    %2781 = vmatpush1.msra.mxu0 %v2766
    %2782 = vmatprep.subr.mxu0 0.0
    %2783 = vmatpush1.msra.mxu0 %v2767
    %2784 = vmatprep.subr.mxu0 0.0
    %2785 = vmatpush1.msra.mxu0 0.0
    %2786 = vmatprep.subr.mxu0 0.0
    %2787 = vmatpush1.msra.mxu0 0.0
    %2788 = vmatprep.subr.mxu0 0.0
    %2789 = vmatpush1.msra.mxu0 0.0
    %2790 = vmatprep.subr.mxu0 0.0
    %2791 = vmatpush1.msra.mxu0 0.0
    %2792 = vmatprep.subr.mxu0 0.0
    %2793 = vmatpush1.msra.mxu0 0.0
    %2794 = vmatprep.subr.mxu0 0.0
    %2795 = vmatpush1.msra.mxu0 0.0
    %2796 = vmatprep.subr.mxu0 0.0
    %2797 = vmatpush1.msra.mxu0 0.0
    %2798 = vmatprep.subr.mxu0 0.0
    %2799 = vmatpush1.msra.mxu0 0.0
    %2800 = vmatprep.subr.mxu0 0.0
    %2801 = vmatpush1.msra.mxu0 0.0
    %2802 = vmatprep.subr.mxu0 0.0
    %2803 = vmatpush1.msra.mxu0 0.0
    %2804 = vmatprep.subr.mxu0 0.0
    %2805 = vmatpush1.msra.mxu0 0.0
    %2806 = vmatprep.subr.mxu0 0.0
    %2807 = vmatpush1.msra.mxu0 0.0
    %2808 = vmatprep.subr.mxu0 0.0
    %2809 = vmatpush1.msra.mxu0 0.0
    %2810 = vmatprep.subr.mxu0 0.0
    %2811 = vmatpush1.msra.mxu0 0.0
    %2812 = vmatprep.subr.mxu0 0.0
    %2813 = vmatpush1.msra.mxu0 0.0
    %2814 = vmatprep.subr.mxu0 0.0
    %2815 = vmatpush1.msra.mxu0 0.0
    %2816 = vmatprep.subr.mxu0 0.0
    %2817 = vmatpush1.msra.mxu0 0.0
    %2818 = vmatprep.subr.mxu0 0.0
    %2819 = vmatpush1.msra.mxu0 0.0
    %2820 = vmatprep.subr.mxu0 0.0
    %2821 = vmatpush1.msra.mxu0 0.0
    %2822 = vmatprep.subr.mxu0 0.0
    %2823 = vmatpush1.msra.mxu0 0.0
    %2824 = vmatprep.subr.mxu0 0.0
    %2825 = vmatpush1.msra.mxu0 0.0
    %2826 = vmatprep.subr.mxu0 0.0
    %2827 = vmatpush1.msra.mxu0 0.0
    %2828 = vmatprep.subr.mxu0 0.0
    %2829 = vmatpush1.msra.mxu0 0.0
    %2830 = vmatprep.subr.mxu0 0.0
    %2831 = vmatpush1.msra.mxu0 0.0
    %2832 = vmatprep.subr.mxu0 0.0
    %2833 = vmatpush1.msra.mxu0 0.0
    %2834 = vmatprep.subr.mxu0 0.0
    %2835 = vmatpush1.msra.mxu0 0.0
    %2836 = vmatprep.subr.mxu0 0.0
    %2837 = vmatpush1.msra.mxu0 0.0
    %2838 = vmatprep.subr.mxu0 0.0
    %2839 = vmatpush1.msra.mxu0 0.0
    %2840 = vmatprep.mubr.f32.mxu0 0.0
    %2841 = vmatmul.mubr.f32.gmra.mrb[0].mxu0 %v2774
    %v2842 = vpop.f32.mrb[0].mxu0
    %v2843 = vadd.f32 %v2772, %v2842
    %v2844 = vpop.f32.mrb[0].mxu0
    %2845 = vdwg.mxu0
    %2846 = vst [vmem:[#allocation2] sm:$0x3] %v2843
    // Predicated region
    $region34: #{bert_classifier_forward.1} parent=1 // pred_check
      _
    $region35: #{bert_classifier_forward.1} parent=1 // pred_check_branch
      %2848 = sbr.rel (0) target = $region37
    $region36: #{bert_classifier_forward.1} parent=1 // pred_region
      %s2850 = ssub.s32 32, 32
      %2851 = vsyncadd [#allocation3], %s2850
      %s2853 = sshll.u32 [#allocation2], 4
      %s2854 = int_to_ptr.vmem [resolvable:$true] %s2853
      %2856 = dma.vmem_to_hbm [thread:$0]  %s2854, 32, %s8, [#allocation3]
    $region37: #{bert_classifier_forward.1} parent=1 // pred_fallthru
      _
    // Predicated region
    $region38: #{bert_classifier_forward.1} parent=1 // pred_check
      _
    $region39: #{bert_classifier_forward.1} parent=1 // pred_check_branch
      %2858 = sbr.rel (0) target = $region41
    $region40: #{bert_classifier_forward.1} parent=1 // pred_region
      %2859 = dma.done [#allocation3], 32
    $region41: #{bert_classifier_forward.1} parent=1 // pred_fallthru
      _
    %2860 = vsyncpa [#allocation3], 1

</llo_original>
